<compile_context>
chip_gen: v5e
topology: v5e:2x2
jax: 0.10.0
libtpu: 0.0.40
codegen_flags: <defaults>
</compile_context>

<pallas_src>
import numpy as np
import jax
import jax.numpy as jnp
from jax import lax
from jax.experimental import pallas as pl
from jax.experimental.pallas import tpu as pltpu

DENSE = 128      # out channels of every conv
LAYERS = 14      # input channels (layer_count)
BOARD = 4        # 2048 board is 4x4
FC1 = 256
NOUT = 4
OUT_PAD = 128    # lane-padded fc2 output width
BATCH = 2

# fc1 pipeline chunking: 58 spatial positions x 128 channels = 7424 features,
# padded to 60 position slots -> 4 chunks of 15 positions (1920 lanes) each.
POS_PER_BLK = 15
NBLK = 4
CHUNK = POS_PER_BLK * DENSE          # 1920
K_PAD = NBLK * CHUNK                 # 7680

# Feature-map (C, H, W) shapes in PyTorch concat order: a, b, aa, ab, ba, bb
MAP_SHAPES = [
    (DENSE, 3, 4),  # a  = conv_a(x),   kernel (2,1)
    (DENSE, 4, 3),  # b  = conv_b(x),   kernel (1,2)
    (DENSE, 2, 4),  # aa = conv_aa(a),  kernel (2,1)
    (DENSE, 3, 3),  # ab = conv_ab(a),  kernel (1,2)
    (DENSE, 3, 3),  # ba = conv_ba(b),  kernel (2,1)
    (DENSE, 4, 2),  # bb = conv_bb(b),  kernel (1,2)
]
FLAT = sum(c * h * w for c, h, w in MAP_SHAPES)   # 7424


def _make_kernel(B):
    """Kernel closure over the (static) batch size B.

    Activation row layout is position-major, batch-minor: row = p * B + b,
    where p = h * W + w is the row-major position index of the feature map.
    """

    def kernel(xa_ref, xb_ref,                       # (12B, 28) stacked inputs
               wa_ref, ba_ref, wb_ref, bb_ref,       # (28,128)/(1,128) lvl-1
               waa_ref, baa_ref, wab_ref, bab_ref,   # (256,128)/(1,128) lvl-2
               wba_ref, bba_ref, wbb_ref, bbb_ref,
               w1_ref,                               # (CHUNK,256) bf16 fc1 chunk
               b1_ref, w2_ref, b2_ref,               # (1,256),(256,128),(1,128)
               out_ref,                              # (B,128)
               act_scr,                              # (NBLK,B,CHUNK) f32
               acc_scr):                             # (B,256) f32
        k = pl.program_id(0)

        # --- step 0: all convs, assemble the fc1 activation vector ----------
        @pl.when(k == 0)
        def _convs():
            act_scr[...] = jnp.zeros_like(act_scr)   # also zeroes pad slots
            acc_scr[...] = jnp.zeros_like(acc_scr)

            def conv(lhs, w_ref, b_ref):
                y = jnp.dot(lhs, w_ref[...], preferred_element_type=jnp.float32)
                return jnp.maximum(y + b_ref[...], 0.0)

            # Level 1: one dot each, rows = 12 positions x B.
            r_a = conv(xa_ref[...], wa_ref, ba_ref)      # (12B,128), 3x4 grid
            r_b = conv(xb_ref[...], wb_ref, bb_ref)      # (12B,128), 4x3 grid

            def taps(parent, off0, n, off1):
                # tap0 = parent positions [off0, off0+n), tap1 = [off1, off1+n)
                return jnp.concatenate(
                    [parent[off0 * B:(off0 + n) * B, :],
                     parent[off1 * B:(off1 + n) * B, :]], axis=1)   # (nB, 256)

            # Level 2: one dot each.  For the (1,2) convs we compute 11
            # contiguous tap pairs (2 of them are wrap-around junk rows that
            # are simply not scattered below) to keep slices contiguous.
            r_aa = conv(taps(r_a, 0, 8, 4), waa_ref, baa_ref)    # rows 0..7 valid
            r_ab = conv(taps(r_a, 0, 11, 1), wab_ref, bab_ref)   # skip r%4==3
            r_ba = conv(taps(r_b, 0, 9, 3), wba_ref, bba_ref)    # rows 0..8 valid
            r_bb = conv(taps(r_b, 0, 11, 1), wbb_ref, bbb_ref)   # skip r%3==2

            # Scatter per-position (B,128) chunks into the lane-dense fc1
            # activation scratch in PyTorch concat order (maps a,b,aa,ab,ba,bb;
            # positions row-major; channels minor).
            maps = (
                (r_a, tuple(range(12))),
                (r_b, tuple(range(12))),
                (r_aa, tuple(range(8))),
                (r_ab, tuple(r for r in range(11) if r % 4 != 3)),
                (r_ba, tuple(range(9))),
                (r_bb, tuple(r for r in range(11) if r % 3 != 2)),
            )
            g = 0
            for res, rows in maps:
                for r in rows:
                    blk, slot = divmod(g, POS_PER_BLK)
                    act_scr[blk, :, slot * DENSE:(slot + 1) * DENSE] = \
                        res[r * B:(r + 1) * B, :]
                    g += 1

        # --- every step: one fc1 partial matmul with this weight chunk ------
        a_chunk = act_scr[k]                                    # (B, CHUNK) f32
        acc_scr[...] += jnp.dot(a_chunk.astype(jnp.bfloat16), w1_ref[...],
                                preferred_element_type=jnp.float32)

        # --- last step: bias + ReLU + fc2 head -------------------------------
        @pl.when(k == NBLK - 1)
        def _head():
            h1 = jnp.maximum(acc_scr[...] + b1_ref[...], 0.0)   # (B,256) f32
            out_ref[...] = (jnp.dot(h1, w2_ref[...],
                                    preferred_element_type=jnp.float32)
                            + b2_ref[...])                      # (B,128)

    return kernel


# ------------------------- wrapper-side layout glue -------------------------

def _fuse_conv_w(w_pt, vertical):
    """PyTorch (O, I, kh, kw) -> tap-fused (2*I, O)."""
    if vertical:   # kernel (2, 1)
        w0, w1 = w_pt[:, :, 0, 0], w_pt[:, :, 1, 0]
    else:          # kernel (1, 2)
        w0, w1 = w_pt[:, :, 0, 0], w_pt[:, :, 0, 1]
    return jnp.concatenate([w0.T, w1.T], axis=0)        # (2I, O)


def _stack_level1_inputs(x_nchw):
    """Build position-major, tap-fused LHS for conv_a / conv_b: (12B, 28)."""
    B = x_nchw.shape[0]
    x = jnp.transpose(x_nchw, (0, 2, 3, 1))                       # (B,4,4,14)
    a_in = jnp.concatenate([x[:, :3, :, :], x[:, 1:, :, :]], -1)  # (B,3,4,28)
    b_in = jnp.concatenate([x[:, :, :3, :], x[:, :, 1:, :]], -1)  # (B,4,3,28)
    xa = jnp.transpose(a_in, (1, 2, 0, 3)).reshape(12 * B, 2 * LAYERS)
    xb = jnp.transpose(b_in, (1, 2, 0, 3)).reshape(12 * B, 2 * LAYERS)
    return xa, xb


def _fc1_reordered(fc1_w):
    """fc1 weight (256, 7424) -> (K_PAD, 256) with K reordered to the kernel's
    position-major / channel-minor activation layout, zero-padded to K_PAD."""
    w1t = fc1_w.T                                   # (7424, 256) channel-major
    blocks, off = [], 0
    for c, h, w in MAP_SHAPES:
        blk = w1t[off:off + c * h * w].reshape(c, h, w, FC1)
        blocks.append(jnp.transpose(blk, (1, 2, 0, 3)).reshape(h * w * c, FC1))
        off += c * h * w
    w1r = jnp.concatenate(blocks, axis=0)           # (7424, 256)
    pad = K_PAD - w1r.shape[0]
    return jnp.concatenate([w1r, jnp.zeros((pad, FC1), w1r.dtype)], axis=0)


def multi_network_forward(x_nchw, p):
    """Pallas forward.  x_nchw: (B, 14, 4, 4) float32, returns (B, 4)."""
    B = x_nchw.shape[0]
    xa, xb = _stack_level1_inputs(x_nchw)

    wa = _fuse_conv_w(p['conv_a_w'], True)
    wb = _fuse_conv_w(p['conv_b_w'], False)
    waa = _fuse_conv_w(p['conv_aa_w'], True)
    wab = _fuse_conv_w(p['conv_ab_w'], False)
    wba = _fuse_conv_w(p['conv_ba_w'], True)
    wbb = _fuse_conv_w(p['conv_bb_w'], False)

    ba = p['conv_a_b'].reshape(1, DENSE)
    bbv = p['conv_b_b'].reshape(1, DENSE)
    baa = p['conv_aa_b'].reshape(1, DENSE)
    bab = p['conv_ab_b'].reshape(1, DENSE)
    bba = p['conv_ba_b'].reshape(1, DENSE)
    bbb = p['conv_bb_b'].reshape(1, DENSE)

    # fc1 weight: 93% of all weight bytes -> bf16 to halve the HBM DMA.
    w1 = _fc1_reordered(p['fc1_w']).astype(jnp.bfloat16)    # (K_PAD, 256)
    b1 = p['fc1_b'].reshape(1, FC1)

    # fc2 padded to a lane-dense 128-wide output (sliced back below).
    w2 = jnp.zeros((FC1, OUT_PAD), jnp.float32).at[:, :NOUT].set(p['fc2_w'].T)
    b2 = jnp.zeros((1, OUT_PAD), jnp.float32).at[:, :NOUT].set(
        p['fc2_b'].reshape(1, NOUT))

    inputs = (xa, xb,
              wa, ba, wb, bbv,
              waa, baa, wab, bab, wba, bba, wbb, bbb,
              w1, b1, w2, b2)

    def const_spec(arr):
        # Full-array block, same block every grid step (fetched once).
        return pl.BlockSpec(arr.shape, lambda k: (0, 0))

    in_specs = [const_spec(xa), const_spec(xb),
                const_spec(wa), const_spec(ba), const_spec(wb), const_spec(bbv),
                const_spec(waa), const_spec(baa), const_spec(wab),
                const_spec(bab), const_spec(wba), const_spec(bba),
                const_spec(wbb), const_spec(bbb),
                # fc1 weight streamed in NBLK chunks (double-buffered DMA).
                pl.BlockSpec((CHUNK, FC1), lambda k: (k, 0)),
                const_spec(b1), const_spec(w2), const_spec(b2)]

    out_full = pl.pallas_call(
        _make_kernel(B),
        out_shape=jax.ShapeDtypeStruct((B, OUT_PAD), jnp.float32),
        grid=(NBLK,),
        in_specs=in_specs,
        out_specs=pl.BlockSpec((B, OUT_PAD), lambda k: (0, 0)),
        scratch_shapes=[pltpu.VMEM((NBLK, B, CHUNK), jnp.float32),
                        pltpu.VMEM((B, FC1), jnp.float32)],
        compiler_params=pltpu.CompilerParams(
            dimension_semantics=("arbitrary",),
            vmem_limit_bytes=24 * 1024 * 1024),
    )(*inputs)

    return out_full[:, :NOUT]


# ------------------------------ reference -----------------------------------

def reference_forward(x, p):
    """Pure-JAX reference with exact PyTorch (NCHW / OIHW, f32) semantics."""
    def conv(inp, w, b):
        y = lax.conv_general_dilated(
            inp, w, window_strides=(1, 1), padding='VALID',
            dimension_numbers=('NCHW', 'OIHW', 'NCHW'))
        return jnp.maximum(y + b[None, :, None, None], 0.0)

    a = conv(x, p['conv_a_w'], p['conv_a_b'])
    b = conv(x, p['conv_b_w'], p['conv_b_b'])
    aa = conv(a, p['conv_aa_w'], p['conv_aa_b'])
    ab = conv(a, p['conv_ab_w'], p['conv_ab_b'])
    ba = conv(b, p['conv_ba_w'], p['conv_ba_b'])
    bb = conv(b, p['conv_bb_w'], p['conv_bb_b'])
    flat = jnp.concatenate(
        [t.reshape(t.shape[0], -1) for t in (a, b, aa, ab, ba, bb)], axis=1)
    h = jnp.maximum(flat @ p['fc1_w'].T + p['fc1_b'], 0.0)
    return h @ p['fc2_w'].T + p['fc2_b']


def init_params(key):
    ks = jax.random.split(key, 16)

    def init(k, shape, fan_in):
        return jax.random.normal(k, shape, jnp.float32) / np.sqrt(fan_in)

    return {
        'conv_a_w':  init(ks[0],  (DENSE, LAYERS, 2, 1), LAYERS * 2),
        'conv_a_b':  init(ks[1],  (DENSE,), LAYERS * 2),
        'conv_b_w':  init(ks[2],  (DENSE, LAYERS, 1, 2), LAYERS * 2),
        'conv_b_b':  init(ks[3],  (DENSE,), LAYERS * 2),
        'conv_aa_w': init(ks[4],  (DENSE, DENSE, 2, 1), DENSE * 2),
        'conv_aa_b': init(ks[5],  (DENSE,), DENSE * 2),
        'conv_ab_w': init(ks[6],  (DENSE, DENSE, 1, 2), DENSE * 2),
        'conv_ab_b': init(ks[7],  (DENSE,), DENSE * 2),
        'conv_ba_w': init(ks[8],  (DENSE, DENSE, 2, 1), DENSE * 2),
        'conv_ba_b': init(ks[9],  (DENSE,), DENSE * 2),
        'conv_bb_w': init(ks[10], (DENSE, DENSE, 1, 2), DENSE * 2),
        'conv_bb_b': init(ks[11], (DENSE,), DENSE * 2),
        'fc1_w':     init(ks[12], (FC1, FLAT), FLAT),
        'fc1_b':     init(ks[13], (FC1,), FLAT),
        'fc2_w':     init(ks[14], (NOUT, FC1), FC1),
        'fc2_b':     init(ks[15], (NOUT,), FC1),
    }


if __name__ == "__main__":
    key = jax.random.PRNGKey(0)
    pkey, xkey = jax.random.split(key)
    params = init_params(pkey)

    # PyTorch-style NCHW input: (batch, layer_count, 4, 4)
    x = jax.random.normal(xkey, (BATCH, LAYERS, BOARD, BOARD), jnp.float32)

    out = jax.block_until_ready(multi_network_forward(x, params))
    ref = jax.block_until_ready(reference_forward(x, params))

    assert out.shape == (BATCH, NOUT)
    # Tolerance covers the bf16 cast of the fc1 weights / fc1 LHS (everything
    # else is computed in f32 with f32 accumulation).
    np.testing.assert_allclose(np.asarray(out), np.asarray(ref),
                               rtol=1e-2, atol=1e-2)
    print("KERNEL_OK")
</pallas_src>

<mosaic_0001>
module attributes {stable_mosaic.version = 11 : i64} {
  func.func @kernel(%arg0: i32, %arg1: memref<24x28xf32, #tpu.memory_space<vmem>>, %arg2: memref<24x28xf32, #tpu.memory_space<vmem>>, %arg3: memref<28x128xf32, #tpu.memory_space<vmem>>, %arg4: memref<1x128xf32, #tpu.memory_space<vmem>>, %arg5: memref<28x128xf32, #tpu.memory_space<vmem>>, %arg6: memref<1x128xf32, #tpu.memory_space<vmem>>, %arg7: memref<256x128xf32, #tpu.memory_space<vmem>>, %arg8: memref<1x128xf32, #tpu.memory_space<vmem>>, %arg9: memref<256x128xf32, #tpu.memory_space<vmem>>, %arg10: memref<1x128xf32, #tpu.memory_space<vmem>>, %arg11: memref<256x128xf32, #tpu.memory_space<vmem>>, %arg12: memref<1x128xf32, #tpu.memory_space<vmem>>, %arg13: memref<256x128xf32, #tpu.memory_space<vmem>>, %arg14: memref<1x128xf32, #tpu.memory_space<vmem>>, %arg15: memref<1920x256xbf16, #tpu.memory_space<vmem>>, %arg16: memref<1x256xf32, #tpu.memory_space<vmem>>, %arg17: memref<256x128xf32, #tpu.memory_space<vmem>>, %arg18: memref<1x128xf32, #tpu.memory_space<vmem>>, %arg19: memref<2x128xf32, #tpu.memory_space<vmem>>, %arg20: memref<4x2x1920xf32, #tpu.memory_space<vmem>>, %arg21: memref<2x256xf32, #tpu.memory_space<vmem>>) attributes {dimension_semantics = [#tpu.dimension_semantics<arbitrary>], iteration_bounds = array<i64: 4>, scalar_prefetch = 0 : i64, scratch_operands = 2 : i64, tpu.core_type = #tpu.core_type<tc>, window_params = [{pipeline_mode = #tpu.pipeline_mode<synchronous>, transform_indices = @transform_0, window_bounds = array<i64: 24, 28>}, {pipeline_mode = #tpu.pipeline_mode<synchronous>, transform_indices = @transform_1, window_bounds = array<i64: 24, 28>}, {pipeline_mode = #tpu.pipeline_mode<synchronous>, transform_indices = @transform_2, window_bounds = array<i64: 28, 128>}, {pipeline_mode = #tpu.pipeline_mode<synchronous>, transform_indices = @transform_3, window_bounds = array<i64: 1, 128>}, {pipeline_mode = #tpu.pipeline_mode<synchronous>, transform_indices = @transform_4, window_bounds = array<i64: 28, 128>}, {pipeline_mode = #tpu.pipeline_mode<synchronous>, transform_indices = @transform_5, window_bounds = array<i64: 1, 128>}, {pipeline_mode = #tpu.pipeline_mode<synchronous>, transform_indices = @transform_6, window_bounds = array<i64: 256, 128>}, {pipeline_mode = #tpu.pipeline_mode<synchronous>, transform_indices = @transform_7, window_bounds = array<i64: 1, 128>}, {pipeline_mode = #tpu.pipeline_mode<synchronous>, transform_indices = @transform_8, window_bounds = array<i64: 256, 128>}, {pipeline_mode = #tpu.pipeline_mode<synchronous>, transform_indices = @transform_9, window_bounds = array<i64: 1, 128>}, {pipeline_mode = #tpu.pipeline_mode<synchronous>, transform_indices = @transform_10, window_bounds = array<i64: 256, 128>}, {pipeline_mode = #tpu.pipeline_mode<synchronous>, transform_indices = @transform_11, window_bounds = array<i64: 1, 128>}, {pipeline_mode = #tpu.pipeline_mode<synchronous>, transform_indices = @transform_12, window_bounds = array<i64: 256, 128>}, {pipeline_mode = #tpu.pipeline_mode<synchronous>, transform_indices = @transform_13, window_bounds = array<i64: 1, 128>}, {transform_indices = @transform_14, window_bounds = array<i64: 1920, 256>}, {pipeline_mode = #tpu.pipeline_mode<synchronous>, transform_indices = @transform_15, window_bounds = array<i64: 1, 256>}, {pipeline_mode = #tpu.pipeline_mode<synchronous>, transform_indices = @transform_16, window_bounds = array<i64: 256, 128>}, {pipeline_mode = #tpu.pipeline_mode<synchronous>, transform_indices = @transform_17, window_bounds = array<i64: 1, 128>}, {pipeline_mode = #tpu.pipeline_mode<synchronous>, transform_indices = @transform_18, window_bounds = array<i64: 2, 128>}]} {
    %c0_i32 = arith.constant 0 : i32
    %0 = arith.cmpi eq, %arg0, %c0_i32 : i32
    %1 = arith.extui %0 : i1 to i32
    %c0_i32_0 = arith.constant 0 : i32
    %2 = arith.cmpi ne, %1, %c0_i32_0 : i32
    scf.if %2 {
      %cst_9 = arith.constant 0.000000e+00 : f32
      %15 = vector.broadcast %cst_9 : f32 to vector<4x2x1920xf32>
      %c0_10 = arith.constant 0 : index
      %c0_11 = arith.constant 0 : index
      %c0_12 = arith.constant 0 : index
      %16 = vector.load %arg20[%c0_10, %c0_11, %c0_12] : memref<4x2x1920xf32, #tpu.memory_space<vmem>>, vector<4x2x1920xf32>
      tpu.vector_store %arg20[%c0_10, %c0_11, %c0_12], %15 {strides = array<i32>} : memref<4x2x1920xf32, #tpu.memory_space<vmem>>, vector<4x2x1920xf32>,
      %cst_13 = arith.constant 0.000000e+00 : f32
      %17 = vector.broadcast %cst_13 : f32 to vector<2x256xf32>
      %c0_14 = arith.constant 0 : index
      %c0_15 = arith.constant 0 : index
      %18 = vector.load %arg21[%c0_14, %c0_15] : memref<2x256xf32, #tpu.memory_space<vmem>>, vector<2x256xf32>
      tpu.vector_store %arg21[%c0_14, %c0_15], %17 {strides = array<i32>} : memref<2x256xf32, #tpu.memory_space<vmem>>, vector<2x256xf32>,
      %c0_16 = arith.constant 0 : index
      %c0_17 = arith.constant 0 : index
      %19 = vector.load %arg1[%c0_16, %c0_17] : memref<24x28xf32, #tpu.memory_space<vmem>>, vector<24x28xf32>
      %c0_18 = arith.constant 0 : index
      %c0_19 = arith.constant 0 : index
      %20 = vector.load %arg3[%c0_18, %c0_19] : memref<28x128xf32, #tpu.memory_space<vmem>>, vector<28x128xf32>
      %cst_20 = arith.constant dense<0.000000e+00> : vector<24x128xf32>
      %21 = tpu.matmul %19, %20, %cst_20 {dimension_numbers = #tpu.dot_dimension_numbers<[1], [0], [0], [1], [0, 0, 1, 1], [], []>} : vector<24x28xf32>, vector<28x128xf32>, vector<24x128xf32> -> vector<24x128xf32>
      %c0_21 = arith.constant 0 : index
      %c0_22 = arith.constant 0 : index
      %22 = vector.load %arg4[%c0_21, %c0_22] : memref<1x128xf32, #tpu.memory_space<vmem>>, vector<1x128xf32>
      %23 = vector.broadcast %22 : vector<1x128xf32> to vector<24x128xf32>
      %24 = arith.addf %21, %23 : vector<24x128xf32>
      %cst_23 = arith.constant 0.000000e+00 : f32
      %25 = vector.broadcast %cst_23 : f32 to vector<24x128xf32>
      %26 = arith.maximumf %24, %25 : vector<24x128xf32>
      %c0_24 = arith.constant 0 : index
      %c0_25 = arith.constant 0 : index
      %27 = vector.load %arg2[%c0_24, %c0_25] : memref<24x28xf32, #tpu.memory_space<vmem>>, vector<24x28xf32>
      %c0_26 = arith.constant 0 : index
      %c0_27 = arith.constant 0 : index
      %28 = vector.load %arg5[%c0_26, %c0_27] : memref<28x128xf32, #tpu.memory_space<vmem>>, vector<28x128xf32>
      %cst_28 = arith.constant dense<0.000000e+00> : vector<24x128xf32>
      %29 = tpu.matmul %27, %28, %cst_28 {dimension_numbers = #tpu.dot_dimension_numbers<[1], [0], [0], [1], [0, 0, 1, 1], [], []>} : vector<24x28xf32>, vector<28x128xf32>, vector<24x128xf32> -> vector<24x128xf32>
      %c0_29 = arith.constant 0 : index
      %c0_30 = arith.constant 0 : index
      %30 = vector.load %arg6[%c0_29, %c0_30] : memref<1x128xf32, #tpu.memory_space<vmem>>, vector<1x128xf32>
      %31 = vector.broadcast %30 : vector<1x128xf32> to vector<24x128xf32>
      %32 = arith.addf %29, %31 : vector<24x128xf32>
      %cst_31 = arith.constant 0.000000e+00 : f32
      %33 = vector.broadcast %cst_31 : f32 to vector<24x128xf32>
      %34 = arith.maximumf %32, %33 : vector<24x128xf32>
      %35 = vector.extract_strided_slice %26 {offsets = [0, 0], sizes = [16, 128], strides = [1, 1]} : vector<24x128xf32> to vector<16x128xf32>
      %36 = vector.extract_strided_slice %26 {offsets = [8, 0], sizes = [16, 128], strides = [1, 1]} : vector<24x128xf32> to vector<16x128xf32>
      %37 = tpu.concatenate %35, %36 in 1 : vector<16x128xf32>, vector<16x128xf32> -> vector<16x256xf32>
      %c0_32 = arith.constant 0 : index
      %c0_33 = arith.constant 0 : index
      %38 = vector.load %arg7[%c0_32, %c0_33] : memref<256x128xf32, #tpu.memory_space<vmem>>, vector<256x128xf32>
      %cst_34 = arith.constant dense<0.000000e+00> : vector<16x128xf32>
      %39 = tpu.matmul %37, %38, %cst_34 {dimension_numbers = #tpu.dot_dimension_numbers<[1], [0], [0], [1], [0, 0, 1, 1], [], []>} : vector<16x256xf32>, vector<256x128xf32>, vector<16x128xf32> -> vector<16x128xf32>
      %c0_35 = arith.constant 0 : index
      %c0_36 = arith.constant 0 : index
      %40 = vector.load %arg8[%c0_35, %c0_36] : memref<1x128xf32, #tpu.memory_space<vmem>>, vector<1x128xf32>
      %41 = vector.broadcast %40 : vector<1x128xf32> to vector<16x128xf32>
      %42 = arith.addf %39, %41 : vector<16x128xf32>
      %cst_37 = arith.constant 0.000000e+00 : f32
      %43 = vector.broadcast %cst_37 : f32 to vector<16x128xf32>
      %44 = arith.maximumf %42, %43 : vector<16x128xf32>
      %45 = vector.extract_strided_slice %26 {offsets = [0, 0], sizes = [22, 128], strides = [1, 1]} : vector<24x128xf32> to vector<22x128xf32>
      %46 = vector.extract_strided_slice %26 {offsets = [2, 0], sizes = [22, 128], strides = [1, 1]} : vector<24x128xf32> to vector<22x128xf32>
      %47 = tpu.concatenate %45, %46 in 1 : vector<22x128xf32>, vector<22x128xf32> -> vector<22x256xf32>
      %c0_38 = arith.constant 0 : index
      %c0_39 = arith.constant 0 : index
      %48 = vector.load %arg9[%c0_38, %c0_39] : memref<256x128xf32, #tpu.memory_space<vmem>>, vector<256x128xf32>
      %cst_40 = arith.constant dense<0.000000e+00> : vector<22x128xf32>
      %49 = tpu.matmul %47, %48, %cst_40 {dimension_numbers = #tpu.dot_dimension_numbers<[1], [0], [0], [1], [0, 0, 1, 1], [], []>} : vector<22x256xf32>, vector<256x128xf32>, vector<22x128xf32> -> vector<22x128xf32>
      %c0_41 = arith.constant 0 : index
      %c0_42 = arith.constant 0 : index
      %50 = vector.load %arg10[%c0_41, %c0_42] : memref<1x128xf32, #tpu.memory_space<vmem>>, vector<1x128xf32>
      %51 = vector.broadcast %50 : vector<1x128xf32> to vector<22x128xf32>
      %52 = arith.addf %49, %51 : vector<22x128xf32>
      %cst_43 = arith.constant 0.000000e+00 : f32
      %53 = vector.broadcast %cst_43 : f32 to vector<22x128xf32>
      %54 = arith.maximumf %52, %53 : vector<22x128xf32>
      %55 = vector.extract_strided_slice %34 {offsets = [0, 0], sizes = [18, 128], strides = [1, 1]} : vector<24x128xf32> to vector<18x128xf32>
      %56 = vector.extract_strided_slice %34 {offsets = [6, 0], sizes = [18, 128], strides = [1, 1]} : vector<24x128xf32> to vector<18x128xf32>
      %57 = tpu.concatenate %55, %56 in 1 : vector<18x128xf32>, vector<18x128xf32> -> vector<18x256xf32>
      %c0_44 = arith.constant 0 : index
      %c0_45 = arith.constant 0 : index
      %58 = vector.load %arg11[%c0_44, %c0_45] : memref<256x128xf32, #tpu.memory_space<vmem>>, vector<256x128xf32>
      %cst_46 = arith.constant dense<0.000000e+00> : vector<18x128xf32>
      %59 = tpu.matmul %57, %58, %cst_46 {dimension_numbers = #tpu.dot_dimension_numbers<[1], [0], [0], [1], [0, 0, 1, 1], [], []>} : vector<18x256xf32>, vector<256x128xf32>, vector<18x128xf32> -> vector<18x128xf32>
      %c0_47 = arith.constant 0 : index
      %c0_48 = arith.constant 0 : index
      %60 = vector.load %arg12[%c0_47, %c0_48] : memref<1x128xf32, #tpu.memory_space<vmem>>, vector<1x128xf32>
      %61 = vector.broadcast %60 : vector<1x128xf32> to vector<18x128xf32>
      %62 = arith.addf %59, %61 : vector<18x128xf32>
      %cst_49 = arith.constant 0.000000e+00 : f32
      %63 = vector.broadcast %cst_49 : f32 to vector<18x128xf32>
      %64 = arith.maximumf %62, %63 : vector<18x128xf32>
      %65 = vector.extract_strided_slice %34 {offsets = [0, 0], sizes = [22, 128], strides = [1, 1]} : vector<24x128xf32> to vector<22x128xf32>
      %66 = vector.extract_strided_slice %34 {offsets = [2, 0], sizes = [22, 128], strides = [1, 1]} : vector<24x128xf32> to vector<22x128xf32>
      %67 = tpu.concatenate %65, %66 in 1 : vector<22x128xf32>, vector<22x128xf32> -> vector<22x256xf32>
      %c0_50 = arith.constant 0 : index
      %c0_51 = arith.constant 0 : index
      %68 = vector.load %arg13[%c0_50, %c0_51] : memref<256x128xf32, #tpu.memory_space<vmem>>, vector<256x128xf32>
      %cst_52 = arith.constant dense<0.000000e+00> : vector<22x128xf32>
      %69 = tpu.matmul %67, %68, %cst_52 {dimension_numbers = #tpu.dot_dimension_numbers<[1], [0], [0], [1], [0, 0, 1, 1], [], []>} : vector<22x256xf32>, vector<256x128xf32>, vector<22x128xf32> -> vector<22x128xf32>
      %c0_53 = arith.constant 0 : index
      %c0_54 = arith.constant 0 : index
      %70 = vector.load %arg14[%c0_53, %c0_54] : memref<1x128xf32, #tpu.memory_space<vmem>>, vector<1x128xf32>
      %71 = vector.broadcast %70 : vector<1x128xf32> to vector<22x128xf32>
      %72 = arith.addf %69, %71 : vector<22x128xf32>
      %cst_55 = arith.constant 0.000000e+00 : f32
      %73 = vector.broadcast %cst_55 : f32 to vector<22x128xf32>
      %74 = arith.maximumf %72, %73 : vector<22x128xf32>
      %75 = vector.extract_strided_slice %26 {offsets = [0, 0], sizes = [2, 128], strides = [1, 1]} : vector<24x128xf32> to vector<2x128xf32>
      %c0_56 = arith.constant 0 : index
      %c0_57 = arith.constant 0 : index
      %c0_58 = arith.constant 0 : index
      %76 = vector.load %arg20[%c0_56, %c0_57, %c0_58] : memref<4x2x1920xf32, #tpu.memory_space<vmem>>, vector<1x2x128xf32>
      %77 = vector.shape_cast %76 : vector<1x2x128xf32> to vector<2x128xf32>
      %78 = vector.shape_cast %75 : vector<2x128xf32> to vector<1x2x128xf32>
      tpu.vector_store %arg20[%c0_56, %c0_57, %c0_58], %78 {strides = array<i32>} : memref<4x2x1920xf32, #tpu.memory_space<vmem>>, vector<1x2x128xf32>,
      %79 = vector.extract_strided_slice %26 {offsets = [2, 0], sizes = [2, 128], strides = [1, 1]} : vector<24x128xf32> to vector<2x128xf32>
      %c0_59 = arith.constant 0 : index
      %c0_60 = arith.constant 0 : index
      %c128 = arith.constant 128 : index
      %80 = vector.load %arg20[%c0_59, %c0_60, %c128] : memref<4x2x1920xf32, #tpu.memory_space<vmem>>, vector<1x2x128xf32>
      %81 = vector.shape_cast %80 : vector<1x2x128xf32> to vector<2x128xf32>
      %82 = vector.shape_cast %79 : vector<2x128xf32> to vector<1x2x128xf32>
      tpu.vector_store %arg20[%c0_59, %c0_60, %c128], %82 {strides = array<i32>} : memref<4x2x1920xf32, #tpu.memory_space<vmem>>, vector<1x2x128xf32>,
      %83 = vector.extract_strided_slice %26 {offsets = [4, 0], sizes = [2, 128], strides = [1, 1]} : vector<24x128xf32> to vector<2x128xf32>
      %c0_61 = arith.constant 0 : index
      %c0_62 = arith.constant 0 : index
      %c256 = arith.constant 256 : index
      %84 = vector.load %arg20[%c0_61, %c0_62, %c256] : memref<4x2x1920xf32, #tpu.memory_space<vmem>>, vector<1x2x128xf32>
      %85 = vector.shape_cast %84 : vector<1x2x128xf32> to vector<2x128xf32>
      %86 = vector.shape_cast %83 : vector<2x128xf32> to vector<1x2x128xf32>
      tpu.vector_store %arg20[%c0_61, %c0_62, %c256], %86 {strides = array<i32>} : memref<4x2x1920xf32, #tpu.memory_space<vmem>>, vector<1x2x128xf32>,
      %87 = vector.extract_strided_slice %26 {offsets = [6, 0], sizes = [2, 128], strides = [1, 1]} : vector<24x128xf32> to vector<2x128xf32>
      %c0_63 = arith.constant 0 : index
      %c0_64 = arith.constant 0 : index
      %c384 = arith.constant 384 : index
      %88 = vector.load %arg20[%c0_63, %c0_64, %c384] : memref<4x2x1920xf32, #tpu.memory_space<vmem>>, vector<1x2x128xf32>
      %89 = vector.shape_cast %88 : vector<1x2x128xf32> to vector<2x128xf32>
      %90 = vector.shape_cast %87 : vector<2x128xf32> to vector<1x2x128xf32>
      tpu.vector_store %arg20[%c0_63, %c0_64, %c384], %90 {strides = array<i32>} : memref<4x2x1920xf32, #tpu.memory_space<vmem>>, vector<1x2x128xf32>,
      %91 = vector.extract_strided_slice %26 {offsets = [8, 0], sizes = [2, 128], strides = [1, 1]} : vector<24x128xf32> to vector<2x128xf32>
      %c0_65 = arith.constant 0 : index
      %c0_66 = arith.constant 0 : index
      %c512 = arith.constant 512 : index
      %92 = vector.load %arg20[%c0_65, %c0_66, %c512] : memref<4x2x1920xf32, #tpu.memory_space<vmem>>, vector<1x2x128xf32>
      %93 = vector.shape_cast %92 : vector<1x2x128xf32> to vector<2x128xf32>
      %94 = vector.shape_cast %91 : vector<2x128xf32> to vector<1x2x128xf32>
      tpu.vector_store %arg20[%c0_65, %c0_66, %c512], %94 {strides = array<i32>} : memref<4x2x1920xf32, #tpu.memory_space<vmem>>, vector<1x2x128xf32>,
      %95 = vector.extract_strided_slice %26 {offsets = [10, 0], sizes = [2, 128], strides = [1, 1]} : vector<24x128xf32> to vector<2x128xf32>
      %c0_67 = arith.constant 0 : index
      %c0_68 = arith.constant 0 : index
      %c640 = arith.constant 640 : index
      %96 = vector.load %arg20[%c0_67, %c0_68, %c640] : memref<4x2x1920xf32, #tpu.memory_space<vmem>>, vector<1x2x128xf32>
      %97 = vector.shape_cast %96 : vector<1x2x128xf32> to vector<2x128xf32>
      %98 = vector.shape_cast %95 : vector<2x128xf32> to vector<1x2x128xf32>
      tpu.vector_store %arg20[%c0_67, %c0_68, %c640], %98 {strides = array<i32>} : memref<4x2x1920xf32, #tpu.memory_space<vmem>>, vector<1x2x128xf32>,
      %99 = vector.extract_strided_slice %26 {offsets = [12, 0], sizes = [2, 128], strides = [1, 1]} : vector<24x128xf32> to vector<2x128xf32>
      %c0_69 = arith.constant 0 : index
      %c0_70 = arith.constant 0 : index
      %c768 = arith.constant 768 : index
      %100 = vector.load %arg20[%c0_69, %c0_70, %c768] : memref<4x2x1920xf32, #tpu.memory_space<vmem>>, vector<1x2x128xf32>
      %101 = vector.shape_cast %100 : vector<1x2x128xf32> to vector<2x128xf32>
      %102 = vector.shape_cast %99 : vector<2x128xf32> to vector<1x2x128xf32>
      tpu.vector_store %arg20[%c0_69, %c0_70, %c768], %102 {strides = array<i32>} : memref<4x2x1920xf32, #tpu.memory_space<vmem>>, vector<1x2x128xf32>,
      %103 = vector.extract_strided_slice %26 {offsets = [14, 0], sizes = [2, 128], strides = [1, 1]} : vector<24x128xf32> to vector<2x128xf32>
      %c0_71 = arith.constant 0 : index
      %c0_72 = arith.constant 0 : index
      %c896 = arith.constant 896 : index
      %104 = vector.load %arg20[%c0_71, %c0_72, %c896] : memref<4x2x1920xf32, #tpu.memory_space<vmem>>, vector<1x2x128xf32>
      %105 = vector.shape_cast %104 : vector<1x2x128xf32> to vector<2x128xf32>
      %106 = vector.shape_cast %103 : vector<2x128xf32> to vector<1x2x128xf32>
      tpu.vector_store %arg20[%c0_71, %c0_72, %c896], %106 {strides = array<i32>} : memref<4x2x1920xf32, #tpu.memory_space<vmem>>, vector<1x2x128xf32>,
      %107 = vector.extract_strided_slice %26 {offsets = [16, 0], sizes = [2, 128], strides = [1, 1]} : vector<24x128xf32> to vector<2x128xf32>
      %c0_73 = arith.constant 0 : index
      %c0_74 = arith.constant 0 : index
      %c1024 = arith.constant 1024 : index
      %108 = vector.load %arg20[%c0_73, %c0_74, %c1024] : memref<4x2x1920xf32, #tpu.memory_space<vmem>>, vector<1x2x128xf32>
      %109 = vector.shape_cast %108 : vector<1x2x128xf32> to vector<2x128xf32>
      %110 = vector.shape_cast %107 : vector<2x128xf32> to vector<1x2x128xf32>
      tpu.vector_store %arg20[%c0_73, %c0_74, %c1024], %110 {strides = array<i32>} : memref<4x2x1920xf32, #tpu.memory_space<vmem>>, vector<1x2x128xf32>,
      %111 = vector.extract_strided_slice %26 {offsets = [18, 0], sizes = [2, 128], strides = [1, 1]} : vector<24x128xf32> to vector<2x128xf32>
      %c0_75 = arith.constant 0 : index
      %c0_76 = arith.constant 0 : index
      %c1152 = arith.constant 1152 : index
      %112 = vector.load %arg20[%c0_75, %c0_76, %c1152] : memref<4x2x1920xf32, #tpu.memory_space<vmem>>, vector<1x2x128xf32>
      %113 = vector.shape_cast %112 : vector<1x2x128xf32> to vector<2x128xf32>
      %114 = vector.shape_cast %111 : vector<2x128xf32> to vector<1x2x128xf32>
      tpu.vector_store %arg20[%c0_75, %c0_76, %c1152], %114 {strides = array<i32>} : memref<4x2x1920xf32, #tpu.memory_space<vmem>>, vector<1x2x128xf32>,
      %115 = vector.extract_strided_slice %26 {offsets = [20, 0], sizes = [2, 128], strides = [1, 1]} : vector<24x128xf32> to vector<2x128xf32>
      %c0_77 = arith.constant 0 : index
      %c0_78 = arith.constant 0 : index
      %c1280 = arith.constant 1280 : index
      %116 = vector.load %arg20[%c0_77, %c0_78, %c1280] : memref<4x2x1920xf32, #tpu.memory_space<vmem>>, vector<1x2x128xf32>
      %117 = vector.shape_cast %116 : vector<1x2x128xf32> to vector<2x128xf32>
      %118 = vector.shape_cast %115 : vector<2x128xf32> to vector<1x2x128xf32>
      tpu.vector_store %arg20[%c0_77, %c0_78, %c1280], %118 {strides = array<i32>} : memref<4x2x1920xf32, #tpu.memory_space<vmem>>, vector<1x2x128xf32>,
      %119 = vector.extract_strided_slice %26 {offsets = [22, 0], sizes = [2, 128], strides = [1, 1]} : vector<24x128xf32> to vector<2x128xf32>
      %c0_79 = arith.constant 0 : index
      %c0_80 = arith.constant 0 : index
      %c1408 = arith.constant 1408 : index
      %120 = vector.load %arg20[%c0_79, %c0_80, %c1408] : memref<4x2x1920xf32, #tpu.memory_space<vmem>>, vector<1x2x128xf32>
      %121 = vector.shape_cast %120 : vector<1x2x128xf32> to vector<2x128xf32>
      %122 = vector.shape_cast %119 : vector<2x128xf32> to vector<1x2x128xf32>
      tpu.vector_store %arg20[%c0_79, %c0_80, %c1408], %122 {strides = array<i32>} : memref<4x2x1920xf32, #tpu.memory_space<vmem>>, vector<1x2x128xf32>,
      %123 = vector.extract_strided_slice %34 {offsets = [0, 0], sizes = [2, 128], strides = [1, 1]} : vector<24x128xf32> to vector<2x128xf32>
      %c0_81 = arith.constant 0 : index
      %c0_82 = arith.constant 0 : index
      %c1536 = arith.constant 1536 : index
      %124 = vector.load %arg20[%c0_81, %c0_82, %c1536] : memref<4x2x1920xf32, #tpu.memory_space<vmem>>, vector<1x2x128xf32>
      %125 = vector.shape_cast %124 : vector<1x2x128xf32> to vector<2x128xf32>
      %126 = vector.shape_cast %123 : vector<2x128xf32> to vector<1x2x128xf32>
      tpu.vector_store %arg20[%c0_81, %c0_82, %c1536], %126 {strides = array<i32>} : memref<4x2x1920xf32, #tpu.memory_space<vmem>>, vector<1x2x128xf32>,
      %127 = vector.extract_strided_slice %34 {offsets = [2, 0], sizes = [2, 128], strides = [1, 1]} : vector<24x128xf32> to vector<2x128xf32>
      %c0_83 = arith.constant 0 : index
      %c0_84 = arith.constant 0 : index
      %c1664 = arith.constant 1664 : index
      %128 = vector.load %arg20[%c0_83, %c0_84, %c1664] : memref<4x2x1920xf32, #tpu.memory_space<vmem>>, vector<1x2x128xf32>
      %129 = vector.shape_cast %128 : vector<1x2x128xf32> to vector<2x128xf32>
      %130 = vector.shape_cast %127 : vector<2x128xf32> to vector<1x2x128xf32>
      tpu.vector_store %arg20[%c0_83, %c0_84, %c1664], %130 {strides = array<i32>} : memref<4x2x1920xf32, #tpu.memory_space<vmem>>, vector<1x2x128xf32>,
      %131 = vector.extract_strided_slice %34 {offsets = [4, 0], sizes = [2, 128], strides = [1, 1]} : vector<24x128xf32> to vector<2x128xf32>
      %c0_85 = arith.constant 0 : index
      %c0_86 = arith.constant 0 : index
      %c1792 = arith.constant 1792 : index
      %132 = vector.load %arg20[%c0_85, %c0_86, %c1792] : memref<4x2x1920xf32, #tpu.memory_space<vmem>>, vector<1x2x128xf32>
      %133 = vector.shape_cast %132 : vector<1x2x128xf32> to vector<2x128xf32>
      %134 = vector.shape_cast %131 : vector<2x128xf32> to vector<1x2x128xf32>
      tpu.vector_store %arg20[%c0_85, %c0_86, %c1792], %134 {strides = array<i32>} : memref<4x2x1920xf32, #tpu.memory_space<vmem>>, vector<1x2x128xf32>,
      %135 = vector.extract_strided_slice %34 {offsets = [6, 0], sizes = [2, 128], strides = [1, 1]} : vector<24x128xf32> to vector<2x128xf32>
      %c1 = arith.constant 1 : index
      %c0_87 = arith.constant 0 : index
      %c0_88 = arith.constant 0 : index
      %136 = vector.load %arg20[%c1, %c0_87, %c0_88] : memref<4x2x1920xf32, #tpu.memory_space<vmem>>, vector<1x2x128xf32>
      %137 = vector.shape_cast %136 : vector<1x2x128xf32> to vector<2x128xf32>
      %138 = vector.shape_cast %135 : vector<2x128xf32> to vector<1x2x128xf32>
      tpu.vector_store %arg20[%c1, %c0_87, %c0_88], %138 {strides = array<i32>} : memref<4x2x1920xf32, #tpu.memory_space<vmem>>, vector<1x2x128xf32>,
      %139 = vector.extract_strided_slice %34 {offsets = [8, 0], sizes = [2, 128], strides = [1, 1]} : vector<24x128xf32> to vector<2x128xf32>
      %c1_89 = arith.constant 1 : index
      %c0_90 = arith.constant 0 : index
      %c128_91 = arith.constant 128 : index
      %140 = vector.load %arg20[%c1_89, %c0_90, %c128_91] : memref<4x2x1920xf32, #tpu.memory_space<vmem>>, vector<1x2x128xf32>
      %141 = vector.shape_cast %140 : vector<1x2x128xf32> to vector<2x128xf32>
      %142 = vector.shape_cast %139 : vector<2x128xf32> to vector<1x2x128xf32>
      tpu.vector_store %arg20[%c1_89, %c0_90, %c128_91], %142 {strides = array<i32>} : memref<4x2x1920xf32, #tpu.memory_space<vmem>>, vector<1x2x128xf32>,
      %143 = vector.extract_strided_slice %34 {offsets = [10, 0], sizes = [2, 128], strides = [1, 1]} : vector<24x128xf32> to vector<2x128xf32>
      %c1_92 = arith.constant 1 : index
      %c0_93 = arith.constant 0 : index
      %c256_94 = arith.constant 256 : index
      %144 = vector.load %arg20[%c1_92, %c0_93, %c256_94] : memref<4x2x1920xf32, #tpu.memory_space<vmem>>, vector<1x2x128xf32>
      %145 = vector.shape_cast %144 : vector<1x2x128xf32> to vector<2x128xf32>
      %146 = vector.shape_cast %143 : vector<2x128xf32> to vector<1x2x128xf32>
      tpu.vector_store %arg20[%c1_92, %c0_93, %c256_94], %146 {strides = array<i32>} : memref<4x2x1920xf32, #tpu.memory_space<vmem>>, vector<1x2x128xf32>,
      %147 = vector.extract_strided_slice %34 {offsets = [12, 0], sizes = [2, 128], strides = [1, 1]} : vector<24x128xf32> to vector<2x128xf32>
      %c1_95 = arith.constant 1 : index
      %c0_96 = arith.constant 0 : index
      %c384_97 = arith.constant 384 : index
      %148 = vector.load %arg20[%c1_95, %c0_96, %c384_97] : memref<4x2x1920xf32, #tpu.memory_space<vmem>>, vector<1x2x128xf32>
      %149 = vector.shape_cast %148 : vector<1x2x128xf32> to vector<2x128xf32>
      %150 = vector.shape_cast %147 : vector<2x128xf32> to vector<1x2x128xf32>
      tpu.vector_store %arg20[%c1_95, %c0_96, %c384_97], %150 {strides = array<i32>} : memref<4x2x1920xf32, #tpu.memory_space<vmem>>, vector<1x2x128xf32>,
      %151 = vector.extract_strided_slice %34 {offsets = [14, 0], sizes = [2, 128], strides = [1, 1]} : vector<24x128xf32> to vector<2x128xf32>
      %c1_98 = arith.constant 1 : index
      %c0_99 = arith.constant 0 : index
      %c512_100 = arith.constant 512 : index
      %152 = vector.load %arg20[%c1_98, %c0_99, %c512_100] : memref<4x2x1920xf32, #tpu.memory_space<vmem>>, vector<1x2x128xf32>
      %153 = vector.shape_cast %152 : vector<1x2x128xf32> to vector<2x128xf32>
      %154 = vector.shape_cast %151 : vector<2x128xf32> to vector<1x2x128xf32>
      tpu.vector_store %arg20[%c1_98, %c0_99, %c512_100], %154 {strides = array<i32>} : memref<4x2x1920xf32, #tpu.memory_space<vmem>>, vector<1x2x128xf32>,
      %155 = vector.extract_strided_slice %34 {offsets = [16, 0], sizes = [2, 128], strides = [1, 1]} : vector<24x128xf32> to vector<2x128xf32>
      %c1_101 = arith.constant 1 : index
      %c0_102 = arith.constant 0 : index
      %c640_103 = arith.constant 640 : index
      %156 = vector.load %arg20[%c1_101, %c0_102, %c640_103] : memref<4x2x1920xf32, #tpu.memory_space<vmem>>, vector<1x2x128xf32>
      %157 = vector.shape_cast %156 : vector<1x2x128xf32> to vector<2x128xf32>
      %158 = vector.shape_cast %155 : vector<2x128xf32> to vector<1x2x128xf32>
      tpu.vector_store %arg20[%c1_101, %c0_102, %c640_103], %158 {strides = array<i32>} : memref<4x2x1920xf32, #tpu.memory_space<vmem>>, vector<1x2x128xf32>,
      %159 = vector.extract_strided_slice %34 {offsets = [18, 0], sizes = [2, 128], strides = [1, 1]} : vector<24x128xf32> to vector<2x128xf32>
      %c1_104 = arith.constant 1 : index
      %c0_105 = arith.constant 0 : index
      %c768_106 = arith.constant 768 : index
      %160 = vector.load %arg20[%c1_104, %c0_105, %c768_106] : memref<4x2x1920xf32, #tpu.memory_space<vmem>>, vector<1x2x128xf32>
      %161 = vector.shape_cast %160 : vector<1x2x128xf32> to vector<2x128xf32>
      %162 = vector.shape_cast %159 : vector<2x128xf32> to vector<1x2x128xf32>
      tpu.vector_store %arg20[%c1_104, %c0_105, %c768_106], %162 {strides = array<i32>} : memref<4x2x1920xf32, #tpu.memory_space<vmem>>, vector<1x2x128xf32>,
      %163 = vector.extract_strided_slice %34 {offsets = [20, 0], sizes = [2, 128], strides = [1, 1]} : vector<24x128xf32> to vector<2x128xf32>
      %c1_107 = arith.constant 1 : index
      %c0_108 = arith.constant 0 : index
      %c896_109 = arith.constant 896 : index
      %164 = vector.load %arg20[%c1_107, %c0_108, %c896_109] : memref<4x2x1920xf32, #tpu.memory_space<vmem>>, vector<1x2x128xf32>
      %165 = vector.shape_cast %164 : vector<1x2x128xf32> to vector<2x128xf32>
      %166 = vector.shape_cast %163 : vector<2x128xf32> to vector<1x2x128xf32>
      tpu.vector_store %arg20[%c1_107, %c0_108, %c896_109], %166 {strides = array<i32>} : memref<4x2x1920xf32, #tpu.memory_space<vmem>>, vector<1x2x128xf32>,
      %167 = vector.extract_strided_slice %34 {offsets = [22, 0], sizes = [2, 128], strides = [1, 1]} : vector<24x128xf32> to vector<2x128xf32>
      %c1_110 = arith.constant 1 : index
      %c0_111 = arith.constant 0 : index
      %c1024_112 = arith.constant 1024 : index
      %168 = vector.load %arg20[%c1_110, %c0_111, %c1024_112] : memref<4x2x1920xf32, #tpu.memory_space<vmem>>, vector<1x2x128xf32>
      %169 = vector.shape_cast %168 : vector<1x2x128xf32> to vector<2x128xf32>
      %170 = vector.shape_cast %167 : vector<2x128xf32> to vector<1x2x128xf32>
      tpu.vector_store %arg20[%c1_110, %c0_111, %c1024_112], %170 {strides = array<i32>} : memref<4x2x1920xf32, #tpu.memory_space<vmem>>, vector<1x2x128xf32>,
      %171 = vector.extract_strided_slice %44 {offsets = [0, 0], sizes = [2, 128], strides = [1, 1]} : vector<16x128xf32> to vector<2x128xf32>
      %c1_113 = arith.constant 1 : index
      %c0_114 = arith.constant 0 : index
      %c1152_115 = arith.constant 1152 : index
      %172 = vector.load %arg20[%c1_113, %c0_114, %c1152_115] : memref<4x2x1920xf32, #tpu.memory_space<vmem>>, vector<1x2x128xf32>
      %173 = vector.shape_cast %172 : vector<1x2x128xf32> to vector<2x128xf32>
      %174 = vector.shape_cast %171 : vector<2x128xf32> to vector<1x2x128xf32>
      tpu.vector_store %arg20[%c1_113, %c0_114, %c1152_115], %174 {strides = array<i32>} : memref<4x2x1920xf32, #tpu.memory_space<vmem>>, vector<1x2x128xf32>,
      %175 = vector.extract_strided_slice %44 {offsets = [2, 0], sizes = [2, 128], strides = [1, 1]} : vector<16x128xf32> to vector<2x128xf32>
      %c1_116 = arith.constant 1 : index
      %c0_117 = arith.constant 0 : index
      %c1280_118 = arith.constant 1280 : index
      %176 = vector.load %arg20[%c1_116, %c0_117, %c1280_118] : memref<4x2x1920xf32, #tpu.memory_space<vmem>>, vector<1x2x128xf32>
      %177 = vector.shape_cast %176 : vector<1x2x128xf32> to vector<2x128xf32>
      %178 = vector.shape_cast %175 : vector<2x128xf32> to vector<1x2x128xf32>
      tpu.vector_store %arg20[%c1_116, %c0_117, %c1280_118], %178 {strides = array<i32>} : memref<4x2x1920xf32, #tpu.memory_space<vmem>>, vector<1x2x128xf32>,
      %179 = vector.extract_strided_slice %44 {offsets = [4, 0], sizes = [2, 128], strides = [1, 1]} : vector<16x128xf32> to vector<2x128xf32>
      %c1_119 = arith.constant 1 : index
      %c0_120 = arith.constant 0 : index
      %c1408_121 = arith.constant 1408 : index
      %180 = vector.load %arg20[%c1_119, %c0_120, %c1408_121] : memref<4x2x1920xf32, #tpu.memory_space<vmem>>, vector<1x2x128xf32>
      %181 = vector.shape_cast %180 : vector<1x2x128xf32> to vector<2x128xf32>
      %182 = vector.shape_cast %179 : vector<2x128xf32> to vector<1x2x128xf32>
      tpu.vector_store %arg20[%c1_119, %c0_120, %c1408_121], %182 {strides = array<i32>} : memref<4x2x1920xf32, #tpu.memory_space<vmem>>, vector<1x2x128xf32>,
      %183 = vector.extract_strided_slice %44 {offsets = [6, 0], sizes = [2, 128], strides = [1, 1]} : vector<16x128xf32> to vector<2x128xf32>
      %c1_122 = arith.constant 1 : index
      %c0_123 = arith.constant 0 : index
      %c1536_124 = arith.constant 1536 : index
      %184 = vector.load %arg20[%c1_122, %c0_123, %c1536_124] : memref<4x2x1920xf32, #tpu.memory_space<vmem>>, vector<1x2x128xf32>
      %185 = vector.shape_cast %184 : vector<1x2x128xf32> to vector<2x128xf32>
      %186 = vector.shape_cast %183 : vector<2x128xf32> to vector<1x2x128xf32>
      tpu.vector_store %arg20[%c1_122, %c0_123, %c1536_124], %186 {strides = array<i32>} : memref<4x2x1920xf32, #tpu.memory_space<vmem>>, vector<1x2x128xf32>,
      %187 = vector.extract_strided_slice %44 {offsets = [8, 0], sizes = [2, 128], strides = [1, 1]} : vector<16x128xf32> to vector<2x128xf32>
      %c1_125 = arith.constant 1 : index
      %c0_126 = arith.constant 0 : index
      %c1664_127 = arith.constant 1664 : index
      %188 = vector.load %arg20[%c1_125, %c0_126, %c1664_127] : memref<4x2x1920xf32, #tpu.memory_space<vmem>>, vector<1x2x128xf32>
      %189 = vector.shape_cast %188 : vector<1x2x128xf32> to vector<2x128xf32>
      %190 = vector.shape_cast %187 : vector<2x128xf32> to vector<1x2x128xf32>
      tpu.vector_store %arg20[%c1_125, %c0_126, %c1664_127], %190 {strides = array<i32>} : memref<4x2x1920xf32, #tpu.memory_space<vmem>>, vector<1x2x128xf32>,
      %191 = vector.extract_strided_slice %44 {offsets = [10, 0], sizes = [2, 128], strides = [1, 1]} : vector<16x128xf32> to vector<2x128xf32>
      %c1_128 = arith.constant 1 : index
      %c0_129 = arith.constant 0 : index
      %c1792_130 = arith.constant 1792 : index
      %192 = vector.load %arg20[%c1_128, %c0_129, %c1792_130] : memref<4x2x1920xf32, #tpu.memory_space<vmem>>, vector<1x2x128xf32>
      %193 = vector.shape_cast %192 : vector<1x2x128xf32> to vector<2x128xf32>
      %194 = vector.shape_cast %191 : vector<2x128xf32> to vector<1x2x128xf32>
      tpu.vector_store %arg20[%c1_128, %c0_129, %c1792_130], %194 {strides = array<i32>} : memref<4x2x1920xf32, #tpu.memory_space<vmem>>, vector<1x2x128xf32>,
      %195 = vector.extract_strided_slice %44 {offsets = [12, 0], sizes = [2, 128], strides = [1, 1]} : vector<16x128xf32> to vector<2x128xf32>
      %c2 = arith.constant 2 : index
      %c0_131 = arith.constant 0 : index
      %c0_132 = arith.constant 0 : index
      %196 = vector.load %arg20[%c2, %c0_131, %c0_132] : memref<4x2x1920xf32, #tpu.memory_space<vmem>>, vector<1x2x128xf32>
      %197 = vector.shape_cast %196 : vector<1x2x128xf32> to vector<2x128xf32>
      %198 = vector.shape_cast %195 : vector<2x128xf32> to vector<1x2x128xf32>
      tpu.vector_store %arg20[%c2, %c0_131, %c0_132], %198 {strides = array<i32>} : memref<4x2x1920xf32, #tpu.memory_space<vmem>>, vector<1x2x128xf32>,
      %199 = vector.extract_strided_slice %44 {offsets = [14, 0], sizes = [2, 128], strides = [1, 1]} : vector<16x128xf32> to vector<2x128xf32>
      %c2_133 = arith.constant 2 : index
      %c0_134 = arith.constant 0 : index
      %c128_135 = arith.constant 128 : index
      %200 = vector.load %arg20[%c2_133, %c0_134, %c128_135] : memref<4x2x1920xf32, #tpu.memory_space<vmem>>, vector<1x2x128xf32>
      %201 = vector.shape_cast %200 : vector<1x2x128xf32> to vector<2x128xf32>
      %202 = vector.shape_cast %199 : vector<2x128xf32> to vector<1x2x128xf32>
      tpu.vector_store %arg20[%c2_133, %c0_134, %c128_135], %202 {strides = array<i32>} : memref<4x2x1920xf32, #tpu.memory_space<vmem>>, vector<1x2x128xf32>,
      %203 = vector.extract_strided_slice %54 {offsets = [0, 0], sizes = [2, 128], strides = [1, 1]} : vector<22x128xf32> to vector<2x128xf32>
      %c2_136 = arith.constant 2 : index
      %c0_137 = arith.constant 0 : index
      %c256_138 = arith.constant 256 : index
      %204 = vector.load %arg20[%c2_136, %c0_137, %c256_138] : memref<4x2x1920xf32, #tpu.memory_space<vmem>>, vector<1x2x128xf32>
      %205 = vector.shape_cast %204 : vector<1x2x128xf32> to vector<2x128xf32>
      %206 = vector.shape_cast %203 : vector<2x128xf32> to vector<1x2x128xf32>
      tpu.vector_store %arg20[%c2_136, %c0_137, %c256_138], %206 {strides = array<i32>} : memref<4x2x1920xf32, #tpu.memory_space<vmem>>, vector<1x2x128xf32>,
      %207 = vector.extract_strided_slice %54 {offsets = [2, 0], sizes = [2, 128], strides = [1, 1]} : vector<22x128xf32> to vector<2x128xf32>
      %c2_139 = arith.constant 2 : index
      %c0_140 = arith.constant 0 : index
      %c384_141 = arith.constant 384 : index
      %208 = vector.load %arg20[%c2_139, %c0_140, %c384_141] : memref<4x2x1920xf32, #tpu.memory_space<vmem>>, vector<1x2x128xf32>
      %209 = vector.shape_cast %208 : vector<1x2x128xf32> to vector<2x128xf32>
      %210 = vector.shape_cast %207 : vector<2x128xf32> to vector<1x2x128xf32>
      tpu.vector_store %arg20[%c2_139, %c0_140, %c384_141], %210 {strides = array<i32>} : memref<4x2x1920xf32, #tpu.memory_space<vmem>>, vector<1x2x128xf32>,
      %211 = vector.extract_strided_slice %54 {offsets = [4, 0], sizes = [2, 128], strides = [1, 1]} : vector<22x128xf32> to vector<2x128xf32>
      %c2_142 = arith.constant 2 : index
      %c0_143 = arith.constant 0 : index
      %c512_144 = arith.constant 512 : index
      %212 = vector.load %arg20[%c2_142, %c0_143, %c512_144] : memref<4x2x1920xf32, #tpu.memory_space<vmem>>, vector<1x2x128xf32>
      %213 = vector.shape_cast %212 : vector<1x2x128xf32> to vector<2x128xf32>
      %214 = vector.shape_cast %211 : vector<2x128xf32> to vector<1x2x128xf32>
      tpu.vector_store %arg20[%c2_142, %c0_143, %c512_144], %214 {strides = array<i32>} : memref<4x2x1920xf32, #tpu.memory_space<vmem>>, vector<1x2x128xf32>,
      %215 = vector.extract_strided_slice %54 {offsets = [8, 0], sizes = [2, 128], strides = [1, 1]} : vector<22x128xf32> to vector<2x128xf32>
      %c2_145 = arith.constant 2 : index
      %c0_146 = arith.constant 0 : index
      %c640_147 = arith.constant 640 : index
      %216 = vector.load %arg20[%c2_145, %c0_146, %c640_147] : memref<4x2x1920xf32, #tpu.memory_space<vmem>>, vector<1x2x128xf32>
      %217 = vector.shape_cast %216 : vector<1x2x128xf32> to vector<2x128xf32>
      %218 = vector.shape_cast %215 : vector<2x128xf32> to vector<1x2x128xf32>
      tpu.vector_store %arg20[%c2_145, %c0_146, %c640_147], %218 {strides = array<i32>} : memref<4x2x1920xf32, #tpu.memory_space<vmem>>, vector<1x2x128xf32>,
      %219 = vector.extract_strided_slice %54 {offsets = [10, 0], sizes = [2, 128], strides = [1, 1]} : vector<22x128xf32> to vector<2x128xf32>
      %c2_148 = arith.constant 2 : index
      %c0_149 = arith.constant 0 : index
      %c768_150 = arith.constant 768 : index
      %220 = vector.load %arg20[%c2_148, %c0_149, %c768_150] : memref<4x2x1920xf32, #tpu.memory_space<vmem>>, vector<1x2x128xf32>
      %221 = vector.shape_cast %220 : vector<1x2x128xf32> to vector<2x128xf32>
      %222 = vector.shape_cast %219 : vector<2x128xf32> to vector<1x2x128xf32>
      tpu.vector_store %arg20[%c2_148, %c0_149, %c768_150], %222 {strides = array<i32>} : memref<4x2x1920xf32, #tpu.memory_space<vmem>>, vector<1x2x128xf32>,
      %223 = vector.extract_strided_slice %54 {offsets = [12, 0], sizes = [2, 128], strides = [1, 1]} : vector<22x128xf32> to vector<2x128xf32>
      %c2_151 = arith.constant 2 : index
      %c0_152 = arith.constant 0 : index
      %c896_153 = arith.constant 896 : index
      %224 = vector.load %arg20[%c2_151, %c0_152, %c896_153] : memref<4x2x1920xf32, #tpu.memory_space<vmem>>, vector<1x2x128xf32>
      %225 = vector.shape_cast %224 : vector<1x2x128xf32> to vector<2x128xf32>
      %226 = vector.shape_cast %223 : vector<2x128xf32> to vector<1x2x128xf32>
      tpu.vector_store %arg20[%c2_151, %c0_152, %c896_153], %226 {strides = array<i32>} : memref<4x2x1920xf32, #tpu.memory_space<vmem>>, vector<1x2x128xf32>,
      %227 = vector.extract_strided_slice %54 {offsets = [16, 0], sizes = [2, 128], strides = [1, 1]} : vector<22x128xf32> to vector<2x128xf32>
      %c2_154 = arith.constant 2 : index
      %c0_155 = arith.constant 0 : index
      %c1024_156 = arith.constant 1024 : index
      %228 = vector.load %arg20[%c2_154, %c0_155, %c1024_156] : memref<4x2x1920xf32, #tpu.memory_space<vmem>>, vector<1x2x128xf32>
      %229 = vector.shape_cast %228 : vector<1x2x128xf32> to vector<2x128xf32>
      %230 = vector.shape_cast %227 : vector<2x128xf32> to vector<1x2x128xf32>
      tpu.vector_store %arg20[%c2_154, %c0_155, %c1024_156], %230 {strides = array<i32>} : memref<4x2x1920xf32, #tpu.memory_space<vmem>>, vector<1x2x128xf32>,
      %231 = vector.extract_strided_slice %54 {offsets = [18, 0], sizes = [2, 128], strides = [1, 1]} : vector<22x128xf32> to vector<2x128xf32>
      %c2_157 = arith.constant 2 : index
      %c0_158 = arith.constant 0 : index
      %c1152_159 = arith.constant 1152 : index
      %232 = vector.load %arg20[%c2_157, %c0_158, %c1152_159] : memref<4x2x1920xf32, #tpu.memory_space<vmem>>, vector<1x2x128xf32>
      %233 = vector.shape_cast %232 : vector<1x2x128xf32> to vector<2x128xf32>
      %234 = vector.shape_cast %231 : vector<2x128xf32> to vector<1x2x128xf32>
      tpu.vector_store %arg20[%c2_157, %c0_158, %c1152_159], %234 {strides = array<i32>} : memref<4x2x1920xf32, #tpu.memory_space<vmem>>, vector<1x2x128xf32>,
      %235 = vector.extract_strided_slice %54 {offsets = [20, 0], sizes = [2, 128], strides = [1, 1]} : vector<22x128xf32> to vector<2x128xf32>
      %c2_160 = arith.constant 2 : index
      %c0_161 = arith.constant 0 : index
      %c1280_162 = arith.constant 1280 : index
      %236 = vector.load %arg20[%c2_160, %c0_161, %c1280_162] : memref<4x2x1920xf32, #tpu.memory_space<vmem>>, vector<1x2x128xf32>
      %237 = vector.shape_cast %236 : vector<1x2x128xf32> to vector<2x128xf32>
      %238 = vector.shape_cast %235 : vector<2x128xf32> to vector<1x2x128xf32>
      tpu.vector_store %arg20[%c2_160, %c0_161, %c1280_162], %238 {strides = array<i32>} : memref<4x2x1920xf32, #tpu.memory_space<vmem>>, vector<1x2x128xf32>,
      %239 = vector.extract_strided_slice %64 {offsets = [0, 0], sizes = [2, 128], strides = [1, 1]} : vector<18x128xf32> to vector<2x128xf32>
      %c2_163 = arith.constant 2 : index
      %c0_164 = arith.constant 0 : index
      %c1408_165 = arith.constant 1408 : index
      %240 = vector.load %arg20[%c2_163, %c0_164, %c1408_165] : memref<4x2x1920xf32, #tpu.memory_space<vmem>>, vector<1x2x128xf32>
      %241 = vector.shape_cast %240 : vector<1x2x128xf32> to vector<2x128xf32>
      %242 = vector.shape_cast %239 : vector<2x128xf32> to vector<1x2x128xf32>
      tpu.vector_store %arg20[%c2_163, %c0_164, %c1408_165], %242 {strides = array<i32>} : memref<4x2x1920xf32, #tpu.memory_space<vmem>>, vector<1x2x128xf32>,
      %243 = vector.extract_strided_slice %64 {offsets = [2, 0], sizes = [2, 128], strides = [1, 1]} : vector<18x128xf32> to vector<2x128xf32>
      %c2_166 = arith.constant 2 : index
      %c0_167 = arith.constant 0 : index
      %c1536_168 = arith.constant 1536 : index
      %244 = vector.load %arg20[%c2_166, %c0_167, %c1536_168] : memref<4x2x1920xf32, #tpu.memory_space<vmem>>, vector<1x2x128xf32>
      %245 = vector.shape_cast %244 : vector<1x2x128xf32> to vector<2x128xf32>
      %246 = vector.shape_cast %243 : vector<2x128xf32> to vector<1x2x128xf32>
      tpu.vector_store %arg20[%c2_166, %c0_167, %c1536_168], %246 {strides = array<i32>} : memref<4x2x1920xf32, #tpu.memory_space<vmem>>, vector<1x2x128xf32>,
      %247 = vector.extract_strided_slice %64 {offsets = [4, 0], sizes = [2, 128], strides = [1, 1]} : vector<18x128xf32> to vector<2x128xf32>
      %c2_169 = arith.constant 2 : index
      %c0_170 = arith.constant 0 : index
      %c1664_171 = arith.constant 1664 : index
      %248 = vector.load %arg20[%c2_169, %c0_170, %c1664_171] : memref<4x2x1920xf32, #tpu.memory_space<vmem>>, vector<1x2x128xf32>
      %249 = vector.shape_cast %248 : vector<1x2x128xf32> to vector<2x128xf32>
      %250 = vector.shape_cast %247 : vector<2x128xf32> to vector<1x2x128xf32>
      tpu.vector_store %arg20[%c2_169, %c0_170, %c1664_171], %250 {strides = array<i32>} : memref<4x2x1920xf32, #tpu.memory_space<vmem>>, vector<1x2x128xf32>,
      %251 = vector.extract_strided_slice %64 {offsets = [6, 0], sizes = [2, 128], strides = [1, 1]} : vector<18x128xf32> to vector<2x128xf32>
      %c2_172 = arith.constant 2 : index
      %c0_173 = arith.constant 0 : index
      %c1792_174 = arith.constant 1792 : index
      %252 = vector.load %arg20[%c2_172, %c0_173, %c1792_174] : memref<4x2x1920xf32, #tpu.memory_space<vmem>>, vector<1x2x128xf32>
      %253 = vector.shape_cast %252 : vector<1x2x128xf32> to vector<2x128xf32>
      %254 = vector.shape_cast %251 : vector<2x128xf32> to vector<1x2x128xf32>
      tpu.vector_store %arg20[%c2_172, %c0_173, %c1792_174], %254 {strides = array<i32>} : memref<4x2x1920xf32, #tpu.memory_space<vmem>>, vector<1x2x128xf32>,
      %255 = vector.extract_strided_slice %64 {offsets = [8, 0], sizes = [2, 128], strides = [1, 1]} : vector<18x128xf32> to vector<2x128xf32>
      %c3 = arith.constant 3 : index
      %c0_175 = arith.constant 0 : index
      %c0_176 = arith.constant 0 : index
      %256 = vector.load %arg20[%c3, %c0_175, %c0_176] : memref<4x2x1920xf32, #tpu.memory_space<vmem>>, vector<1x2x128xf32>
      %257 = vector.shape_cast %256 : vector<1x2x128xf32> to vector<2x128xf32>
      %258 = vector.shape_cast %255 : vector<2x128xf32> to vector<1x2x128xf32>
      tpu.vector_store %arg20[%c3, %c0_175, %c0_176], %258 {strides = array<i32>} : memref<4x2x1920xf32, #tpu.memory_space<vmem>>, vector<1x2x128xf32>,
      %259 = vector.extract_strided_slice %64 {offsets = [10, 0], sizes = [2, 128], strides = [1, 1]} : vector<18x128xf32> to vector<2x128xf32>
      %c3_177 = arith.constant 3 : index
      %c0_178 = arith.constant 0 : index
      %c128_179 = arith.constant 128 : index
      %260 = vector.load %arg20[%c3_177, %c0_178, %c128_179] : memref<4x2x1920xf32, #tpu.memory_space<vmem>>, vector<1x2x128xf32>
      %261 = vector.shape_cast %260 : vector<1x2x128xf32> to vector<2x128xf32>
      %262 = vector.shape_cast %259 : vector<2x128xf32> to vector<1x2x128xf32>
      tpu.vector_store %arg20[%c3_177, %c0_178, %c128_179], %262 {strides = array<i32>} : memref<4x2x1920xf32, #tpu.memory_space<vmem>>, vector<1x2x128xf32>,
      %263 = vector.extract_strided_slice %64 {offsets = [12, 0], sizes = [2, 128], strides = [1, 1]} : vector<18x128xf32> to vector<2x128xf32>
      %c3_180 = arith.constant 3 : index
      %c0_181 = arith.constant 0 : index
      %c256_182 = arith.constant 256 : index
      %264 = vector.load %arg20[%c3_180, %c0_181, %c256_182] : memref<4x2x1920xf32, #tpu.memory_space<vmem>>, vector<1x2x128xf32>
      %265 = vector.shape_cast %264 : vector<1x2x128xf32> to vector<2x128xf32>
      %266 = vector.shape_cast %263 : vector<2x128xf32> to vector<1x2x128xf32>
      tpu.vector_store %arg20[%c3_180, %c0_181, %c256_182], %266 {strides = array<i32>} : memref<4x2x1920xf32, #tpu.memory_space<vmem>>, vector<1x2x128xf32>,
      %267 = vector.extract_strided_slice %64 {offsets = [14, 0], sizes = [2, 128], strides = [1, 1]} : vector<18x128xf32> to vector<2x128xf32>
      %c3_183 = arith.constant 3 : index
      %c0_184 = arith.constant 0 : index
      %c384_185 = arith.constant 384 : index
      %268 = vector.load %arg20[%c3_183, %c0_184, %c384_185] : memref<4x2x1920xf32, #tpu.memory_space<vmem>>, vector<1x2x128xf32>
      %269 = vector.shape_cast %268 : vector<1x2x128xf32> to vector<2x128xf32>
      %270 = vector.shape_cast %267 : vector<2x128xf32> to vector<1x2x128xf32>
      tpu.vector_store %arg20[%c3_183, %c0_184, %c384_185], %270 {strides = array<i32>} : memref<4x2x1920xf32, #tpu.memory_space<vmem>>, vector<1x2x128xf32>,
      %271 = vector.extract_strided_slice %64 {offsets = [16, 0], sizes = [2, 128], strides = [1, 1]} : vector<18x128xf32> to vector<2x128xf32>
      %c3_186 = arith.constant 3 : index
      %c0_187 = arith.constant 0 : index
      %c512_188 = arith.constant 512 : index
      %272 = vector.load %arg20[%c3_186, %c0_187, %c512_188] : memref<4x2x1920xf32, #tpu.memory_space<vmem>>, vector<1x2x128xf32>
      %273 = vector.shape_cast %272 : vector<1x2x128xf32> to vector<2x128xf32>
      %274 = vector.shape_cast %271 : vector<2x128xf32> to vector<1x2x128xf32>
      tpu.vector_store %arg20[%c3_186, %c0_187, %c512_188], %274 {strides = array<i32>} : memref<4x2x1920xf32, #tpu.memory_space<vmem>>, vector<1x2x128xf32>,
      %275 = vector.extract_strided_slice %74 {offsets = [0, 0], sizes = [2, 128], strides = [1, 1]} : vector<22x128xf32> to vector<2x128xf32>
      %c3_189 = arith.constant 3 : index
      %c0_190 = arith.constant 0 : index
      %c640_191 = arith.constant 640 : index
      %276 = vector.load %arg20[%c3_189, %c0_190, %c640_191] : memref<4x2x1920xf32, #tpu.memory_space<vmem>>, vector<1x2x128xf32>
      %277 = vector.shape_cast %276 : vector<1x2x128xf32> to vector<2x128xf32>
      %278 = vector.shape_cast %275 : vector<2x128xf32> to vector<1x2x128xf32>
      tpu.vector_store %arg20[%c3_189, %c0_190, %c640_191], %278 {strides = array<i32>} : memref<4x2x1920xf32, #tpu.memory_space<vmem>>, vector<1x2x128xf32>,
      %279 = vector.extract_strided_slice %74 {offsets = [2, 0], sizes = [2, 128], strides = [1, 1]} : vector<22x128xf32> to vector<2x128xf32>
      %c3_192 = arith.constant 3 : index
      %c0_193 = arith.constant 0 : index
      %c768_194 = arith.constant 768 : index
      %280 = vector.load %arg20[%c3_192, %c0_193, %c768_194] : memref<4x2x1920xf32, #tpu.memory_space<vmem>>, vector<1x2x128xf32>
      %281 = vector.shape_cast %280 : vector<1x2x128xf32> to vector<2x128xf32>
      %282 = vector.shape_cast %279 : vector<2x128xf32> to vector<1x2x128xf32>
      tpu.vector_store %arg20[%c3_192, %c0_193, %c768_194], %282 {strides = array<i32>} : memref<4x2x1920xf32, #tpu.memory_space<vmem>>, vector<1x2x128xf32>,
      %283 = vector.extract_strided_slice %74 {offsets = [6, 0], sizes = [2, 128], strides = [1, 1]} : vector<22x128xf32> to vector<2x128xf32>
      %c3_195 = arith.constant 3 : index
      %c0_196 = arith.constant 0 : index
      %c896_197 = arith.constant 896 : index
      %284 = vector.load %arg20[%c3_195, %c0_196, %c896_197] : memref<4x2x1920xf32, #tpu.memory_space<vmem>>, vector<1x2x128xf32>
      %285 = vector.shape_cast %284 : vector<1x2x128xf32> to vector<2x128xf32>
      %286 = vector.shape_cast %283 : vector<2x128xf32> to vector<1x2x128xf32>
      tpu.vector_store %arg20[%c3_195, %c0_196, %c896_197], %286 {strides = array<i32>} : memref<4x2x1920xf32, #tpu.memory_space<vmem>>, vector<1x2x128xf32>,
      %287 = vector.extract_strided_slice %74 {offsets = [8, 0], sizes = [2, 128], strides = [1, 1]} : vector<22x128xf32> to vector<2x128xf32>
      %c3_198 = arith.constant 3 : index
      %c0_199 = arith.constant 0 : index
      %c1024_200 = arith.constant 1024 : index
      %288 = vector.load %arg20[%c3_198, %c0_199, %c1024_200] : memref<4x2x1920xf32, #tpu.memory_space<vmem>>, vector<1x2x128xf32>
      %289 = vector.shape_cast %288 : vector<1x2x128xf32> to vector<2x128xf32>
      %290 = vector.shape_cast %287 : vector<2x128xf32> to vector<1x2x128xf32>
      tpu.vector_store %arg20[%c3_198, %c0_199, %c1024_200], %290 {strides = array<i32>} : memref<4x2x1920xf32, #tpu.memory_space<vmem>>, vector<1x2x128xf32>,
      %291 = vector.extract_strided_slice %74 {offsets = [12, 0], sizes = [2, 128], strides = [1, 1]} : vector<22x128xf32> to vector<2x128xf32>
      %c3_201 = arith.constant 3 : index
      %c0_202 = arith.constant 0 : index
      %c1152_203 = arith.constant 1152 : index
      %292 = vector.load %arg20[%c3_201, %c0_202, %c1152_203] : memref<4x2x1920xf32, #tpu.memory_space<vmem>>, vector<1x2x128xf32>
      %293 = vector.shape_cast %292 : vector<1x2x128xf32> to vector<2x128xf32>
      %294 = vector.shape_cast %291 : vector<2x128xf32> to vector<1x2x128xf32>
      tpu.vector_store %arg20[%c3_201, %c0_202, %c1152_203], %294 {strides = array<i32>} : memref<4x2x1920xf32, #tpu.memory_space<vmem>>, vector<1x2x128xf32>,
      %295 = vector.extract_strided_slice %74 {offsets = [14, 0], sizes = [2, 128], strides = [1, 1]} : vector<22x128xf32> to vector<2x128xf32>
      %c3_204 = arith.constant 3 : index
      %c0_205 = arith.constant 0 : index
      %c1280_206 = arith.constant 1280 : index
      %296 = vector.load %arg20[%c3_204, %c0_205, %c1280_206] : memref<4x2x1920xf32, #tpu.memory_space<vmem>>, vector<1x2x128xf32>
      %297 = vector.shape_cast %296 : vector<1x2x128xf32> to vector<2x128xf32>
      %298 = vector.shape_cast %295 : vector<2x128xf32> to vector<1x2x128xf32>
      tpu.vector_store %arg20[%c3_204, %c0_205, %c1280_206], %298 {strides = array<i32>} : memref<4x2x1920xf32, #tpu.memory_space<vmem>>, vector<1x2x128xf32>,
      %299 = vector.extract_strided_slice %74 {offsets = [18, 0], sizes = [2, 128], strides = [1, 1]} : vector<22x128xf32> to vector<2x128xf32>
      %c3_207 = arith.constant 3 : index
      %c0_208 = arith.constant 0 : index
      %c1408_209 = arith.constant 1408 : index
      %300 = vector.load %arg20[%c3_207, %c0_208, %c1408_209] : memref<4x2x1920xf32, #tpu.memory_space<vmem>>, vector<1x2x128xf32>
      %301 = vector.shape_cast %300 : vector<1x2x128xf32> to vector<2x128xf32>
      %302 = vector.shape_cast %299 : vector<2x128xf32> to vector<1x2x128xf32>
      tpu.vector_store %arg20[%c3_207, %c0_208, %c1408_209], %302 {strides = array<i32>} : memref<4x2x1920xf32, #tpu.memory_space<vmem>>, vector<1x2x128xf32>,
      %303 = vector.extract_strided_slice %74 {offsets = [20, 0], sizes = [2, 128], strides = [1, 1]} : vector<22x128xf32> to vector<2x128xf32>
      %c3_210 = arith.constant 3 : index
      %c0_211 = arith.constant 0 : index
      %c1536_212 = arith.constant 1536 : index
      %304 = vector.load %arg20[%c3_210, %c0_211, %c1536_212] : memref<4x2x1920xf32, #tpu.memory_space<vmem>>, vector<1x2x128xf32>
      %305 = vector.shape_cast %304 : vector<1x2x128xf32> to vector<2x128xf32>
      %306 = vector.shape_cast %303 : vector<2x128xf32> to vector<1x2x128xf32>
      tpu.vector_store %arg20[%c3_210, %c0_211, %c1536_212], %306 {strides = array<i32>} : memref<4x2x1920xf32, #tpu.memory_space<vmem>>, vector<1x2x128xf32>,
    } else {
    }
    %3 = arith.index_cast %arg0 : i32 to index
    %c0 = arith.constant 0 : index
    %c0_1 = arith.constant 0 : index
    %4 = vector.load %arg20[%3, %c0, %c0_1] : memref<4x2x1920xf32, #tpu.memory_space<vmem>>, vector<1x2x1920xf32>
    %5 = vector.shape_cast %4 : vector<1x2x1920xf32> to vector<2x1920xf32>
    %c0_2 = arith.constant 0 : index
    %c0_3 = arith.constant 0 : index
    %6 = vector.load %arg21[%c0_2, %c0_3] : memref<2x256xf32, #tpu.memory_space<vmem>>, vector<2x256xf32>
    %7 = arith.truncf %5 : vector<2x1920xf32> to vector<2x1920xbf16>
    %c0_4 = arith.constant 0 : index
    %c0_5 = arith.constant 0 : index
    %8 = vector.load %arg15[%c0_4, %c0_5] : memref<1920x256xbf16, #tpu.memory_space<vmem>>, vector<1920x256xbf16>
    %cst = arith.constant dense<0.000000e+00> : vector<2x256xf32>
    %9 = tpu.matmul %7, %8, %cst {dimension_numbers = #tpu.dot_dimension_numbers<[1], [0], [0], [1], [0, 0, 1, 1], [], []>} : vector<2x1920xbf16>, vector<1920x256xbf16>, vector<2x256xf32> -> vector<2x256xf32>
    %10 = arith.addf %6, %9 : vector<2x256xf32>
    %c0_6 = arith.constant 0 : index
    %c0_7 = arith.constant 0 : index
    %11 = vector.load %arg21[%c0_6, %c0_7] : memref<2x256xf32, #tpu.memory_space<vmem>>, vector<2x256xf32>
    tpu.vector_store %arg21[%c0_6, %c0_7], %10 {strides = array<i32>} : memref<2x256xf32, #tpu.memory_space<vmem>>, vector<2x256xf32>,
    %c3_i32 = arith.constant 3 : i32
    %12 = arith.cmpi eq, %arg0, %c3_i32 : i32
    %13 = arith.extui %12 : i1 to i32
    %c0_i32_8 = arith.constant 0 : i32
    %14 = arith.cmpi ne, %13, %c0_i32_8 : i32
    scf.if %14 {
      %c0_9 = arith.constant 0 : index
      %c0_10 = arith.constant 0 : index
      %15 = vector.load %arg21[%c0_9, %c0_10] : memref<2x256xf32, #tpu.memory_space<vmem>>, vector<2x256xf32>
      %c0_11 = arith.constant 0 : index
      %c0_12 = arith.constant 0 : index
      %16 = vector.load %arg16[%c0_11, %c0_12] : memref<1x256xf32, #tpu.memory_space<vmem>>, vector<1x256xf32>
      %17 = vector.broadcast %16 : vector<1x256xf32> to vector<2x256xf32>
      %18 = arith.addf %15, %17 : vector<2x256xf32>
      %cst_13 = arith.constant 0.000000e+00 : f32
      %19 = vector.broadcast %cst_13 : f32 to vector<2x256xf32>
      %20 = arith.maximumf %18, %19 : vector<2x256xf32>
      %c0_14 = arith.constant 0 : index
      %c0_15 = arith.constant 0 : index
      %21 = vector.load %arg17[%c0_14, %c0_15] : memref<256x128xf32, #tpu.memory_space<vmem>>, vector<256x128xf32>
      %cst_16 = arith.constant dense<0.000000e+00> : vector<2x128xf32>
      %22 = tpu.matmul %20, %21, %cst_16 {dimension_numbers = #tpu.dot_dimension_numbers<[1], [0], [0], [1], [0, 0, 1, 1], [], []>} : vector<2x256xf32>, vector<256x128xf32>, vector<2x128xf32> -> vector<2x128xf32>
      %c0_17 = arith.constant 0 : index
      %c0_18 = arith.constant 0 : index
      %23 = vector.load %arg18[%c0_17, %c0_18] : memref<1x128xf32, #tpu.memory_space<vmem>>, vector<1x128xf32>
      %24 = vector.broadcast %23 : vector<1x128xf32> to vector<2x128xf32>
      %25 = arith.addf %22, %24 : vector<2x128xf32>
      %c0_19 = arith.constant 0 : index
      %c0_20 = arith.constant 0 : index
      %26 = vector.load %arg19[%c0_19, %c0_20] : memref<2x128xf32, #tpu.memory_space<vmem>>, vector<2x128xf32>
      tpu.vector_store %arg19[%c0_19, %c0_20], %25 {strides = array<i32>} : memref<2x128xf32, #tpu.memory_space<vmem>>, vector<2x128xf32>,
    } else {
    }
    return
  }
  func.func @transform_0(%arg0: i32) -> (i32, i32) {
    %c0_i32 = arith.constant 0 : i32
    %c0_i32_0 = arith.constant 0 : i32
    %c0_i32_1 = arith.constant 0 : i32
    return %c0_i32, %c0_i32_0 : i32, i32
  }
  func.func @transform_1(%arg0: i32) -> (i32, i32) {
    %c0_i32 = arith.constant 0 : i32
    %c0_i32_0 = arith.constant 0 : i32
    %c0_i32_1 = arith.constant 0 : i32
    return %c0_i32, %c0_i32_0 : i32, i32
  }
  func.func @transform_2(%arg0: i32) -> (i32, i32) {
    %c0_i32 = arith.constant 0 : i32
    %c0_i32_0 = arith.constant 0 : i32
    %c0_i32_1 = arith.constant 0 : i32
    return %c0_i32, %c0_i32_0 : i32, i32
  }
  func.func @transform_3(%arg0: i32) -> (i32, i32) {
    %c0_i32 = arith.constant 0 : i32
    %c0_i32_0 = arith.constant 0 : i32
    %c0_i32_1 = arith.constant 0 : i32
    return %c0_i32, %c0_i32_0 : i32, i32
  }
  func.func @transform_4(%arg0: i32) -> (i32, i32) {
    %c0_i32 = arith.constant 0 : i32
    %c0_i32_0 = arith.constant 0 : i32
    %c0_i32_1 = arith.constant 0 : i32
    return %c0_i32, %c0_i32_0 : i32, i32
  }
  func.func @transform_5(%arg0: i32) -> (i32, i32) {
    %c0_i32 = arith.constant 0 : i32
    %c0_i32_0 = arith.constant 0 : i32
    %c0_i32_1 = arith.constant 0 : i32
    return %c0_i32, %c0_i32_0 : i32, i32
  }
  func.func @transform_6(%arg0: i32) -> (i32, i32) {
    %c0_i32 = arith.constant 0 : i32
    %c0_i32_0 = arith.constant 0 : i32
    %c0_i32_1 = arith.constant 0 : i32
    return %c0_i32, %c0_i32_0 : i32, i32
  }
  func.func @transform_7(%arg0: i32) -> (i32, i32) {
    %c0_i32 = arith.constant 0 : i32
    %c0_i32_0 = arith.constant 0 : i32
    %c0_i32_1 = arith.constant 0 : i32
    return %c0_i32, %c0_i32_0 : i32, i32
  }
  func.func @transform_8(%arg0: i32) -> (i32, i32) {
    %c0_i32 = arith.constant 0 : i32
    %c0_i32_0 = arith.constant 0 : i32
    %c0_i32_1 = arith.constant 0 : i32
    return %c0_i32, %c0_i32_0 : i32, i32
  }
  func.func @transform_9(%arg0: i32) -> (i32, i32) {
    %c0_i32 = arith.constant 0 : i32
    %c0_i32_0 = arith.constant 0 : i32
    %c0_i32_1 = arith.constant 0 : i32
    return %c0_i32, %c0_i32_0 : i32, i32
  }
  func.func @transform_10(%arg0: i32) -> (i32, i32) {
    %c0_i32 = arith.constant 0 : i32
    %c0_i32_0 = arith.constant 0 : i32
    %c0_i32_1 = arith.constant 0 : i32
    return %c0_i32, %c0_i32_0 : i32, i32
  }
  func.func @transform_11(%arg0: i32) -> (i32, i32) {
    %c0_i32 = arith.constant 0 : i32
    %c0_i32_0 = arith.constant 0 : i32
    %c0_i32_1 = arith.constant 0 : i32
    return %c0_i32, %c0_i32_0 : i32, i32
  }
  func.func @transform_12(%arg0: i32) -> (i32, i32) {
    %c0_i32 = arith.constant 0 : i32
    %c0_i32_0 = arith.constant 0 : i32
    %c0_i32_1 = arith.constant 0 : i32
    return %c0_i32, %c0_i32_0 : i32, i32
  }
  func.func @transform_13(%arg0: i32) -> (i32, i32) {
    %c0_i32 = arith.constant 0 : i32
    %c0_i32_0 = arith.constant 0 : i32
    %c0_i32_1 = arith.constant 0 : i32
    return %c0_i32, %c0_i32_0 : i32, i32
  }
  func.func @transform_14(%arg0: i32) -> (i32, i32) {
    %c0_i32 = arith.constant 0 : i32
    %c0_i32_0 = arith.constant 0 : i32
    return %arg0, %c0_i32 : i32, i32
  }
  func.func @transform_15(%arg0: i32) -> (i32, i32) {
    %c0_i32 = arith.constant 0 : i32
    %c0_i32_0 = arith.constant 0 : i32
    %c0_i32_1 = arith.constant 0 : i32
    return %c0_i32, %c0_i32_0 : i32, i32
  }
  func.func @transform_16(%arg0: i32) -> (i32, i32) {
    %c0_i32 = arith.constant 0 : i32
    %c0_i32_0 = arith.constant 0 : i32
    %c0_i32_1 = arith.constant 0 : i32
    return %c0_i32, %c0_i32_0 : i32, i32
  }
  func.func @transform_17(%arg0: i32) -> (i32, i32) {
    %c0_i32 = arith.constant 0 : i32
    %c0_i32_0 = arith.constant 0 : i32
    %c0_i32_1 = arith.constant 0 : i32
    return %c0_i32, %c0_i32_0 : i32, i32
  }
  func.func @transform_18(%arg0: i32) -> (i32, i32) {
    %c0_i32 = arith.constant 0 : i32
    %c0_i32_0 = arith.constant 0 : i32
    %c0_i32_1 = arith.constant 0 : i32
    return %c0_i32, %c0_i32_0 : i32, i32
  }
}

</mosaic_0001>

<llo_original>
// kernel: tpu_custom_call.1
$region0: #{tpu_custom_call.1}
  #allocation0 [shape = 'u32[]', space=smem, size = 0x4, offset = 0x4, fixed_abs, tag = 'smem constant byte address 0x4 - core index']
  #allocation1 [shape = 'u32[72,128]{1,0:T(1,128)}', space=vmem, size = 0x9000, scoped, tag = 'internal scratch']
  #allocation2 [shape = 'f32[4,2,1920]{2,1,0:T(2,128)}', space=vmem, size = 0xf000, scoped, tag = 'scratch operand']
  #allocation3 [shape = 'f32[2,256]{1,0:T(2,128)}', space=vmem, size = 0x800, scoped, tag = 'scratch operand']
  %s0 = inlined_call_operand.hbm [shape: f32[24,28], index: 0, kind: input, shape index: {}]
  %s1 = inlined_call_operand.hbm [shape: f32[24,28], index: 1, kind: input, shape index: {}]
  %s2 = inlined_call_operand.hbm [shape: f32[28,128], index: 2, kind: input, shape index: {}]
  %s3 = inlined_call_operand.hbm [shape: f32[1,128], index: 3, kind: input, shape index: {}]
  %s4 = inlined_call_operand.hbm [shape: f32[28,128], index: 4, kind: input, shape index: {}]
  %s5 = inlined_call_operand.hbm [shape: f32[1,128], index: 5, kind: input, shape index: {}]
  %s6 = inlined_call_operand.hbm [shape: f32[256,128], index: 6, kind: input, shape index: {}]
  %s7 = inlined_call_operand.hbm [shape: f32[1,128], index: 7, kind: input, shape index: {}]
  %s8 = inlined_call_operand.hbm [shape: f32[256,128], index: 8, kind: input, shape index: {}]
  %s9 = inlined_call_operand.hbm [shape: f32[1,128], index: 9, kind: input, shape index: {}]
  %s10 = inlined_call_operand.hbm [shape: f32[256,128], index: 10, kind: input, shape index: {}]
  %s11 = inlined_call_operand.hbm [shape: f32[1,128], index: 11, kind: input, shape index: {}]
  %s12 = inlined_call_operand.hbm [shape: f32[256,128], index: 12, kind: input, shape index: {}]
  %s13 = inlined_call_operand.hbm [shape: f32[1,128], index: 13, kind: input, shape index: {}]
  %s14 = inlined_call_operand.hbm [shape: bf16[7680,256], index: 14, kind: input, shape index: {}]
  %s15 = inlined_call_operand.hbm [shape: f32[1,256], index: 15, kind: input, shape index: {}]
  %s16 = inlined_call_operand.hbm [shape: f32[256,128], index: 16, kind: input, shape index: {}]
  %s17 = inlined_call_operand.hbm [shape: f32[1,128], index: 17, kind: input, shape index: {}]
  %s18 = inlined_call_operand.hbm [shape: f32[2,128], index: 18, kind: output, shape index: {}]
  %s19 = sld [smem:[#allocation0]]
  $region185: #{tpu_custom_call.1} parent=0
    _
  %s21 = ssub.s32 1, %s19
  %s22 = scalar_select 0, %s21, %s19
  $region1: #{tpu_custom_call.1} parent=0
    #allocation4 [shape = 'u8[12288]{0}', space=vmem, size = 0x3000, scoped, tag = 'input window, operand 0, single buffered']
    #allocation5 [shape = 's32[2]{0}', space=sflag, size = 0x8, scoped, tag = 'scoped memory for tpu_custom_call.1']
    #allocation6 [shape = 's32[2]{0}', space=sflag, size = 0x8, scoped, tag = 'scoped memory for tpu_custom_call.1']
    #allocation7 [shape = 'u8[12288]{0}', space=vmem, size = 0x3000, scoped, tag = 'input window, operand 1, single buffered']
    #allocation8 [shape = 's32[1]{0}', space=sflag, size = 0x4, scoped, tag = 'scoped memory for tpu_custom_call.1']
    #allocation9 [shape = 'u8[16384]{0}', space=vmem, size = 0x4000, scoped, tag = 'input window, operand 2, single buffered']
    #allocation10 [shape = 'u8[512]{0}', space=vmem, size = 0x400, scoped, tag = 'input window, operand 3, single buffered']
    #allocation11 [shape = 's32[1]{0}', space=sflag, size = 0x4, scoped, tag = 'scoped memory for tpu_custom_call.1']
    #allocation12 [shape = 'u8[16384]{0}', space=vmem, size = 0x4000, scoped, tag = 'input window, operand 4, single buffered']
    #allocation13 [shape = 'u8[512]{0}', space=vmem, size = 0x400, scoped, tag = 'input window, operand 5, single buffered']
    #allocation14 [shape = 's32[1]{0}', space=sflag, size = 0x4, scoped, tag = 'scoped memory for tpu_custom_call.1']
    #allocation15 [shape = 'u8[131072]{0}', space=vmem, size = 0x20000, scoped, tag = 'input window, operand 6, single buffered']
    #allocation16 [shape = 'u8[512]{0}', space=vmem, size = 0x400, scoped, tag = 'input window, operand 7, single buffered']
    #allocation17 [shape = 's32[1]{0}', space=sflag, size = 0x4, scoped, tag = 'scoped memory for tpu_custom_call.1']
    #allocation18 [shape = 'u8[131072]{0}', space=vmem, size = 0x20000, scoped, tag = 'input window, operand 8, single buffered']
    #allocation19 [shape = 'u8[512]{0}', space=vmem, size = 0x400, scoped, tag = 'input window, operand 9, single buffered']
    #allocation20 [shape = 's32[1]{0}', space=sflag, size = 0x4, scoped, tag = 'scoped memory for tpu_custom_call.1']
    #allocation21 [shape = 'u8[131072]{0}', space=vmem, size = 0x20000, scoped, tag = 'input window, operand 10, single buffered']
    #allocation22 [shape = 'u8[512]{0}', space=vmem, size = 0x400, scoped, tag = 'input window, operand 11, single buffered']
    #allocation23 [shape = 's32[1]{0}', space=sflag, size = 0x4, scoped, tag = 'scoped memory for tpu_custom_call.1']
    #allocation24 [shape = 'u8[131072]{0}', space=vmem, size = 0x20000, scoped, tag = 'input window, operand 12, single buffered']
    #allocation25 [shape = 'u8[512]{0}', space=vmem, size = 0x400, scoped, tag = 'input window, operand 13, single buffered']
    #allocation26 [shape = 's32[1]{0}', space=sflag, size = 0x4, scoped, tag = 'scoped memory for tpu_custom_call.1']
    #allocation27 [shape = 'u8[1966080]{0}', space=vmem, size = 0x1e0000, scoped, tag = 'input window, operand 14']
    #allocation28 [shape = 'u8[1024]{0}', space=vmem, size = 0x400, scoped, tag = 'input window, operand 15, single buffered']
    #allocation29 [shape = 'u8[131072]{0}', space=vmem, size = 0x20000, scoped, tag = 'input window, operand 16, single buffered']
    #allocation30 [shape = 'u8[512]{0}', space=vmem, size = 0x400, scoped, tag = 'input window, operand 17, single buffered']
    #allocation31 [shape = 'u8[1024]{0}', space=vmem, size = 0x400, scoped, tag = 'output window, operand 0, single buffered']
    %23 = vsyncpa [#allocation5], 0
    %24 = vsyncpa [#allocation8], 0
    %25 = vsyncpa [#allocation11], 0
    %26 = vsyncpa [#allocation14], 0
    %27 = vsyncpa [#allocation17], 0
    %28 = vsyncpa [#allocation20], 0
    %29 = vsyncpa [#allocation23], 0
    %30 = vsyncpa [#allocation26], 0
    %31 = vsyncpa [#allocation6], 0
    loop: start=0, step=1, limit=6
    $region2: #{tpu_custom_call.1} parent=1 // loop_pre_header
      _
    $region3: #{tpu_custom_call.1} parent=1 // loop_header
      %s33 = sphi 0, %s37
      %p34 = scmp.ge.s32.totalorder %s33, 6
      %s41 = sphi 0, %s41
      %s43 = sphi 0, %s41
      %s44 = sphi 0, %s43
      %s58 = sphi 0, %s44
      %s62 = sphi 0, %s62
      %s64 = sphi 0, %s62
      %s65 = sphi 0, %s64
      %s79 = sphi 0, %s65
      %s83 = sphi 0, %s83
      %s85 = sphi 0, %s83
      %s86 = sphi 0, %s85
      %s100 = sphi 0, %s86
      %s104 = sphi 0, %s104
      %s106 = sphi 0, %s104
      %s107 = sphi 0, %s106
      %s121 = sphi 0, %s107
      %s125 = sphi 0, %s125
      %s127 = sphi 0, %s125
      %s128 = sphi 0, %s127
      %s142 = sphi 0, %s128
      %s146 = sphi 0, %s146
      %s148 = sphi 0, %s146
      %s149 = sphi 0, %s148
      %s163 = sphi 0, %s149
      %s167 = sphi 0, %s167
      %s169 = sphi 0, %s167
      %s170 = sphi 0, %s169
      %s184 = sphi 0, %s170
      %s188 = sphi 0, %s188
      %s190 = sphi 0, %s188
      %s191 = sphi 0, %s190
      %s205 = sphi 0, %s191
      %s209 = sphi 0, %s209
      %s211 = sphi 0, %s209
      %s212 = sphi 0, %s211
      %s226 = sphi 0, %s212
      %s230 = sphi 0, %s230
      %s232 = sphi 0, %s230
      %s233 = sphi 0, %s232
      %s247 = sphi 0, %s233
      %s251 = sphi 0, %s251
      %s253 = sphi 0, %s251
      %s254 = sphi 0, %s253
      %s268 = sphi 0, %s254
      %s272 = sphi 0, %s272
      %s274 = sphi 0, %s272
      %s275 = sphi 0, %s274
      %s289 = sphi 0, %s275
      %s293 = sphi 0, %s293
      %s295 = sphi 0, %s293
      %s296 = sphi 0, %s295
      %s310 = sphi 0, %s296
      %s314 = sphi 0, %s314
      %s316 = sphi 0, %s314
      %s317 = sphi 0, %s316
      %s331 = sphi 0, %s317
      %s337 = sphi 0, %s339
      %s340 = sphi 0, %s337
      %s341 = sphi 0, %s340
      %s357 = sphi 0, %s341
      %s361 = sphi 0, %s361
      %s363 = sphi 0, %s361
      %s364 = sphi 0, %s363
      %s378 = sphi 0, %s364
      %s382 = sphi 0, %s382
      %s384 = sphi 0, %s382
      %s385 = sphi 0, %s384
      %s399 = sphi 0, %s385
      %s403 = sphi 0, %s403
      %s405 = sphi 0, %s403
      %s406 = sphi 0, %s405
      %s420 = sphi 0, %s406
      %s424 = sphi 0, %s424
      %s426 = sphi 0, %s424
      %s427 = sphi 0, %s426
      %s441 = sphi 0, %s427
    $region4: #{tpu_custom_call.1} parent=1 // loop_header_branch
      %36 = sbr.rel (%p34) target = $region8
    $region5: #{tpu_custom_call.1} parent=1 // loop_body
      %s38 = ssub.s32 %s33, 1
      %s39 = ssub.s32 %s33, 2
      %s40 = sadd.s32 %s33, 1
      %s42 = sadd.s32 %s41, 1
      %p45 = scmp.eq.s32.totalorder %s33, 3
      %p46 = scmp.ne.s32.totalorder %s41, %s43
      %p47 = scmp.eq.s32.totalorder %s33, 0
      %p48 = por %p46, %p47
      %p49 = scmp.ne.s32.totalorder %s41, %s43
      %p50 = scmp.eq.s32.totalorder %s38, 3
      %p51 = por %p49, %p50
      %p52 = scmp.ne.s32.totalorder %s43, %s44
      %p53 = scmp.eq.s32.totalorder %s38, 0
      %p54 = por %p52, %p53
      %p55 = scmp.ne.s32.totalorder %s43, %s44
      %p56 = scmp.eq.s32.totalorder %s39, 3
      %p57 = por %p55, %p56
      %p59 = scmp.ne.s32.totalorder %s44, %s58
      %p60 = scmp.eq.s32.totalorder %s39, 0
      %p61 = por %p59, %p60
      %s63 = sadd.s32 %s62, 1
      %p66 = scmp.eq.s32.totalorder %s33, 3
      %p67 = scmp.ne.s32.totalorder %s62, %s64
      %p68 = scmp.eq.s32.totalorder %s33, 0
      %p69 = por %p67, %p68
      %p70 = scmp.ne.s32.totalorder %s62, %s64
      %p71 = scmp.eq.s32.totalorder %s38, 3
      %p72 = por %p70, %p71
      %p73 = scmp.ne.s32.totalorder %s64, %s65
      %p74 = scmp.eq.s32.totalorder %s38, 0
      %p75 = por %p73, %p74
      %p76 = scmp.ne.s32.totalorder %s64, %s65
      %p77 = scmp.eq.s32.totalorder %s39, 3
      %p78 = por %p76, %p77
      %p80 = scmp.ne.s32.totalorder %s65, %s79
      %p81 = scmp.eq.s32.totalorder %s39, 0
      %p82 = por %p80, %p81
      %s84 = sadd.s32 %s83, 1
      %p87 = scmp.eq.s32.totalorder %s33, 3
      %p88 = scmp.ne.s32.totalorder %s83, %s85
      %p89 = scmp.eq.s32.totalorder %s33, 0
      %p90 = por %p88, %p89
      %p91 = scmp.ne.s32.totalorder %s83, %s85
      %p92 = scmp.eq.s32.totalorder %s38, 3
      %p93 = por %p91, %p92
      %p94 = scmp.ne.s32.totalorder %s85, %s86
      %p95 = scmp.eq.s32.totalorder %s38, 0
      %p96 = por %p94, %p95
      %p97 = scmp.ne.s32.totalorder %s85, %s86
      %p98 = scmp.eq.s32.totalorder %s39, 3
      %p99 = por %p97, %p98
      %p101 = scmp.ne.s32.totalorder %s86, %s100
      %p102 = scmp.eq.s32.totalorder %s39, 0
      %p103 = por %p101, %p102
      %s105 = sadd.s32 %s104, 1
      %p108 = scmp.eq.s32.totalorder %s33, 3
      %p109 = scmp.ne.s32.totalorder %s104, %s106
      %p110 = scmp.eq.s32.totalorder %s33, 0
      %p111 = por %p109, %p110
      %p112 = scmp.ne.s32.totalorder %s104, %s106
      %p113 = scmp.eq.s32.totalorder %s38, 3
      %p114 = por %p112, %p113
      %p115 = scmp.ne.s32.totalorder %s106, %s107
      %p116 = scmp.eq.s32.totalorder %s38, 0
      %p117 = por %p115, %p116
      %p118 = scmp.ne.s32.totalorder %s106, %s107
      %p119 = scmp.eq.s32.totalorder %s39, 3
      %p120 = por %p118, %p119
      %p122 = scmp.ne.s32.totalorder %s107, %s121
      %p123 = scmp.eq.s32.totalorder %s39, 0
      %p124 = por %p122, %p123
      %s126 = sadd.s32 %s125, 1
      %p129 = scmp.eq.s32.totalorder %s33, 3
      %p130 = scmp.ne.s32.totalorder %s125, %s127
      %p131 = scmp.eq.s32.totalorder %s33, 0
      %p132 = por %p130, %p131
      %p133 = scmp.ne.s32.totalorder %s125, %s127
      %p134 = scmp.eq.s32.totalorder %s38, 3
      %p135 = por %p133, %p134
      %p136 = scmp.ne.s32.totalorder %s127, %s128
      %p137 = scmp.eq.s32.totalorder %s38, 0
      %p138 = por %p136, %p137
      %p139 = scmp.ne.s32.totalorder %s127, %s128
      %p140 = scmp.eq.s32.totalorder %s39, 3
      %p141 = por %p139, %p140
      %p143 = scmp.ne.s32.totalorder %s128, %s142
      %p144 = scmp.eq.s32.totalorder %s39, 0
      %p145 = por %p143, %p144
      %s147 = sadd.s32 %s146, 1
      %p150 = scmp.eq.s32.totalorder %s33, 3
      %p151 = scmp.ne.s32.totalorder %s146, %s148
      %p152 = scmp.eq.s32.totalorder %s33, 0
      %p153 = por %p151, %p152
      %p154 = scmp.ne.s32.totalorder %s146, %s148
      %p155 = scmp.eq.s32.totalorder %s38, 3
      %p156 = por %p154, %p155
      %p157 = scmp.ne.s32.totalorder %s148, %s149
      %p158 = scmp.eq.s32.totalorder %s38, 0
      %p159 = por %p157, %p158
      %p160 = scmp.ne.s32.totalorder %s148, %s149
      %p161 = scmp.eq.s32.totalorder %s39, 3
      %p162 = por %p160, %p161
      %p164 = scmp.ne.s32.totalorder %s149, %s163
      %p165 = scmp.eq.s32.totalorder %s39, 0
      %p166 = por %p164, %p165
      %s168 = sadd.s32 %s167, 1
      %p171 = scmp.eq.s32.totalorder %s33, 3
      %p172 = scmp.ne.s32.totalorder %s167, %s169
      %p173 = scmp.eq.s32.totalorder %s33, 0
      %p174 = por %p172, %p173
      %p175 = scmp.ne.s32.totalorder %s167, %s169
      %p176 = scmp.eq.s32.totalorder %s38, 3
      %p177 = por %p175, %p176
      %p178 = scmp.ne.s32.totalorder %s169, %s170
      %p179 = scmp.eq.s32.totalorder %s38, 0
      %p180 = por %p178, %p179
      %p181 = scmp.ne.s32.totalorder %s169, %s170
      %p182 = scmp.eq.s32.totalorder %s39, 3
      %p183 = por %p181, %p182
      %p185 = scmp.ne.s32.totalorder %s170, %s184
      %p186 = scmp.eq.s32.totalorder %s39, 0
      %p187 = por %p185, %p186
      %s189 = sadd.s32 %s188, 1
      %p192 = scmp.eq.s32.totalorder %s33, 3
      %p193 = scmp.ne.s32.totalorder %s188, %s190
      %p194 = scmp.eq.s32.totalorder %s33, 0
      %p195 = por %p193, %p194
      %p196 = scmp.ne.s32.totalorder %s188, %s190
      %p197 = scmp.eq.s32.totalorder %s38, 3
      %p198 = por %p196, %p197
      %p199 = scmp.ne.s32.totalorder %s190, %s191
      %p200 = scmp.eq.s32.totalorder %s38, 0
      %p201 = por %p199, %p200
      %p202 = scmp.ne.s32.totalorder %s190, %s191
      %p203 = scmp.eq.s32.totalorder %s39, 3
      %p204 = por %p202, %p203
      %p206 = scmp.ne.s32.totalorder %s191, %s205
      %p207 = scmp.eq.s32.totalorder %s39, 0
      %p208 = por %p206, %p207
      %s210 = sadd.s32 %s209, 1
      %p213 = scmp.eq.s32.totalorder %s33, 3
      %p214 = scmp.ne.s32.totalorder %s209, %s211
      %p215 = scmp.eq.s32.totalorder %s33, 0
      %p216 = por %p214, %p215
      %p217 = scmp.ne.s32.totalorder %s209, %s211
      %p218 = scmp.eq.s32.totalorder %s38, 3
      %p219 = por %p217, %p218
      %p220 = scmp.ne.s32.totalorder %s211, %s212
      %p221 = scmp.eq.s32.totalorder %s38, 0
      %p222 = por %p220, %p221
      %p223 = scmp.ne.s32.totalorder %s211, %s212
      %p224 = scmp.eq.s32.totalorder %s39, 3
      %p225 = por %p223, %p224
      %p227 = scmp.ne.s32.totalorder %s212, %s226
      %p228 = scmp.eq.s32.totalorder %s39, 0
      %p229 = por %p227, %p228
      %s231 = sadd.s32 %s230, 1
      %p234 = scmp.eq.s32.totalorder %s33, 3
      %p235 = scmp.ne.s32.totalorder %s230, %s232
      %p236 = scmp.eq.s32.totalorder %s33, 0
      %p237 = por %p235, %p236
      %p238 = scmp.ne.s32.totalorder %s230, %s232
      %p239 = scmp.eq.s32.totalorder %s38, 3
      %p240 = por %p238, %p239
      %p241 = scmp.ne.s32.totalorder %s232, %s233
      %p242 = scmp.eq.s32.totalorder %s38, 0
      %p243 = por %p241, %p242
      %p244 = scmp.ne.s32.totalorder %s232, %s233
      %p245 = scmp.eq.s32.totalorder %s39, 3
      %p246 = por %p244, %p245
      %p248 = scmp.ne.s32.totalorder %s233, %s247
      %p249 = scmp.eq.s32.totalorder %s39, 0
      %p250 = por %p248, %p249
      %s252 = sadd.s32 %s251, 1
      %p255 = scmp.eq.s32.totalorder %s33, 3
      %p256 = scmp.ne.s32.totalorder %s251, %s253
      %p257 = scmp.eq.s32.totalorder %s33, 0
      %p258 = por %p256, %p257
      %p259 = scmp.ne.s32.totalorder %s251, %s253
      %p260 = scmp.eq.s32.totalorder %s38, 3
      %p261 = por %p259, %p260
      %p262 = scmp.ne.s32.totalorder %s253, %s254
      %p263 = scmp.eq.s32.totalorder %s38, 0
      %p264 = por %p262, %p263
      %p265 = scmp.ne.s32.totalorder %s253, %s254
      %p266 = scmp.eq.s32.totalorder %s39, 3
      %p267 = por %p265, %p266
      %p269 = scmp.ne.s32.totalorder %s254, %s268
      %p270 = scmp.eq.s32.totalorder %s39, 0
      %p271 = por %p269, %p270
      %s273 = sadd.s32 %s272, 1
      %p276 = scmp.eq.s32.totalorder %s33, 3
      %p277 = scmp.ne.s32.totalorder %s272, %s274
      %p278 = scmp.eq.s32.totalorder %s33, 0
      %p279 = por %p277, %p278
      %p280 = scmp.ne.s32.totalorder %s272, %s274
      %p281 = scmp.eq.s32.totalorder %s38, 3
      %p282 = por %p280, %p281
      %p283 = scmp.ne.s32.totalorder %s274, %s275
      %p284 = scmp.eq.s32.totalorder %s38, 0
      %p285 = por %p283, %p284
      %p286 = scmp.ne.s32.totalorder %s274, %s275
      %p287 = scmp.eq.s32.totalorder %s39, 3
      %p288 = por %p286, %p287
      %p290 = scmp.ne.s32.totalorder %s275, %s289
      %p291 = scmp.eq.s32.totalorder %s39, 0
      %p292 = por %p290, %p291
      %s294 = sadd.s32 %s293, 1
      %p297 = scmp.eq.s32.totalorder %s33, 3
      %p298 = scmp.ne.s32.totalorder %s293, %s295
      %p299 = scmp.eq.s32.totalorder %s33, 0
      %p300 = por %p298, %p299
      %p301 = scmp.ne.s32.totalorder %s293, %s295
      %p302 = scmp.eq.s32.totalorder %s38, 3
      %p303 = por %p301, %p302
      %p304 = scmp.ne.s32.totalorder %s295, %s296
      %p305 = scmp.eq.s32.totalorder %s38, 0
      %p306 = por %p304, %p305
      %p307 = scmp.ne.s32.totalorder %s295, %s296
      %p308 = scmp.eq.s32.totalorder %s39, 3
      %p309 = por %p307, %p308
      %p311 = scmp.ne.s32.totalorder %s296, %s310
      %p312 = scmp.eq.s32.totalorder %s39, 0
      %p313 = por %p311, %p312
      %s315 = sadd.s32 %s314, 1
      %p318 = scmp.eq.s32.totalorder %s33, 3
      %p319 = scmp.ne.s32.totalorder %s314, %s316
      %p320 = scmp.eq.s32.totalorder %s33, 0
      %p321 = por %p319, %p320
      %p322 = scmp.ne.s32.totalorder %s314, %s316
      %p323 = scmp.eq.s32.totalorder %s38, 3
      %p324 = por %p322, %p323
      %p325 = scmp.ne.s32.totalorder %s316, %s317
      %p326 = scmp.eq.s32.totalorder %s38, 0
      %p327 = por %p325, %p326
      %p328 = scmp.ne.s32.totalorder %s316, %s317
      %p329 = scmp.eq.s32.totalorder %s39, 3
      %p330 = por %p328, %p329
      %p332 = scmp.ne.s32.totalorder %s317, %s331
      %p333 = scmp.eq.s32.totalorder %s39, 0
      %p334 = por %p332, %p333
      %s335 = ssub.s32 %s33, %s40
      %p336 = scmp.eq.s32.totalorder %s335, 0
      %s338 = sadd.s32 %s337, 1
      %s339 = scalar_select %p336, %s337, %s338
      %p342 = pneg %p336
      %p343 = scmp.eq.s32.totalorder %s33, 3
      %p344 = por %p342, %p343
      %p345 = scmp.ne.s32.totalorder %s337, %s340
      %p346 = scmp.eq.s32.totalorder %s33, 0
      %p347 = por %p345, %p346
      %p348 = scmp.ne.s32.totalorder %s337, %s340
      %p349 = scmp.eq.s32.totalorder %s38, 3
      %p350 = por %p348, %p349
      %p351 = scmp.ne.s32.totalorder %s340, %s341
      %p352 = scmp.eq.s32.totalorder %s38, 0
      %p353 = por %p351, %p352
      %p354 = scmp.ne.s32.totalorder %s340, %s341
      %p355 = scmp.eq.s32.totalorder %s39, 3
      %p356 = por %p354, %p355
      %p358 = scmp.ne.s32.totalorder %s341, %s357
      %p359 = scmp.eq.s32.totalorder %s39, 0
      %p360 = por %p358, %p359
      %s362 = sadd.s32 %s361, 1
      %p365 = scmp.eq.s32.totalorder %s33, 3
      %p366 = scmp.ne.s32.totalorder %s361, %s363
      %p367 = scmp.eq.s32.totalorder %s33, 0
      %p368 = por %p366, %p367
      %p369 = scmp.ne.s32.totalorder %s361, %s363
      %p370 = scmp.eq.s32.totalorder %s38, 3
      %p371 = por %p369, %p370
      %p372 = scmp.ne.s32.totalorder %s363, %s364
      %p373 = scmp.eq.s32.totalorder %s38, 0
      %p374 = por %p372, %p373
      %p375 = scmp.ne.s32.totalorder %s363, %s364
      %p376 = scmp.eq.s32.totalorder %s39, 3
      %p377 = por %p375, %p376
      %p379 = scmp.ne.s32.totalorder %s364, %s378
      %p380 = scmp.eq.s32.totalorder %s39, 0
      %p381 = por %p379, %p380
      %s383 = sadd.s32 %s382, 1
      %p386 = scmp.eq.s32.totalorder %s33, 3
      %p387 = scmp.ne.s32.totalorder %s382, %s384
      %p388 = scmp.eq.s32.totalorder %s33, 0
      %p389 = por %p387, %p388
      %p390 = scmp.ne.s32.totalorder %s382, %s384
      %p391 = scmp.eq.s32.totalorder %s38, 3
      %p392 = por %p390, %p391
      %p393 = scmp.ne.s32.totalorder %s384, %s385
      %p394 = scmp.eq.s32.totalorder %s38, 0
      %p395 = por %p393, %p394
      %p396 = scmp.ne.s32.totalorder %s384, %s385
      %p397 = scmp.eq.s32.totalorder %s39, 3
      %p398 = por %p396, %p397
      %p400 = scmp.ne.s32.totalorder %s385, %s399
      %p401 = scmp.eq.s32.totalorder %s39, 0
      %p402 = por %p400, %p401
      %s404 = sadd.s32 %s403, 1
      %p407 = scmp.eq.s32.totalorder %s33, 3
      %p408 = scmp.ne.s32.totalorder %s403, %s405
      %p409 = scmp.eq.s32.totalorder %s33, 0
      %p410 = por %p408, %p409
      %p411 = scmp.ne.s32.totalorder %s403, %s405
      %p412 = scmp.eq.s32.totalorder %s38, 3
      %p413 = por %p411, %p412
      %p414 = scmp.ne.s32.totalorder %s405, %s406
      %p415 = scmp.eq.s32.totalorder %s38, 0
      %p416 = por %p414, %p415
      %p417 = scmp.ne.s32.totalorder %s405, %s406
      %p418 = scmp.eq.s32.totalorder %s39, 3
      %p419 = por %p417, %p418
      %p421 = scmp.ne.s32.totalorder %s406, %s420
      %p422 = scmp.eq.s32.totalorder %s39, 0
      %p423 = por %p421, %p422
      %s425 = sadd.s32 %s424, 1
      %p428 = scmp.eq.s32.totalorder %s33, 3
      %p429 = scmp.ne.s32.totalorder %s424, %s426
      %p430 = scmp.eq.s32.totalorder %s33, 0
      %p431 = por %p429, %p430
      %p432 = scmp.ne.s32.totalorder %s424, %s426
      %p433 = scmp.eq.s32.totalorder %s38, 3
      %p434 = por %p432, %p433
      %p435 = scmp.ne.s32.totalorder %s426, %s427
      %p436 = scmp.eq.s32.totalorder %s38, 0
      %p437 = por %p435, %p436
      %p438 = scmp.ne.s32.totalorder %s426, %s427
      %p439 = scmp.eq.s32.totalorder %s39, 3
      %p440 = por %p438, %p439
      %p442 = scmp.ne.s32.totalorder %s427, %s441
      %p443 = scmp.eq.s32.totalorder %s39, 0
      %p444 = por %p442, %p443
      %p445 = scmp.le.s32.totalorder 1, %s33
      %p446 = scmp.lt.s32.totalorder %s33, 5
      %p447 = pnand %p445, %p446
      %p448 = pneg %p447
      // Predicated region
      $region9: #{tpu_custom_call.1} parent=5 // pred_check
        _
      $region10: #{tpu_custom_call.1} parent=5 // pred_check_branch
        %450 = sbr.rel (%p447) target = $region12
      $region11: #{tpu_custom_call.1} parent=5 // pred_region
        %s451 = ssub.s32 %s33, 1
        // Predicated region
        $region13: #{tpu_custom_call.1} parent=11 // pred_check
          %p452 = pneg %p54
        $region14: #{tpu_custom_call.1} parent=11 // pred_check_branch
          %454 = sbr.rel (%p452) target = $region16
        $region15: #{tpu_custom_call.1} parent=11 // pred_region
          %456 = vsyncadd [#allocation5], 0
          %s457 = sshll.u32 %s0, 4
          %s458 = int_to_ptr.hbm [resolvable:$true] %s457
          %s459 = sshll.u32 [#allocation4], 4
          %s460 = int_to_ptr.vmem [resolvable:$true] %s459
          %465 = dma.hbm_to_vmem [thread:$0]  %s458, 384, %s460, [#allocation5], 128, 128, 8
        $region16: #{tpu_custom_call.1} parent=11 // pred_fallthru
          _
        // Predicated region
        $region17: #{tpu_custom_call.1} parent=11 // pred_check
          %p466 = pneg %p75
        $region18: #{tpu_custom_call.1} parent=11 // pred_check_branch
          %468 = sbr.rel (%p466) target = $region20
        $region19: #{tpu_custom_call.1} parent=11 // pred_region
          %470 = vsyncadd [#allocation8], 0
          %s471 = sshll.u32 %s1, 4
          %s472 = int_to_ptr.hbm [resolvable:$true] %s471
          %s473 = sshll.u32 [#allocation7], 4
          %s474 = int_to_ptr.vmem [resolvable:$true] %s473
          %479 = dma.hbm_to_vmem [thread:$0]  %s472, 384, %s474, [#allocation8], 128, 128, 8
        $region20: #{tpu_custom_call.1} parent=11 // pred_fallthru
          _
        // Predicated region
        $region21: #{tpu_custom_call.1} parent=11 // pred_check
          %p480 = pneg %p96
        $region22: #{tpu_custom_call.1} parent=11 // pred_check_branch
          %482 = sbr.rel (%p480) target = $region24
        $region23: #{tpu_custom_call.1} parent=11 // pred_region
          %484 = vsyncadd [#allocation8], 0
          %s485 = sshll.u32 %s2, 4
          %s486 = int_to_ptr.hbm [resolvable:$true] %s485
          %s487 = sshll.u32 [#allocation9], 4
          %s488 = int_to_ptr.vmem [resolvable:$true] %s487
          %493 = dma.hbm_to_vmem [thread:$0]  %s486, 512, %s488, [#allocation8], 128, 128, 8
        $region24: #{tpu_custom_call.1} parent=11 // pred_fallthru
          _
        // Predicated region
        $region25: #{tpu_custom_call.1} parent=11 // pred_check
          %p494 = pneg %p117
        $region26: #{tpu_custom_call.1} parent=11 // pred_check_branch
          %496 = sbr.rel (%p494) target = $region28
        $region27: #{tpu_custom_call.1} parent=11 // pred_region
          %498 = vsyncadd [#allocation11], 0
          %s500 = sshll.u32 %s3, 4
          %s501 = int_to_ptr.hbm [resolvable:$true] %s500
          %s502 = sshll.u32 [#allocation10], 4
          %s503 = int_to_ptr.vmem [resolvable:$true] %s502
          %505 = dma.hbm_to_vmem [thread:$0]  %s501, 16, %s503, [#allocation11]
        $region28: #{tpu_custom_call.1} parent=11 // pred_fallthru
          _
        // Predicated region
        $region29: #{tpu_custom_call.1} parent=11 // pred_check
          %p506 = pneg %p138
        $region30: #{tpu_custom_call.1} parent=11 // pred_check_branch
          %508 = sbr.rel (%p506) target = $region32
        $region31: #{tpu_custom_call.1} parent=11 // pred_region
          %510 = vsyncadd [#allocation11], 0
          %s511 = sshll.u32 %s4, 4
          %s512 = int_to_ptr.hbm [resolvable:$true] %s511
          %s513 = sshll.u32 [#allocation12], 4
          %s514 = int_to_ptr.vmem [resolvable:$true] %s513
          %519 = dma.hbm_to_vmem [thread:$0]  %s512, 512, %s514, [#allocation11], 128, 128, 8
        $region32: #{tpu_custom_call.1} parent=11 // pred_fallthru
          _
        // Predicated region
        $region33: #{tpu_custom_call.1} parent=11 // pred_check
          %p520 = pneg %p159
        $region34: #{tpu_custom_call.1} parent=11 // pred_check_branch
          %522 = sbr.rel (%p520) target = $region36
        $region35: #{tpu_custom_call.1} parent=11 // pred_region
          %524 = vsyncadd [#allocation14], 0
          %s526 = sshll.u32 %s5, 4
          %s527 = int_to_ptr.hbm [resolvable:$true] %s526
          %s528 = sshll.u32 [#allocation13], 4
          %s529 = int_to_ptr.vmem [resolvable:$true] %s528
          %531 = dma.hbm_to_vmem [thread:$0]  %s527, 16, %s529, [#allocation14]
        $region36: #{tpu_custom_call.1} parent=11 // pred_fallthru
          _
        // Predicated region
        $region37: #{tpu_custom_call.1} parent=11 // pred_check
          %p532 = pneg %p180
        $region38: #{tpu_custom_call.1} parent=11 // pred_check_branch
          %534 = sbr.rel (%p532) target = $region40
        $region39: #{tpu_custom_call.1} parent=11 // pred_region
          %536 = vsyncadd [#allocation14], 0
          %s537 = sshll.u32 %s6, 4
          %s538 = int_to_ptr.hbm [resolvable:$true] %s537
          %s539 = sshll.u32 [#allocation15], 4
          %s540 = int_to_ptr.vmem [resolvable:$true] %s539
          %545 = dma.hbm_to_vmem [thread:$0]  %s538, 4096, %s540, [#allocation14], 128, 128, 8
        $region40: #{tpu_custom_call.1} parent=11 // pred_fallthru
          _
        // Predicated region
        $region41: #{tpu_custom_call.1} parent=11 // pred_check
          %p546 = pneg %p201
        $region42: #{tpu_custom_call.1} parent=11 // pred_check_branch
          %548 = sbr.rel (%p546) target = $region44
        $region43: #{tpu_custom_call.1} parent=11 // pred_region
          %550 = vsyncadd [#allocation17], 0
          %s552 = sshll.u32 %s7, 4
          %s553 = int_to_ptr.hbm [resolvable:$true] %s552
          %s554 = sshll.u32 [#allocation16], 4
          %s555 = int_to_ptr.vmem [resolvable:$true] %s554
          %557 = dma.hbm_to_vmem [thread:$0]  %s553, 16, %s555, [#allocation17]
        $region44: #{tpu_custom_call.1} parent=11 // pred_fallthru
          _
        // Predicated region
        $region45: #{tpu_custom_call.1} parent=11 // pred_check
          %p558 = pneg %p222
        $region46: #{tpu_custom_call.1} parent=11 // pred_check_branch
          %560 = sbr.rel (%p558) target = $region48
        $region47: #{tpu_custom_call.1} parent=11 // pred_region
          %562 = vsyncadd [#allocation17], 0
          %s563 = sshll.u32 %s8, 4
          %s564 = int_to_ptr.hbm [resolvable:$true] %s563
          %s565 = sshll.u32 [#allocation18], 4
          %s566 = int_to_ptr.vmem [resolvable:$true] %s565
          %571 = dma.hbm_to_vmem [thread:$0]  %s564, 4096, %s566, [#allocation17], 128, 128, 8
        $region48: #{tpu_custom_call.1} parent=11 // pred_fallthru
          _
        // Predicated region
        $region49: #{tpu_custom_call.1} parent=11 // pred_check
          %p572 = pneg %p243
        $region50: #{tpu_custom_call.1} parent=11 // pred_check_branch
          %574 = sbr.rel (%p572) target = $region52
        $region51: #{tpu_custom_call.1} parent=11 // pred_region
          %576 = vsyncadd [#allocation20], 0
          %s578 = sshll.u32 %s9, 4
          %s579 = int_to_ptr.hbm [resolvable:$true] %s578
          %s580 = sshll.u32 [#allocation19], 4
          %s581 = int_to_ptr.vmem [resolvable:$true] %s580
          %583 = dma.hbm_to_vmem [thread:$0]  %s579, 16, %s581, [#allocation20]
        $region52: #{tpu_custom_call.1} parent=11 // pred_fallthru
          _
        // Predicated region
        $region53: #{tpu_custom_call.1} parent=11 // pred_check
          %p584 = pneg %p264
        $region54: #{tpu_custom_call.1} parent=11 // pred_check_branch
          %586 = sbr.rel (%p584) target = $region56
        $region55: #{tpu_custom_call.1} parent=11 // pred_region
          %588 = vsyncadd [#allocation20], 0
          %s589 = sshll.u32 %s10, 4
          %s590 = int_to_ptr.hbm [resolvable:$true] %s589
          %s591 = sshll.u32 [#allocation21], 4
          %s592 = int_to_ptr.vmem [resolvable:$true] %s591
          %597 = dma.hbm_to_vmem [thread:$0]  %s590, 4096, %s592, [#allocation20], 128, 128, 8
        $region56: #{tpu_custom_call.1} parent=11 // pred_fallthru
          _
        // Predicated region
        $region57: #{tpu_custom_call.1} parent=11 // pred_check
          %p598 = pneg %p285
        $region58: #{tpu_custom_call.1} parent=11 // pred_check_branch
          %600 = sbr.rel (%p598) target = $region60
        $region59: #{tpu_custom_call.1} parent=11 // pred_region
          %602 = vsyncadd [#allocation23], 0
          %s604 = sshll.u32 %s11, 4
          %s605 = int_to_ptr.hbm [resolvable:$true] %s604
          %s606 = sshll.u32 [#allocation22], 4
          %s607 = int_to_ptr.vmem [resolvable:$true] %s606
          %609 = dma.hbm_to_vmem [thread:$0]  %s605, 16, %s607, [#allocation23]
        $region60: #{tpu_custom_call.1} parent=11 // pred_fallthru
          _
        // Predicated region
        $region61: #{tpu_custom_call.1} parent=11 // pred_check
          %p610 = pneg %p306
        $region62: #{tpu_custom_call.1} parent=11 // pred_check_branch
          %612 = sbr.rel (%p610) target = $region64
        $region63: #{tpu_custom_call.1} parent=11 // pred_region
          %614 = vsyncadd [#allocation23], 0
          %s615 = sshll.u32 %s12, 4
          %s616 = int_to_ptr.hbm [resolvable:$true] %s615
          %s617 = sshll.u32 [#allocation24], 4
          %s618 = int_to_ptr.vmem [resolvable:$true] %s617
          %623 = dma.hbm_to_vmem [thread:$0]  %s616, 4096, %s618, [#allocation23], 128, 128, 8
        $region64: #{tpu_custom_call.1} parent=11 // pred_fallthru
          _
        // Predicated region
        $region65: #{tpu_custom_call.1} parent=11 // pred_check
          %p624 = pneg %p327
        $region66: #{tpu_custom_call.1} parent=11 // pred_check_branch
          %626 = sbr.rel (%p624) target = $region68
        $region67: #{tpu_custom_call.1} parent=11 // pred_region
          %628 = vsyncadd [#allocation26], 0
          %s630 = sshll.u32 %s13, 4
          %s631 = int_to_ptr.hbm [resolvable:$true] %s630
          %s632 = sshll.u32 [#allocation25], 4
          %s633 = int_to_ptr.vmem [resolvable:$true] %s632
          %635 = dma.hbm_to_vmem [thread:$0]  %s631, 16, %s633, [#allocation26]
        $region68: #{tpu_custom_call.1} parent=11 // pred_fallthru
          _
        // Predicated region
        $region69: #{tpu_custom_call.1} parent=11 // pred_check
          %p636 = pneg %p374
        $region70: #{tpu_custom_call.1} parent=11 // pred_check_branch
          %638 = sbr.rel (%p636) target = $region72
        $region71: #{tpu_custom_call.1} parent=11 // pred_region
          %640 = vsyncadd [#allocation8], 0
          %s642 = sshll.u32 %s15, 4
          %s643 = int_to_ptr.hbm [resolvable:$true] %s642
          %s644 = sshll.u32 [#allocation28], 4
          %s645 = int_to_ptr.vmem [resolvable:$true] %s644
          %647 = dma.hbm_to_vmem [thread:$0]  %s643, 32, %s645, [#allocation8]
        $region72: #{tpu_custom_call.1} parent=11 // pred_fallthru
          _
        // Predicated region
        $region73: #{tpu_custom_call.1} parent=11 // pred_check
          %p648 = pneg %p395
        $region74: #{tpu_custom_call.1} parent=11 // pred_check_branch
          %650 = sbr.rel (%p648) target = $region76
        $region75: #{tpu_custom_call.1} parent=11 // pred_region
          %652 = vsyncadd [#allocation11], 0
          %s653 = sshll.u32 %s16, 4
          %s654 = int_to_ptr.hbm [resolvable:$true] %s653
          %s655 = sshll.u32 [#allocation29], 4
          %s656 = int_to_ptr.vmem [resolvable:$true] %s655
          %661 = dma.hbm_to_vmem [thread:$0]  %s654, 4096, %s656, [#allocation11], 128, 128, 8
        $region76: #{tpu_custom_call.1} parent=11 // pred_fallthru
          _
        // Predicated region
        $region77: #{tpu_custom_call.1} parent=11 // pred_check
          %p662 = pneg %p416
        $region78: #{tpu_custom_call.1} parent=11 // pred_check_branch
          %664 = sbr.rel (%p662) target = $region80
        $region79: #{tpu_custom_call.1} parent=11 // pred_region
          %666 = vsyncadd [#allocation14], 0
          %s668 = sshll.u32 %s17, 4
          %s669 = int_to_ptr.hbm [resolvable:$true] %s668
          %s670 = sshll.u32 [#allocation30], 4
          %s671 = int_to_ptr.vmem [resolvable:$true] %s670
          %673 = dma.hbm_to_vmem [thread:$0]  %s669, 16, %s671, [#allocation14]
        $region80: #{tpu_custom_call.1} parent=11 // pred_fallthru
          _
      $region12: #{tpu_custom_call.1} parent=5 // pred_fallthru
        _
      %p674 = scmp.lt.s32.totalorder %s33, 4
      // Predicated region
      $region81: #{tpu_custom_call.1} parent=5 // pred_check
        %p675 = pneg %p674
      $region82: #{tpu_custom_call.1} parent=5 // pred_check_branch
        %677 = sbr.rel (%p675) target = $region84
      $region83: #{tpu_custom_call.1} parent=5 // pred_region
        // Predicated region
        $region85: #{tpu_custom_call.1} parent=83 // pred_check
          %p678 = pneg %p347
        $region86: #{tpu_custom_call.1} parent=83 // pred_check_branch
          %680 = sbr.rel (%p678) target = $region88
        $region87: #{tpu_custom_call.1} parent=83 // pred_region
          %s681 = sand.u32 %s33, 1
          %s682 = scalar_lea.sflag [#allocation5], %s681
          %s683 = sand.u32 %s337, 1
          %s684 = smul.addr %s683, 1920
          %s685 = scalar_lea.vmem [#allocation27], %s684
          %s686 = smul.u32 240, %s33
          %688 = vsyncadd %s682, 0
          %s689 = smul.addr %s686, 2
          %s690 = smul.addr %s689, 4
          %s691 = scalar_lea.hbm %s14, %s690
          %s692 = sshll.u32 %s691, 4
          %s693 = int_to_ptr.hbm [resolvable:$true] %s692
          %s694 = sshll.u32 %s685, 4
          %s695 = int_to_ptr.vmem [resolvable:$true] %s694
          %700 = dma.hbm_to_vmem [thread:$0]  %s693, 30720, %s695, %s682, 128, 128, 8
        $region88: #{tpu_custom_call.1} parent=83 // pred_fallthru
          _
      $region84: #{tpu_custom_call.1} parent=5 // pred_fallthru
        _
      %p701 = scmp.le.s32.totalorder 1, %s33
      %p702 = scmp.lt.s32.totalorder %s33, 5
      %p703 = pnand %p701, %p702
      %p704 = pneg %p703
      // Predicated region
      $region89: #{tpu_custom_call.1} parent=5 // pred_check
        _
      $region90: #{tpu_custom_call.1} parent=5 // pred_check_branch
        %706 = sbr.rel (%p703) target = $region92
      $region91: #{tpu_custom_call.1} parent=5 // pred_region
        %s707 = ssub.s32 %s33, 1
        // Predicated region
        $region93: #{tpu_custom_call.1} parent=91 // pred_check
          %p708 = pneg %p54
        $region94: #{tpu_custom_call.1} parent=91 // pred_check_branch
          %710 = sbr.rel (%p708) target = $region96
        $region95: #{tpu_custom_call.1} parent=91 // pred_region
          %712 = dma.done [#allocation5], 384
        $region96: #{tpu_custom_call.1} parent=91 // pred_fallthru
          _
        // Predicated region
        $region97: #{tpu_custom_call.1} parent=91 // pred_check
          %p713 = pneg %p75
        $region98: #{tpu_custom_call.1} parent=91 // pred_check_branch
          %715 = sbr.rel (%p713) target = $region100
        $region99: #{tpu_custom_call.1} parent=91 // pred_region
          %717 = dma.done [#allocation8], 384
        $region100: #{tpu_custom_call.1} parent=91 // pred_fallthru
          _
        // Predicated region
        $region101: #{tpu_custom_call.1} parent=91 // pred_check
          %p718 = pneg %p96
        $region102: #{tpu_custom_call.1} parent=91 // pred_check_branch
          %720 = sbr.rel (%p718) target = $region104
        $region103: #{tpu_custom_call.1} parent=91 // pred_region
          %722 = dma.done [#allocation8], 512
        $region104: #{tpu_custom_call.1} parent=91 // pred_fallthru
          _
        // Predicated region
        $region105: #{tpu_custom_call.1} parent=91 // pred_check
          %p723 = pneg %p117
        $region106: #{tpu_custom_call.1} parent=91 // pred_check_branch
          %725 = sbr.rel (%p723) target = $region108
        $region107: #{tpu_custom_call.1} parent=91 // pred_region
          %727 = dma.done [#allocation11], 16
        $region108: #{tpu_custom_call.1} parent=91 // pred_fallthru
          _
        // Predicated region
        $region109: #{tpu_custom_call.1} parent=91 // pred_check
          %p728 = pneg %p138
        $region110: #{tpu_custom_call.1} parent=91 // pred_check_branch
          %730 = sbr.rel (%p728) target = $region112
        $region111: #{tpu_custom_call.1} parent=91 // pred_region
          %732 = dma.done [#allocation11], 512
        $region112: #{tpu_custom_call.1} parent=91 // pred_fallthru
          _
        // Predicated region
        $region113: #{tpu_custom_call.1} parent=91 // pred_check
          %p733 = pneg %p159
        $region114: #{tpu_custom_call.1} parent=91 // pred_check_branch
          %735 = sbr.rel (%p733) target = $region116
        $region115: #{tpu_custom_call.1} parent=91 // pred_region
          %737 = dma.done [#allocation14], 16
        $region116: #{tpu_custom_call.1} parent=91 // pred_fallthru
          _
        // Predicated region
        $region117: #{tpu_custom_call.1} parent=91 // pred_check
          %p738 = pneg %p180
        $region118: #{tpu_custom_call.1} parent=91 // pred_check_branch
          %740 = sbr.rel (%p738) target = $region120
        $region119: #{tpu_custom_call.1} parent=91 // pred_region
          %742 = dma.done [#allocation14], 4096
        $region120: #{tpu_custom_call.1} parent=91 // pred_fallthru
          _
        // Predicated region
        $region121: #{tpu_custom_call.1} parent=91 // pred_check
          %p743 = pneg %p201
        $region122: #{tpu_custom_call.1} parent=91 // pred_check_branch
          %745 = sbr.rel (%p743) target = $region124
        $region123: #{tpu_custom_call.1} parent=91 // pred_region
          %747 = dma.done [#allocation17], 16
        $region124: #{tpu_custom_call.1} parent=91 // pred_fallthru
          _
        // Predicated region
        $region125: #{tpu_custom_call.1} parent=91 // pred_check
          %p748 = pneg %p222
        $region126: #{tpu_custom_call.1} parent=91 // pred_check_branch
          %750 = sbr.rel (%p748) target = $region128
        $region127: #{tpu_custom_call.1} parent=91 // pred_region
          %752 = dma.done [#allocation17], 4096
        $region128: #{tpu_custom_call.1} parent=91 // pred_fallthru
          _
        // Predicated region
        $region129: #{tpu_custom_call.1} parent=91 // pred_check
          %p753 = pneg %p243
        $region130: #{tpu_custom_call.1} parent=91 // pred_check_branch
          %755 = sbr.rel (%p753) target = $region132
        $region131: #{tpu_custom_call.1} parent=91 // pred_region
          %757 = dma.done [#allocation20], 16
        $region132: #{tpu_custom_call.1} parent=91 // pred_fallthru
          _
        // Predicated region
        $region133: #{tpu_custom_call.1} parent=91 // pred_check
          %p758 = pneg %p264
        $region134: #{tpu_custom_call.1} parent=91 // pred_check_branch
          %760 = sbr.rel (%p758) target = $region136
        $region135: #{tpu_custom_call.1} parent=91 // pred_region
          %762 = dma.done [#allocation20], 4096
        $region136: #{tpu_custom_call.1} parent=91 // pred_fallthru
          _
        // Predicated region
        $region137: #{tpu_custom_call.1} parent=91 // pred_check
          %p763 = pneg %p285
        $region138: #{tpu_custom_call.1} parent=91 // pred_check_branch
          %765 = sbr.rel (%p763) target = $region140
        $region139: #{tpu_custom_call.1} parent=91 // pred_region
          %767 = dma.done [#allocation23], 16
        $region140: #{tpu_custom_call.1} parent=91 // pred_fallthru
          _
        // Predicated region
        $region141: #{tpu_custom_call.1} parent=91 // pred_check
          %p768 = pneg %p306
        $region142: #{tpu_custom_call.1} parent=91 // pred_check_branch
          %770 = sbr.rel (%p768) target = $region144
        $region143: #{tpu_custom_call.1} parent=91 // pred_region
          %772 = dma.done [#allocation23], 4096
        $region144: #{tpu_custom_call.1} parent=91 // pred_fallthru
          _
        // Predicated region
        $region145: #{tpu_custom_call.1} parent=91 // pred_check
          %p773 = pneg %p327
        $region146: #{tpu_custom_call.1} parent=91 // pred_check_branch
          %775 = sbr.rel (%p773) target = $region148
        $region147: #{tpu_custom_call.1} parent=91 // pred_region
          %777 = dma.done [#allocation26], 16
        $region148: #{tpu_custom_call.1} parent=91 // pred_fallthru
          _
        %s778 = sand.u32 %s38, 1
        %s779 = scalar_lea.sflag [#allocation5], %s778
        %s780 = sand.u32 %s340, 1
        %s781 = smul.addr %s780, 1920
        %s782 = scalar_lea.vmem [#allocation27], %s781
        // Predicated region
        $region149: #{tpu_custom_call.1} parent=91 // pred_check
          %p783 = pneg %p353
        $region150: #{tpu_custom_call.1} parent=91 // pred_check_branch
          %785 = sbr.rel (%p783) target = $region152
        $region151: #{tpu_custom_call.1} parent=91 // pred_region
          %787 = dma.done %s779, 30720
        $region152: #{tpu_custom_call.1} parent=91 // pred_fallthru
          _
        // Predicated region
        $region153: #{tpu_custom_call.1} parent=91 // pred_check
          %p788 = pneg %p374
        $region154: #{tpu_custom_call.1} parent=91 // pred_check_branch
          %790 = sbr.rel (%p788) target = $region156
        $region155: #{tpu_custom_call.1} parent=91 // pred_region
          %792 = dma.done [#allocation8], 32
        $region156: #{tpu_custom_call.1} parent=91 // pred_fallthru
          _
        // Predicated region
        $region157: #{tpu_custom_call.1} parent=91 // pred_check
          %p793 = pneg %p395
        $region158: #{tpu_custom_call.1} parent=91 // pred_check_branch
          %795 = sbr.rel (%p793) target = $region160
        $region159: #{tpu_custom_call.1} parent=91 // pred_region
          %797 = dma.done [#allocation11], 4096
        $region160: #{tpu_custom_call.1} parent=91 // pred_fallthru
          _
        // Predicated region
        $region161: #{tpu_custom_call.1} parent=91 // pred_check
          %p798 = pneg %p416
        $region162: #{tpu_custom_call.1} parent=91 // pred_check_branch
          %800 = sbr.rel (%p798) target = $region164
        $region163: #{tpu_custom_call.1} parent=91 // pred_region
          %802 = dma.done [#allocation14], 16
        $region164: #{tpu_custom_call.1} parent=91 // pred_fallthru
          _
        %p803 = pneg %p54
        %p804 = pneg %p51
        %p805 = pneg %p75
        %p806 = pneg %p72
        %p807 = pneg %p96
        %p808 = pneg %p93
        %p809 = pneg %p117
        %p810 = pneg %p114
        %p811 = pneg %p138
        %p812 = pneg %p135
        %p813 = pneg %p159
        %p814 = pneg %p156
        %p815 = pneg %p180
        %p816 = pneg %p177
        %p817 = pneg %p201
        %p818 = pneg %p198
        %p819 = pneg %p222
        %p820 = pneg %p219
        %p821 = pneg %p243
        %p822 = pneg %p240
        %p823 = pneg %p264
        %p824 = pneg %p261
        %p825 = pneg %p285
        %p826 = pneg %p282
        %p827 = pneg %p306
        %p828 = pneg %p303
        %p829 = pneg %p327
        %p830 = pneg %p324
        %s831 = sand.u32 %s38, 1
        %s832 = scalar_lea.sflag [#allocation5], %s831
        %s833 = sand.u32 %s340, 1
        %s834 = smul.addr %s833, 1920
        %s835 = scalar_lea.vmem [#allocation27], %s834
        %p836 = pneg %p353
        %p837 = pneg %p350
        %p838 = pneg %p374
        %p839 = pneg %p371
        %p840 = pneg %p395
        %p841 = pneg %p392
        %p842 = pneg %p416
        %p843 = pneg %p413
        %p844 = pneg %p437
        %p845 = pneg %p434
        %s846 = smul.u32 240, %s38
        %p847 = scmp.eq.s32.totalorder %s38, 0
        // Predicated region
        $region165: #{tpu_custom_call.1} parent=91 // pred_check
          %p848 = pneg %p847
        $region166: #{tpu_custom_call.1} parent=91 // pred_check_branch
          %850 = sbr.rel (%p848) target = $region168
        $region167: #{tpu_custom_call.1} parent=91 // pred_region
          %851 = vst [vmem:[#allocation2] sm:$0xff] 0.0
          %852 = vst [vmem:[#allocation2 + $0x8] sm:$0xff] 0.0
          %853 = vst [vmem:[#allocation2 + $0x10] sm:$0xff] 0.0
          %854 = vst [vmem:[#allocation2 + $0x18] sm:$0x3f] 0.0
          %855 = vst [vmem:[#allocation2 + $0x1e] sm:$0xff] 0.0
          %856 = vst [vmem:[#allocation2 + $0x26] sm:$0xff] 0.0
          %857 = vst [vmem:[#allocation2 + $0x2e] sm:$0xff] 0.0
          %858 = vst [vmem:[#allocation2 + $0x36] sm:$0x3f] 0.0
          %859 = vst [vmem:[#allocation2 + $0x3c] sm:$0xff] 0.0
          %860 = vst [vmem:[#allocation2 + $0x44] sm:$0xff] 0.0
          %861 = vst [vmem:[#allocation2 + $0x4c] sm:$0xff] 0.0
          %862 = vst [vmem:[#allocation2 + $0x54] sm:$0x3f] 0.0
          %863 = vst [vmem:[#allocation2 + $0x5a] sm:$0xff] 0.0
          %864 = vst [vmem:[#allocation2 + $0x62] sm:$0xff] 0.0
          %865 = vst [vmem:[#allocation2 + $0x6a] sm:$0xff] 0.0
          %866 = vst [vmem:[#allocation2 + $0x72] sm:$0x3f] 0.0
          %867 = vst [vmem:[#allocation3] sm:$0xf] 0.0
          %v868 = vld [vmem:[#allocation4] sm:$0xff]
          %v869 = vld [vmem:[#allocation4 + $0x8] sm:$0xff]
          %v870 = vld [vmem:[#allocation4 + $0x10] sm:$0xff]
          %v871 = vld [vmem:[#allocation9] sm:$0xff]
          %v872 = vld [vmem:[#allocation9 + $0x8] sm:$0xff]
          %v873 = vld [vmem:[#allocation9 + $0x10] sm:$0xff]
          %v874 = vld [vmem:[#allocation9 + $0x18] sm:$0xf]
          %v875 = vld [vmem:[#allocation10] sm:$0x1]
          %v877 = vperm.slane %v875, 0
          %vm879 = vcmask 228352
          %v881 = vsel %vm879, %v868, 0
          %v884 = vsel %vm879, %v869, 0
          %v887 = vsel %vm879, %v870, 0
          %vm889 = vcmask 1043456
          %v891 = vsel %vm889, %v874, 0
          %893 = vmatpush.msra.mxu0 0.0
          %894 = vmatpush.msra.mxu0 0.0
          %895 = vmatpush.msra.mxu0 0.0
          %896 = vmatpush.msra.mxu0 0.0
          %897 = vmatpush.msra.mxu0 0.0
          %898 = vmatpush.msra.mxu0 0.0
          %899 = vmatpush.msra.mxu0 0.0
          %900 = vmatpush.msra.mxu0 0.0
          %901 = vmatpush.msra.mxu0 0.0
          %902 = vmatpush.msra.mxu0 0.0
          %903 = vmatpush.msra.mxu0 0.0
          %904 = vmatpush.msra.mxu0 0.0
          %905 = vmatpush.msra.mxu0 %v891
          %906 = vmatpush.msra.mxu0 %v873
          %907 = vmatpush.msra.mxu0 %v872
          %908 = vmatpush.msra.mxu0 %v871
          %909 = vmatmul.f32.gmra.mxu0 %v881
          %v910 = vpop.f32.mrf.mxu0
          %v911 = vadd.f32 %v877, %v910
          %912 = vmatmul.f32.gmra.mxu0 %v884
          %v913 = vpop.f32.mrf.mxu0
          %v914 = vadd.f32 %v877, %v913
          %915 = vmatmul.f32.gmra.mxu0 %v887
          %v916 = vpop.f32.mrf.mxu0
          %v917 = vadd.f32 %v877, %v916
          %918 = vdwg.mxu0
          %v919 = vmax.f32 %v911, 0.0
          %v920 = vmax.f32 %v914, 0.0
          %v921 = vmax.f32 %v917, 0.0
          %v922 = vld [vmem:[#allocation7] sm:$0xff]
          %v923 = vld [vmem:[#allocation7 + $0x8] sm:$0xff]
          %v924 = vld [vmem:[#allocation7 + $0x10] sm:$0xff]
          %v925 = vld [vmem:[#allocation12] sm:$0xff]
          %v926 = vld [vmem:[#allocation12 + $0x8] sm:$0xff]
          %v927 = vld [vmem:[#allocation12 + $0x10] sm:$0xff]
          %v928 = vld [vmem:[#allocation12 + $0x18] sm:$0xf]
          %v929 = vld [vmem:[#allocation13] sm:$0x1]
          %v931 = vperm.slane %v929, 0
          %v934 = vsel %vm879, %v922, 0
          %v937 = vsel %vm879, %v923, 0
          %v940 = vsel %vm879, %v924, 0
          %v943 = vsel %vm889, %v928, 0
          %945 = vmatpush.msra.mxu0 0.0
          %946 = vmatpush.msra.mxu0 0.0
          %947 = vmatpush.msra.mxu0 0.0
          %948 = vmatpush.msra.mxu0 0.0
          %949 = vmatpush.msra.mxu0 0.0
          %950 = vmatpush.msra.mxu0 0.0
          %951 = vmatpush.msra.mxu0 0.0
          %952 = vmatpush.msra.mxu0 0.0
          %953 = vmatpush.msra.mxu0 0.0
          %954 = vmatpush.msra.mxu0 0.0
          %955 = vmatpush.msra.mxu0 0.0
          %956 = vmatpush.msra.mxu0 0.0
          %957 = vmatpush.msra.mxu0 %v943
          %958 = vmatpush.msra.mxu0 %v927
          %959 = vmatpush.msra.mxu0 %v926
          %960 = vmatpush.msra.mxu0 %v925
          %961 = vmatmul.f32.gmra.mxu0 %v934
          %v962 = vpop.f32.mrf.mxu0
          %v963 = vadd.f32 %v931, %v962
          %964 = vmatmul.f32.gmra.mxu0 %v937
          %v965 = vpop.f32.mrf.mxu0
          %v966 = vadd.f32 %v931, %v965
          %967 = vmatmul.f32.gmra.mxu0 %v940
          %v968 = vpop.f32.mrf.mxu0
          %v969 = vadd.f32 %v931, %v968
          %970 = vdwg.mxu0
          %v971 = vmax.f32 %v963, 0.0
          %v972 = vmax.f32 %v966, 0.0
          %v973 = vmax.f32 %v969, 0.0
          %v974 = vld [vmem:[#allocation15] sm:$0xff]
          %v975 = vld [vmem:[#allocation15 + $0x8] sm:$0xff]
          %v976 = vld [vmem:[#allocation15 + $0x10] sm:$0xff]
          %v977 = vld [vmem:[#allocation15 + $0x18] sm:$0xff]
          %v978 = vld [vmem:[#allocation15 + $0x20] sm:$0xff]
          %v979 = vld [vmem:[#allocation15 + $0x28] sm:$0xff]
          %v980 = vld [vmem:[#allocation15 + $0x30] sm:$0xff]
          %v981 = vld [vmem:[#allocation15 + $0x38] sm:$0xff]
          %v982 = vld [vmem:[#allocation15 + $0x40] sm:$0xff]
          %v983 = vld [vmem:[#allocation15 + $0x48] sm:$0xff]
          %v984 = vld [vmem:[#allocation15 + $0x50] sm:$0xff]
          %v985 = vld [vmem:[#allocation15 + $0x58] sm:$0xff]
          %v986 = vld [vmem:[#allocation15 + $0x60] sm:$0xff]
          %v987 = vld [vmem:[#allocation15 + $0x68] sm:$0xff]
          %v988 = vld [vmem:[#allocation15 + $0x70] sm:$0xff]
          %v989 = vld [vmem:[#allocation15 + $0x78] sm:$0xff]
          %v990 = vld [vmem:[#allocation15 + $0x80] sm:$0xff]
          %v991 = vld [vmem:[#allocation15 + $0x88] sm:$0xff]
          %v992 = vld [vmem:[#allocation15 + $0x90] sm:$0xff]
          %v993 = vld [vmem:[#allocation15 + $0x98] sm:$0xff]
          %v994 = vld [vmem:[#allocation15 + $0xa0] sm:$0xff]
          %v995 = vld [vmem:[#allocation15 + $0xa8] sm:$0xff]
          %v996 = vld [vmem:[#allocation15 + $0xb0] sm:$0xff]
          %v997 = vld [vmem:[#allocation15 + $0xb8] sm:$0xff]
          %v998 = vld [vmem:[#allocation15 + $0xc0] sm:$0xff]
          %v999 = vld [vmem:[#allocation15 + $0xc8] sm:$0xff]
          %v1000 = vld [vmem:[#allocation15 + $0xd0] sm:$0xff]
          %v1001 = vld [vmem:[#allocation15 + $0xd8] sm:$0xff]
          %v1002 = vld [vmem:[#allocation15 + $0xe0] sm:$0xff]
          %v1003 = vld [vmem:[#allocation15 + $0xe8] sm:$0xff]
          %v1004 = vld [vmem:[#allocation15 + $0xf0] sm:$0xff]
          %v1005 = vld [vmem:[#allocation15 + $0xf8] sm:$0xff]
          %v1006 = vld [vmem:[#allocation16] sm:$0x1]
          %v1008 = vperm.slane %v1006, 0
          %1010 = vmatpush.msra.mxu0 %v989
          %1011 = vmatpush.msra.mxu0 %v988
          %1012 = vmatpush.msra.mxu0 %v987
          %1013 = vmatpush.msra.mxu0 %v986
          %1014 = vmatpush.msra.mxu0 %v985
          %1015 = vmatpush.msra.mxu0 %v984
          %1016 = vmatpush.msra.mxu0 %v983
          %1017 = vmatpush.msra.mxu0 %v982
          %1018 = vmatpush.msra.mxu0 %v981
          %1019 = vmatpush.msra.mxu0 %v980
          %1020 = vmatpush.msra.mxu0 %v979
          %1021 = vmatpush.msra.mxu0 %v978
          %1022 = vmatpush.msra.mxu0 %v977
          %1023 = vmatpush.msra.mxu0 %v976
          %1024 = vmatpush.msra.mxu0 %v975
          %1025 = vmatpush.msra.mxu0 %v974
          %1026 = vmatmul.f32.gmra.mxu0 %v919
          %v1027 = vpop.f32.mrf.mxu0
          %v1028 = vadd.f32 %v1008, %v1027
          %1029 = vmatmul.f32.gmra.mxu0 %v920
          %v1030 = vpop.f32.mrf.mxu0
          %v1031 = vadd.f32 %v1008, %v1030
          %1032 = vdwg.mxu0
          %1033 = vmatpush.msra.mxu0 %v1005
          %1034 = vmatpush.msra.mxu0 %v1004
          %1035 = vmatpush.msra.mxu0 %v1003
          %1036 = vmatpush.msra.mxu0 %v1002
          %1037 = vmatpush.msra.mxu0 %v1001
          %1038 = vmatpush.msra.mxu0 %v1000
          %1039 = vmatpush.msra.mxu0 %v999
          %1040 = vmatpush.msra.mxu0 %v998
          %1041 = vmatpush.msra.mxu0 %v997
          %1042 = vmatpush.msra.mxu0 %v996
          %1043 = vmatpush.msra.mxu0 %v995
          %1044 = vmatpush.msra.mxu0 %v994
          %1045 = vmatpush.msra.mxu0 %v993
          %1046 = vmatpush.msra.mxu0 %v992
          %1047 = vmatpush.msra.mxu0 %v991
          %1048 = vmatpush.msra.mxu0 %v990
          %1049 = vmatmul.f32.gmra.mxu0 %v920
          %v1050 = vpop.f32.mrf.mxu0
          %v1051 = vadd.f32 %v1028, %v1050
          %1052 = vmatmul.f32.gmra.mxu0 %v921
          %v1053 = vpop.f32.mrf.mxu0
          %v1054 = vadd.f32 %v1031, %v1053
          %1055 = vdwg.mxu0
          %v1056 = vmax.f32 %v1051, 0.0
          %v1057 = vmax.f32 %v1054, 0.0
          %vm1061 = vcmask 1045504
          %v1062 = vrot.slane %v919, 2
          %v1063 = vrot.slane %v920, 2
          %v1064 = vsel %vm1061, %v1062, %v1063
          %v1065 = vrot.slane %v921, 2
          %v1066 = vsel %vm1061, %v1063, %v1065
          %v1070 = vld [vmem:[#allocation18] sm:$0xff]
          %v1071 = vld [vmem:[#allocation18 + $0x8] sm:$0xff]
          %v1072 = vld [vmem:[#allocation18 + $0x10] sm:$0xff]
          %v1073 = vld [vmem:[#allocation18 + $0x18] sm:$0xff]
          %v1074 = vld [vmem:[#allocation18 + $0x20] sm:$0xff]
          %v1075 = vld [vmem:[#allocation18 + $0x28] sm:$0xff]
          %v1076 = vld [vmem:[#allocation18 + $0x30] sm:$0xff]
          %v1077 = vld [vmem:[#allocation18 + $0x38] sm:$0xff]
          %v1078 = vld [vmem:[#allocation18 + $0x40] sm:$0xff]
          %v1079 = vld [vmem:[#allocation18 + $0x48] sm:$0xff]
          %v1080 = vld [vmem:[#allocation18 + $0x50] sm:$0xff]
          %v1081 = vld [vmem:[#allocation18 + $0x58] sm:$0xff]
          %v1082 = vld [vmem:[#allocation18 + $0x60] sm:$0xff]
          %v1083 = vld [vmem:[#allocation18 + $0x68] sm:$0xff]
          %v1084 = vld [vmem:[#allocation18 + $0x70] sm:$0xff]
          %v1085 = vld [vmem:[#allocation18 + $0x78] sm:$0xff]
          %v1086 = vld [vmem:[#allocation18 + $0x80] sm:$0xff]
          %v1087 = vld [vmem:[#allocation18 + $0x88] sm:$0xff]
          %v1088 = vld [vmem:[#allocation18 + $0x90] sm:$0xff]
          %v1089 = vld [vmem:[#allocation18 + $0x98] sm:$0xff]
          %v1090 = vld [vmem:[#allocation18 + $0xa0] sm:$0xff]
          %v1091 = vld [vmem:[#allocation18 + $0xa8] sm:$0xff]
          %v1092 = vld [vmem:[#allocation18 + $0xb0] sm:$0xff]
          %v1093 = vld [vmem:[#allocation18 + $0xb8] sm:$0xff]
          %v1094 = vld [vmem:[#allocation18 + $0xc0] sm:$0xff]
          %v1095 = vld [vmem:[#allocation18 + $0xc8] sm:$0xff]
          %v1096 = vld [vmem:[#allocation18 + $0xd0] sm:$0xff]
          %v1097 = vld [vmem:[#allocation18 + $0xd8] sm:$0xff]
          %v1098 = vld [vmem:[#allocation18 + $0xe0] sm:$0xff]
          %v1099 = vld [vmem:[#allocation18 + $0xe8] sm:$0xff]
          %v1100 = vld [vmem:[#allocation18 + $0xf0] sm:$0xff]
          %v1101 = vld [vmem:[#allocation18 + $0xf8] sm:$0xff]
          %v1102 = vld [vmem:[#allocation19] sm:$0x1]
          %v1104 = vperm.slane %v1102, 0
          %1106 = vmatpush.msra.mxu0 %v1085
          %1107 = vmatpush.msra.mxu0 %v1084
          %1108 = vmatpush.msra.mxu0 %v1083
          %1109 = vmatpush.msra.mxu0 %v1082
          %1110 = vmatpush.msra.mxu0 %v1081
          %1111 = vmatpush.msra.mxu0 %v1080
          %1112 = vmatpush.msra.mxu0 %v1079
          %1113 = vmatpush.msra.mxu0 %v1078
          %1114 = vmatpush.msra.mxu0 %v1077
          %1115 = vmatpush.msra.mxu0 %v1076
          %1116 = vmatpush.msra.mxu0 %v1075
          %1117 = vmatpush.msra.mxu0 %v1074
          %1118 = vmatpush.msra.mxu0 %v1073
          %1119 = vmatpush.msra.mxu0 %v1072
          %1120 = vmatpush.msra.mxu0 %v1071
          %1121 = vmatpush.msra.mxu0 %v1070
          %1122 = vmatmul.f32.gmra.mxu0 %v919
          %v1123 = vpop.f32.mrf.mxu0
          %v1124 = vadd.f32 %v1104, %v1123
          %1125 = vmatmul.f32.gmra.mxu0 %v920
          %v1126 = vpop.f32.mrf.mxu0
          %v1127 = vadd.f32 %v1104, %v1126
          %1128 = vmatmul.f32.gmra.mxu0 %v921
          %v1129 = vpop.f32.mrf.mxu0
          %v1130 = vadd.f32 %v1104, %v1129
          %1131 = vdwg.mxu0
          %1132 = vmatpush.msra.mxu0 %v1101
          %1133 = vmatpush.msra.mxu0 %v1100
          %1134 = vmatpush.msra.mxu0 %v1099
          %1135 = vmatpush.msra.mxu0 %v1098
          %1136 = vmatpush.msra.mxu0 %v1097
          %1137 = vmatpush.msra.mxu0 %v1096
          %1138 = vmatpush.msra.mxu0 %v1095
          %1139 = vmatpush.msra.mxu0 %v1094
          %1140 = vmatpush.msra.mxu0 %v1093
          %1141 = vmatpush.msra.mxu0 %v1092
          %1142 = vmatpush.msra.mxu0 %v1091
          %1143 = vmatpush.msra.mxu0 %v1090
          %1144 = vmatpush.msra.mxu0 %v1089
          %1145 = vmatpush.msra.mxu0 %v1088
          %1146 = vmatpush.msra.mxu0 %v1087
          %1147 = vmatpush.msra.mxu0 %v1086
          %1148 = vmatmul.f32.gmra.mxu0 %v1064
          %v1149 = vpop.f32.mrf.mxu0
          %v1150 = vadd.f32 %v1124, %v1149
          %1151 = vmatmul.f32.gmra.mxu0 %v1066
          %v1152 = vpop.f32.mrf.mxu0
          %v1153 = vadd.f32 %v1127, %v1152
          %1154 = vmatmul.f32.gmra.mxu0 %v1065
          %v1155 = vpop.f32.mrf.mxu0
          %v1156 = vadd.f32 %v1130, %v1155
          %1157 = vdwg.mxu0
          %v1158 = vmax.f32 %v1150, 0.0
          %v1159 = vmax.f32 %v1153, 0.0
          %v1160 = vmax.f32 %v1156, 0.0
          %vm1164 = vcmask 1041408
          %v1165 = vrot.slane %v971, 6
          %v1166 = vrot.slane %v972, 6
          %v1167 = vsel %vm1164, %v1165, %v1166
          %v1168 = vrot.slane %v973, 6
          %v1169 = vsel %vm1164, %v1166, %v1168
          %v1173 = vld [vmem:[#allocation21] sm:$0xff]
          %v1174 = vld [vmem:[#allocation21 + $0x8] sm:$0xff]
          %v1175 = vld [vmem:[#allocation21 + $0x10] sm:$0xff]
          %v1176 = vld [vmem:[#allocation21 + $0x18] sm:$0xff]
          %v1177 = vld [vmem:[#allocation21 + $0x20] sm:$0xff]
          %v1178 = vld [vmem:[#allocation21 + $0x28] sm:$0xff]
          %v1179 = vld [vmem:[#allocation21 + $0x30] sm:$0xff]
          %v1180 = vld [vmem:[#allocation21 + $0x38] sm:$0xff]
          %v1181 = vld [vmem:[#allocation21 + $0x40] sm:$0xff]
          %v1182 = vld [vmem:[#allocation21 + $0x48] sm:$0xff]
          %v1183 = vld [vmem:[#allocation21 + $0x50] sm:$0xff]
          %v1184 = vld [vmem:[#allocation21 + $0x58] sm:$0xff]
          %v1185 = vld [vmem:[#allocation21 + $0x60] sm:$0xff]
          %v1186 = vld [vmem:[#allocation21 + $0x68] sm:$0xff]
          %v1187 = vld [vmem:[#allocation21 + $0x70] sm:$0xff]
          %v1188 = vld [vmem:[#allocation21 + $0x78] sm:$0xff]
          %v1189 = vld [vmem:[#allocation21 + $0x80] sm:$0xff]
          %v1190 = vld [vmem:[#allocation21 + $0x88] sm:$0xff]
          %v1191 = vld [vmem:[#allocation21 + $0x90] sm:$0xff]
          %v1192 = vld [vmem:[#allocation21 + $0x98] sm:$0xff]
          %v1193 = vld [vmem:[#allocation21 + $0xa0] sm:$0xff]
          %v1194 = vld [vmem:[#allocation21 + $0xa8] sm:$0xff]
          %v1195 = vld [vmem:[#allocation21 + $0xb0] sm:$0xff]
          %v1196 = vld [vmem:[#allocation21 + $0xb8] sm:$0xff]
          %v1197 = vld [vmem:[#allocation21 + $0xc0] sm:$0xff]
          %v1198 = vld [vmem:[#allocation21 + $0xc8] sm:$0xff]
          %v1199 = vld [vmem:[#allocation21 + $0xd0] sm:$0xff]
          %v1200 = vld [vmem:[#allocation21 + $0xd8] sm:$0xff]
          %v1201 = vld [vmem:[#allocation21 + $0xe0] sm:$0xff]
          %v1202 = vld [vmem:[#allocation21 + $0xe8] sm:$0xff]
          %v1203 = vld [vmem:[#allocation21 + $0xf0] sm:$0xff]
          %v1204 = vld [vmem:[#allocation21 + $0xf8] sm:$0xff]
          %v1205 = vld [vmem:[#allocation22] sm:$0x1]
          %v1207 = vperm.slane %v1205, 0
          %1209 = vmatpush.msra.mxu0 %v1188
          %1210 = vmatpush.msra.mxu0 %v1187
          %1211 = vmatpush.msra.mxu0 %v1186
          %1212 = vmatpush.msra.mxu0 %v1185
          %1213 = vmatpush.msra.mxu0 %v1184
          %1214 = vmatpush.msra.mxu0 %v1183
          %1215 = vmatpush.msra.mxu0 %v1182
          %1216 = vmatpush.msra.mxu0 %v1181
          %1217 = vmatpush.msra.mxu0 %v1180
          %1218 = vmatpush.msra.mxu0 %v1179
          %1219 = vmatpush.msra.mxu0 %v1178
          %1220 = vmatpush.msra.mxu0 %v1177
          %1221 = vmatpush.msra.mxu0 %v1176
          %1222 = vmatpush.msra.mxu0 %v1175
          %1223 = vmatpush.msra.mxu0 %v1174
          %1224 = vmatpush.msra.mxu0 %v1173
          %1225 = vmatmul.f32.gmra.mxu0 %v971
          %v1226 = vpop.f32.mrf.mxu0
          %v1227 = vadd.f32 %v1207, %v1226
          %1228 = vmatmul.f32.gmra.mxu0 %v972
          %v1229 = vpop.f32.mrf.mxu0
          %v1230 = vadd.f32 %v1207, %v1229
          %1231 = vmatmul.f32.gmra.mxu0 %v973
          %v1232 = vpop.f32.mrf.mxu0
          %v1233 = vadd.f32 %v1207, %v1232
          %1234 = vdwg.mxu0
          %1235 = vmatpush.msra.mxu0 %v1204
          %1236 = vmatpush.msra.mxu0 %v1203
          %1237 = vmatpush.msra.mxu0 %v1202
          %1238 = vmatpush.msra.mxu0 %v1201
          %1239 = vmatpush.msra.mxu0 %v1200
          %1240 = vmatpush.msra.mxu0 %v1199
          %1241 = vmatpush.msra.mxu0 %v1198
          %1242 = vmatpush.msra.mxu0 %v1197
          %1243 = vmatpush.msra.mxu0 %v1196
          %1244 = vmatpush.msra.mxu0 %v1195
          %1245 = vmatpush.msra.mxu0 %v1194
          %1246 = vmatpush.msra.mxu0 %v1193
          %1247 = vmatpush.msra.mxu0 %v1192
          %1248 = vmatpush.msra.mxu0 %v1191
          %1249 = vmatpush.msra.mxu0 %v1190
          %1250 = vmatpush.msra.mxu0 %v1189
          %1251 = vmatmul.f32.gmra.mxu0 %v1167
          %v1252 = vpop.f32.mrf.mxu0
          %v1253 = vadd.f32 %v1227, %v1252
          %1254 = vmatmul.f32.gmra.mxu0 %v1169
          %v1255 = vpop.f32.mrf.mxu0
          %v1256 = vadd.f32 %v1230, %v1255
          %1257 = vmatmul.f32.gmra.mxu0 %v1168
          %v1258 = vpop.f32.mrf.mxu0
          %v1259 = vadd.f32 %v1233, %v1258
          %1260 = vdwg.mxu0
          %v1261 = vmax.f32 %v1253, 0.0
          %v1262 = vmax.f32 %v1256, 0.0
          %v1263 = vmax.f32 %v1259, 0.0
          %v1264 = vrot.slane %v971, 2
          %v1265 = vrot.slane %v972, 2
          %v1266 = vsel %vm1061, %v1264, %v1265
          %v1267 = vrot.slane %v973, 2
          %v1268 = vsel %vm1061, %v1265, %v1267
          %v1272 = vld [vmem:[#allocation24] sm:$0xff]
          %v1273 = vld [vmem:[#allocation24 + $0x8] sm:$0xff]
          %v1274 = vld [vmem:[#allocation24 + $0x10] sm:$0xff]
          %v1275 = vld [vmem:[#allocation24 + $0x18] sm:$0xff]
          %v1276 = vld [vmem:[#allocation24 + $0x20] sm:$0xff]
          %v1277 = vld [vmem:[#allocation24 + $0x28] sm:$0xff]
          %v1278 = vld [vmem:[#allocation24 + $0x30] sm:$0xff]
          %v1279 = vld [vmem:[#allocation24 + $0x38] sm:$0xff]
          %v1280 = vld [vmem:[#allocation24 + $0x40] sm:$0xff]
          %v1281 = vld [vmem:[#allocation24 + $0x48] sm:$0xff]
          %v1282 = vld [vmem:[#allocation24 + $0x50] sm:$0xff]
          %v1283 = vld [vmem:[#allocation24 + $0x58] sm:$0xff]
          %v1284 = vld [vmem:[#allocation24 + $0x60] sm:$0xff]
          %v1285 = vld [vmem:[#allocation24 + $0x68] sm:$0xff]
          %v1286 = vld [vmem:[#allocation24 + $0x70] sm:$0xff]
          %v1287 = vld [vmem:[#allocation24 + $0x78] sm:$0xff]
          %v1288 = vld [vmem:[#allocation24 + $0x80] sm:$0xff]
          %v1289 = vld [vmem:[#allocation24 + $0x88] sm:$0xff]
          %v1290 = vld [vmem:[#allocation24 + $0x90] sm:$0xff]
          %v1291 = vld [vmem:[#allocation24 + $0x98] sm:$0xff]
          %v1292 = vld [vmem:[#allocation24 + $0xa0] sm:$0xff]
          %v1293 = vld [vmem:[#allocation24 + $0xa8] sm:$0xff]
          %v1294 = vld [vmem:[#allocation24 + $0xb0] sm:$0xff]
          %v1295 = vld [vmem:[#allocation24 + $0xb8] sm:$0xff]
          %v1296 = vld [vmem:[#allocation24 + $0xc0] sm:$0xff]
          %v1297 = vld [vmem:[#allocation24 + $0xc8] sm:$0xff]
          %v1298 = vld [vmem:[#allocation24 + $0xd0] sm:$0xff]
          %v1299 = vld [vmem:[#allocation24 + $0xd8] sm:$0xff]
          %v1300 = vld [vmem:[#allocation24 + $0xe0] sm:$0xff]
          %v1301 = vld [vmem:[#allocation24 + $0xe8] sm:$0xff]
          %v1302 = vld [vmem:[#allocation24 + $0xf0] sm:$0xff]
          %v1303 = vld [vmem:[#allocation24 + $0xf8] sm:$0xff]
          %v1304 = vld [vmem:[#allocation25] sm:$0x1]
          %v1306 = vperm.slane %v1304, 0
          %1308 = vmatpush.msra.mxu0 %v1287
          %1309 = vmatpush.msra.mxu0 %v1286
          %1310 = vmatpush.msra.mxu0 %v1285
          %1311 = vmatpush.msra.mxu0 %v1284
          %1312 = vmatpush.msra.mxu0 %v1283
          %1313 = vmatpush.msra.mxu0 %v1282
          %1314 = vmatpush.msra.mxu0 %v1281
          %1315 = vmatpush.msra.mxu0 %v1280
          %1316 = vmatpush.msra.mxu0 %v1279
          %1317 = vmatpush.msra.mxu0 %v1278
          %1318 = vmatpush.msra.mxu0 %v1277
          %1319 = vmatpush.msra.mxu0 %v1276
          %1320 = vmatpush.msra.mxu0 %v1275
          %1321 = vmatpush.msra.mxu0 %v1274
          %1322 = vmatpush.msra.mxu0 %v1273
          %1323 = vmatpush.msra.mxu0 %v1272
          %1324 = vmatmul.f32.gmra.mxu0 %v971
          %v1325 = vpop.f32.mrf.mxu0
          %v1326 = vadd.f32 %v1306, %v1325
          %1327 = vmatmul.f32.gmra.mxu0 %v972
          %v1328 = vpop.f32.mrf.mxu0
          %v1329 = vadd.f32 %v1306, %v1328
          %1330 = vmatmul.f32.gmra.mxu0 %v973
          %v1331 = vpop.f32.mrf.mxu0
          %v1332 = vadd.f32 %v1306, %v1331
          %1333 = vdwg.mxu0
          %1334 = vmatpush.msra.mxu0 %v1303
          %1335 = vmatpush.msra.mxu0 %v1302
          %1336 = vmatpush.msra.mxu0 %v1301
          %1337 = vmatpush.msra.mxu0 %v1300
          %1338 = vmatpush.msra.mxu0 %v1299
          %1339 = vmatpush.msra.mxu0 %v1298
          %1340 = vmatpush.msra.mxu0 %v1297
          %1341 = vmatpush.msra.mxu0 %v1296
          %1342 = vmatpush.msra.mxu0 %v1295
          %1343 = vmatpush.msra.mxu0 %v1294
          %1344 = vmatpush.msra.mxu0 %v1293
          %1345 = vmatpush.msra.mxu0 %v1292
          %1346 = vmatpush.msra.mxu0 %v1291
          %1347 = vmatpush.msra.mxu0 %v1290
          %1348 = vmatpush.msra.mxu0 %v1289
          %1349 = vmatpush.msra.mxu0 %v1288
          %1350 = vmatmul.f32.gmra.mxu0 %v1266
          %v1351 = vpop.f32.mrf.mxu0
          %v1352 = vadd.f32 %v1326, %v1351
          %1353 = vmatmul.f32.gmra.mxu0 %v1268
          %v1354 = vpop.f32.mrf.mxu0
          %v1355 = vadd.f32 %v1329, %v1354
          %1356 = vmatmul.f32.gmra.mxu0 %v1267
          %v1357 = vpop.f32.mrf.mxu0
          %v1358 = vadd.f32 %v1332, %v1357
          %1359 = vdwg.mxu0
          %v1360 = vmax.f32 %v1352, 0.0
          %v1361 = vmax.f32 %v1355, 0.0
          %v1362 = vmax.f32 %v1358, 0.0
          %1363 = vst [vmem:[#allocation2] sm:$0x3] %v919
          %1364 = vst.sshfl [vmem:[#allocation1] sm:$0xff pattern:$0x73625140] %v919
          %s1365 = scalar_lea.vmem [#allocation1], 1
          %v1366 = vld [vmem:[%s1365] ss:$4 sm:$0xff]
          %1368 = vst [vmem:[#allocation2 + $0x2] sm:$0x3] %v1366
          %1369 = vst.sshfl [vmem:[#allocation1] sm:$0xff pattern:$0x73625140] %v919
          %s1370 = scalar_lea.vmem [#allocation1], 2
          %v1371 = vld [vmem:[%s1370] ss:$4 sm:$0xff]
          %1373 = vst [vmem:[#allocation2 + $0x4] sm:$0x3] %v1371
          %1374 = vst.sshfl [vmem:[#allocation1] sm:$0xff pattern:$0x73625140] %v919
          %s1375 = scalar_lea.vmem [#allocation1], 3
          %v1376 = vld [vmem:[%s1375] ss:$4 sm:$0xff]
          %1378 = vst [vmem:[#allocation2 + $0x6] sm:$0x3] %v1376
          %1379 = vst [vmem:[#allocation2 + $0x8] sm:$0x3] %v920
          %1380 = vst.sshfl [vmem:[#allocation1] sm:$0xff pattern:$0x73625140] %v920
          %s1381 = scalar_lea.vmem [#allocation1], 1
          %v1382 = vld [vmem:[%s1381] ss:$4 sm:$0xff]
          %1384 = vst [vmem:[#allocation2 + $0xa] sm:$0x3] %v1382
          %1385 = vst.sshfl [vmem:[#allocation1] sm:$0xff pattern:$0x73625140] %v920
          %s1386 = scalar_lea.vmem [#allocation1], 2
          %v1387 = vld [vmem:[%s1386] ss:$4 sm:$0xff]
          %1389 = vst [vmem:[#allocation2 + $0xc] sm:$0x3] %v1387
          %1390 = vst.sshfl [vmem:[#allocation1] sm:$0xff pattern:$0x73625140] %v920
          %s1391 = scalar_lea.vmem [#allocation1], 3
          %v1392 = vld [vmem:[%s1391] ss:$4 sm:$0xff]
          %1394 = vst [vmem:[#allocation2 + $0xe] sm:$0x3] %v1392
          %1395 = vst [vmem:[#allocation2 + $0x10] sm:$0x3] %v921
          %1396 = vst.sshfl [vmem:[#allocation1] sm:$0xff pattern:$0x73625140] %v921
          %s1397 = scalar_lea.vmem [#allocation1], 1
          %v1398 = vld [vmem:[%s1397] ss:$4 sm:$0xff]
          %1400 = vst [vmem:[#allocation2 + $0x12] sm:$0x3] %v1398
          %1401 = vst.sshfl [vmem:[#allocation1] sm:$0xff pattern:$0x73625140] %v921
          %s1402 = scalar_lea.vmem [#allocation1], 2
          %v1403 = vld [vmem:[%s1402] ss:$4 sm:$0xff]
          %1405 = vst [vmem:[#allocation2 + $0x14] sm:$0x3] %v1403
          %1406 = vst.sshfl [vmem:[#allocation1] sm:$0xff pattern:$0x73625140] %v921
          %s1407 = scalar_lea.vmem [#allocation1], 3
          %v1408 = vld [vmem:[%s1407] ss:$4 sm:$0xff]
          %1410 = vst [vmem:[#allocation2 + $0x16] sm:$0x3] %v1408
          %1411 = vst [vmem:[#allocation2 + $0x18] sm:$0x3] %v971
          %1412 = vst.sshfl [vmem:[#allocation1] sm:$0xff pattern:$0x73625140] %v971
          %s1413 = scalar_lea.vmem [#allocation1], 1
          %v1414 = vld [vmem:[%s1413] ss:$4 sm:$0xff]
          %1416 = vst [vmem:[#allocation2 + $0x1a] sm:$0x3] %v1414
          %1417 = vst.sshfl [vmem:[#allocation1] sm:$0xff pattern:$0x73625140] %v971
          %s1418 = scalar_lea.vmem [#allocation1], 2
          %v1419 = vld [vmem:[%s1418] ss:$4 sm:$0xff]
          %1421 = vst [vmem:[#allocation2 + $0x1c] sm:$0x3] %v1419
          %1422 = vst.sshfl [vmem:[#allocation1] sm:$0xff pattern:$0x73625140] %v971
          %s1423 = scalar_lea.vmem [#allocation1], 3
          %v1424 = vld [vmem:[%s1423] ss:$4 sm:$0xff]
          %s1426 = scalar_lea.vmem [#allocation2], 30
          %1427 = vst [vmem:[%s1426] sm:$0x3] %v1424
          %1428 = vst [vmem:[%s1426 + $0x2] sm:$0x3] %v972
          %1429 = vst.sshfl [vmem:[#allocation1] sm:$0xff pattern:$0x73625140] %v972
          %s1430 = scalar_lea.vmem [#allocation1], 1
          %v1431 = vld [vmem:[%s1430] ss:$4 sm:$0xff]
          %1433 = vst [vmem:[%s1426 + $0x4] sm:$0x3] %v1431
          %1434 = vst.sshfl [vmem:[#allocation1] sm:$0xff pattern:$0x73625140] %v972
          %s1435 = scalar_lea.vmem [#allocation1], 2
          %v1436 = vld [vmem:[%s1435] ss:$4 sm:$0xff]
          %1438 = vst [vmem:[%s1426 + $0x6] sm:$0x3] %v1436
          %1439 = vst.sshfl [vmem:[#allocation1] sm:$0xff pattern:$0x73625140] %v972
          %s1440 = scalar_lea.vmem [#allocation1], 3
          %v1441 = vld [vmem:[%s1440] ss:$4 sm:$0xff]
          %1443 = vst [vmem:[%s1426 + $0x8] sm:$0x3] %v1441
          %1444 = vst [vmem:[%s1426 + $0xa] sm:$0x3] %v973
          %1445 = vst.sshfl [vmem:[#allocation1] sm:$0xff pattern:$0x73625140] %v973
          %s1446 = scalar_lea.vmem [#allocation1], 1
          %v1447 = vld [vmem:[%s1446] ss:$4 sm:$0xff]
          %1449 = vst [vmem:[%s1426 + $0xc] sm:$0x3] %v1447
          %1450 = vst.sshfl [vmem:[#allocation1] sm:$0xff pattern:$0x73625140] %v973
          %s1451 = scalar_lea.vmem [#allocation1], 2
          %v1452 = vld [vmem:[%s1451] ss:$4 sm:$0xff]
          %1454 = vst [vmem:[%s1426 + $0xe] sm:$0x3] %v1452
          %1455 = vst.sshfl [vmem:[#allocation1] sm:$0xff pattern:$0x73625140] %v973
          %s1456 = scalar_lea.vmem [#allocation1], 3
          %v1457 = vld [vmem:[%s1456] ss:$4 sm:$0xff]
          %1459 = vst [vmem:[%s1426 + $0x10] sm:$0x3] %v1457
          %1460 = vst [vmem:[%s1426 + $0x12] sm:$0x3] %v1056
          %1462 = vst.sshfl [vmem:[#allocation1] sm:$0xff pattern:$0x73625140] %v1056
          %s1463 = scalar_lea.vmem [#allocation1], 1
          %v1464 = vld [vmem:[%s1463] ss:$4 sm:$0xff]
          %1466 = vst [vmem:[%s1426 + $0x14] sm:$0x3] %v1464
          %1467 = vst.sshfl [vmem:[#allocation1] sm:$0xff pattern:$0x73625140] %v1056
          %s1468 = scalar_lea.vmem [#allocation1], 2
          %v1469 = vld [vmem:[%s1468] ss:$4 sm:$0xff]
          %1471 = vst [vmem:[%s1426 + $0x16] sm:$0x3] %v1469
          %1472 = vst.sshfl [vmem:[#allocation1] sm:$0xff pattern:$0x73625140] %v1056
          %s1473 = scalar_lea.vmem [#allocation1], 3
          %v1474 = vld [vmem:[%s1473] ss:$4 sm:$0xff]
          %1476 = vst [vmem:[%s1426 + $0x18] sm:$0x3] %v1474
          %1477 = vst [vmem:[%s1426 + $0x1a] sm:$0x3] %v1057
          %1479 = vst.sshfl [vmem:[#allocation1] sm:$0xff pattern:$0x73625140] %v1057
          %s1480 = scalar_lea.vmem [#allocation1], 1
          %v1481 = vld [vmem:[%s1480] ss:$4 sm:$0xff]
          %1483 = vst [vmem:[%s1426 + $0x1c] sm:$0x3] %v1481
          %1484 = vst.sshfl [vmem:[#allocation1] sm:$0xff pattern:$0x73625140] %v1057
          %s1485 = scalar_lea.vmem [#allocation1], 2
          %v1486 = vld [vmem:[%s1485] ss:$4 sm:$0xff]
          %s1488 = scalar_lea.vmem [#allocation2], 60
          %1489 = vst [vmem:[%s1488] sm:$0x3] %v1486
          %1490 = vst.sshfl [vmem:[#allocation1] sm:$0xff pattern:$0x73625140] %v1057
          %s1491 = scalar_lea.vmem [#allocation1], 3
          %v1492 = vld [vmem:[%s1491] ss:$4 sm:$0xff]
          %1494 = vst [vmem:[%s1488 + $0x2] sm:$0x3] %v1492
          %1495 = vst [vmem:[%s1488 + $0x4] sm:$0x3] %v1158
          %1497 = vst.sshfl [vmem:[#allocation1] sm:$0xff pattern:$0x73625140] %v1158
          %s1498 = scalar_lea.vmem [#allocation1], 1
          %v1499 = vld [vmem:[%s1498] ss:$4 sm:$0xff]
          %1501 = vst [vmem:[%s1488 + $0x6] sm:$0x3] %v1499
          %1502 = vst.sshfl [vmem:[#allocation1] sm:$0xff pattern:$0x73625140] %v1158
          %s1503 = scalar_lea.vmem [#allocation1], 2
          %v1504 = vld [vmem:[%s1503] ss:$4 sm:$0xff]
          %1506 = vst [vmem:[%s1488 + $0x8] sm:$0x3] %v1504
          %1507 = vst [vmem:[%s1488 + $0xa] sm:$0x3] %v1159
          %1509 = vst.sshfl [vmem:[#allocation1] sm:$0xff pattern:$0x73625140] %v1159
          %s1510 = scalar_lea.vmem [#allocation1], 1
          %v1511 = vld [vmem:[%s1510] ss:$4 sm:$0xff]
          %1513 = vst [vmem:[%s1488 + $0xc] sm:$0x3] %v1511
          %1514 = vst.sshfl [vmem:[#allocation1] sm:$0xff pattern:$0x73625140] %v1159
          %s1515 = scalar_lea.vmem [#allocation1], 2
          %v1516 = vld [vmem:[%s1515] ss:$4 sm:$0xff]
          %1518 = vst [vmem:[%s1488 + $0xe] sm:$0x3] %v1516
          %1519 = vst [vmem:[%s1488 + $0x10] sm:$0x3] %v1160
          %1521 = vst.sshfl [vmem:[#allocation1] sm:$0xff pattern:$0x73625140] %v1160
          %s1522 = scalar_lea.vmem [#allocation1], 1
          %v1523 = vld [vmem:[%s1522] ss:$4 sm:$0xff]
          %1525 = vst [vmem:[%s1488 + $0x12] sm:$0x3] %v1523
          %1526 = vst.sshfl [vmem:[#allocation1] sm:$0xff pattern:$0x73625140] %v1160
          %s1527 = scalar_lea.vmem [#allocation1], 2
          %v1528 = vld [vmem:[%s1527] ss:$4 sm:$0xff]
          %1530 = vst [vmem:[%s1488 + $0x14] sm:$0x3] %v1528
          %1531 = vst [vmem:[%s1488 + $0x16] sm:$0x3] %v1261
          %1533 = vst.sshfl [vmem:[#allocation1] sm:$0xff pattern:$0x73625140] %v1261
          %s1534 = scalar_lea.vmem [#allocation1], 1
          %v1535 = vld [vmem:[%s1534] ss:$4 sm:$0xff]
          %1537 = vst [vmem:[%s1488 + $0x18] sm:$0x3] %v1535
          %1538 = vst.sshfl [vmem:[#allocation1] sm:$0xff pattern:$0x73625140] %v1261
          %s1539 = scalar_lea.vmem [#allocation1], 2
          %v1540 = vld [vmem:[%s1539] ss:$4 sm:$0xff]
          %1542 = vst [vmem:[%s1488 + $0x1a] sm:$0x3] %v1540
          %1543 = vst.sshfl [vmem:[#allocation1] sm:$0xff pattern:$0x73625140] %v1261
          %s1544 = scalar_lea.vmem [#allocation1], 3
          %v1545 = vld [vmem:[%s1544] ss:$4 sm:$0xff]
          %1547 = vst [vmem:[%s1488 + $0x1c] sm:$0x3] %v1545
          %s1548 = scalar_lea.vmem [#allocation2], 90
          %1549 = vst [vmem:[%s1548] sm:$0x3] %v1262
          %1551 = vst.sshfl [vmem:[#allocation1] sm:$0xff pattern:$0x73625140] %v1262
          %s1552 = scalar_lea.vmem [#allocation1], 1
          %v1553 = vld [vmem:[%s1552] ss:$4 sm:$0xff]
          %1555 = vst [vmem:[%s1548 + $0x2] sm:$0x3] %v1553
          %1556 = vst.sshfl [vmem:[#allocation1] sm:$0xff pattern:$0x73625140] %v1262
          %s1557 = scalar_lea.vmem [#allocation1], 2
          %v1558 = vld [vmem:[%s1557] ss:$4 sm:$0xff]
          %1560 = vst [vmem:[%s1548 + $0x4] sm:$0x3] %v1558
          %1561 = vst.sshfl [vmem:[#allocation1] sm:$0xff pattern:$0x73625140] %v1262
          %s1562 = scalar_lea.vmem [#allocation1], 3
          %v1563 = vld [vmem:[%s1562] ss:$4 sm:$0xff]
          %1565 = vst [vmem:[%s1548 + $0x6] sm:$0x3] %v1563
          %1566 = vst [vmem:[%s1548 + $0x8] sm:$0x3] %v1263
          %1567 = vst [vmem:[%s1548 + $0xa] sm:$0x3] %v1360
          %1569 = vst.sshfl [vmem:[#allocation1] sm:$0xff pattern:$0x73625140] %v1360
          %s1570 = scalar_lea.vmem [#allocation1], 1
          %v1571 = vld [vmem:[%s1570] ss:$4 sm:$0xff]
          %1573 = vst [vmem:[%s1548 + $0xc] sm:$0x3] %v1571
          %1574 = vst.sshfl [vmem:[#allocation1] sm:$0xff pattern:$0x73625140] %v1360
          %s1575 = scalar_lea.vmem [#allocation1], 3
          %v1576 = vld [vmem:[%s1575] ss:$4 sm:$0xff]
          %1578 = vst [vmem:[%s1548 + $0xe] sm:$0x3] %v1576
          %1579 = vst [vmem:[%s1548 + $0x10] sm:$0x3] %v1361
          %1581 = vst.sshfl [vmem:[#allocation1] sm:$0xff pattern:$0x73625140] %v1361
          %s1582 = scalar_lea.vmem [#allocation1], 2
          %v1583 = vld [vmem:[%s1582] ss:$4 sm:$0xff]
          %1585 = vst [vmem:[%s1548 + $0x12] sm:$0x3] %v1583
          %1586 = vst.sshfl [vmem:[#allocation1] sm:$0xff pattern:$0x73625140] %v1361
          %s1587 = scalar_lea.vmem [#allocation1], 3
          %v1588 = vld [vmem:[%s1587] ss:$4 sm:$0xff]
          %1590 = vst [vmem:[%s1548 + $0x14] sm:$0x3] %v1588
          %1592 = vst.sshfl [vmem:[#allocation1] sm:$0xff pattern:$0x73625140] %v1362
          %s1593 = scalar_lea.vmem [#allocation1], 1
          %v1594 = vld [vmem:[%s1593] ss:$4 sm:$0xff]
          %1596 = vst [vmem:[%s1548 + $0x16] sm:$0x3] %v1594
          %1597 = vst.sshfl [vmem:[#allocation1] sm:$0xff pattern:$0x73625140] %v1362
          %s1598 = scalar_lea.vmem [#allocation1], 2
          %v1599 = vld [vmem:[%s1598] ss:$4 sm:$0xff]
          %1601 = vst [vmem:[%s1548 + $0x18] sm:$0x3] %v1599
        $region168: #{tpu_custom_call.1} parent=91 // pred_fallthru
          _
        %s1602 = smul.u32 %s38, 15
        %s1603 = smul.addr %s1602, 2
        %s1604 = scalar_lea.vmem [#allocation2], %s1603
        %v1605 = vld [vmem:[%s1604] sm:$0xff]
        %v1606 = vld [vmem:[%s1604 + $0x8] sm:$0xff]
        %v1607 = vld [vmem:[%s1604 + $0x10] sm:$0xff]
        %v1608 = vld [vmem:[%s1604 + $0x18] sm:$0x3f]
        %v1609 = vld [vmem:[#allocation3] sm:$0xf]
        %1614 = vst [vmem:[#allocation1] ss:$4 sm:$0xff] %v1605
        %s1615 = scalar_lea.vmem [#allocation1], 32
        %1616 = vst [vmem:[%s1615] ss:$4 sm:$0xff] %v1606
        %v1617 = vld.sshfl [vmem:[#allocation1] sm:$0xff pattern:$0x73625140]
        %v1618 = vld.sshfl [vmem:[#allocation1 + $0x8] sm:$0xff pattern:$0x73625140]
        %v1619 = vld.sshfl [vmem:[#allocation1 + $0x10] sm:$0xff pattern:$0x73625140]
        %v1620 = vld.sshfl [vmem:[#allocation1 + $0x18] sm:$0xff pattern:$0x73625140]
        %v1621 = vld.sshfl [vmem:[#allocation1 + $0x20] sm:$0xff pattern:$0x73625140]
        %v1622 = vld.sshfl [vmem:[#allocation1 + $0x28] sm:$0xff pattern:$0x73625140]
        %v1623 = vld.sshfl [vmem:[#allocation1 + $0x30] sm:$0xff pattern:$0x73625140]
        %v1624 = vld.sshfl [vmem:[#allocation1 + $0x38] sm:$0xff pattern:$0x73625140]
        %1625 = vst [vmem:[#allocation1] ss:$4 sm:$0xff] %v1607
        %1626 = vst [vmem:[%s1615] ss:$4 sm:$0xff] %v1608
        %v1627 = vld.sshfl [vmem:[#allocation1] sm:$0xff pattern:$0x73625140]
        %v1628 = vld.sshfl [vmem:[#allocation1 + $0x8] sm:$0xff pattern:$0x73625140]
        %v1629 = vld.sshfl [vmem:[#allocation1 + $0x10] sm:$0xff pattern:$0x73625140]
        %v1630 = vld.sshfl [vmem:[#allocation1 + $0x18] sm:$0xff pattern:$0x73625140]
        %v1631 = vld.sshfl [vmem:[#allocation1 + $0x20] sm:$0xff pattern:$0x73625140]
        %v1632 = vld.sshfl [vmem:[#allocation1 + $0x28] sm:$0xff pattern:$0x73625140]
        %v1633 = vld.sshfl [vmem:[#allocation1 + $0x30] sm:$0xff pattern:$0x73625140]
        %v1649 = vpack.c.bf16 %v1617, %v1617
        %v1650 = vpack.c.bf16 %v1618, %v1618
        %v1651 = vpack.c.bf16 %v1619, %v1619
        %v1652 = vpack.c.bf16 %v1620, %v1620
        %v1653 = vpack.c.bf16 %v1621, %v1621
        %v1654 = vpack.c.bf16 %v1622, %v1622
        %v1655 = vpack.c.bf16 %v1623, %v1623
        %v1656 = vpack.c.bf16 %v1624, %v1624
        %v1657 = vpack.c.bf16 %v1627, %v1627
        %v1658 = vpack.c.bf16 %v1628, %v1628
        %v1659 = vpack.c.bf16 %v1629, %v1629
        %v1660 = vpack.c.bf16 %v1630, %v1630
        %v1661 = vpack.c.bf16 %v1631, %v1631
        %v1662 = vpack.c.bf16 %v1632, %v1632
        %v1663 = vpack.c.bf16 %v1633, %v1633
        %v1664 = vld [vmem:[%s782] sm:$0xff]
        %v1665 = vld [vmem:[%s782 + $0x8] sm:$0xff]
        %v1666 = vld [vmem:[%s782 + $0x10] sm:$0xff]
        %v1667 = vld [vmem:[%s782 + $0x18] sm:$0xff]
        %v1668 = vld [vmem:[%s782 + $0x20] sm:$0xff]
        %v1669 = vld [vmem:[%s782 + $0x28] sm:$0xff]
        %v1670 = vld [vmem:[%s782 + $0x30] sm:$0xff]
        %v1671 = vld [vmem:[%s782 + $0x38] sm:$0xff]
        %v1672 = vld [vmem:[%s782 + $0x40] sm:$0xff]
        %v1673 = vld [vmem:[%s782 + $0x48] sm:$0xff]
        %v1674 = vld [vmem:[%s782 + $0x50] sm:$0xff]
        %v1675 = vld [vmem:[%s782 + $0x58] sm:$0xff]
        %v1676 = vld [vmem:[%s782 + $0x60] sm:$0xff]
        %v1677 = vld [vmem:[%s782 + $0x68] sm:$0xff]
        %v1678 = vld [vmem:[%s782 + $0x70] sm:$0xff]
        %v1679 = vld [vmem:[%s782 + $0x78] sm:$0xff]
        %v1680 = vld [vmem:[%s782 + $0x80] sm:$0xff]
        %v1681 = vld [vmem:[%s782 + $0x88] sm:$0xff]
        %v1682 = vld [vmem:[%s782 + $0x90] sm:$0xff]
        %v1683 = vld [vmem:[%s782 + $0x98] sm:$0xff]
        %v1684 = vld [vmem:[%s782 + $0xa0] sm:$0xff]
        %v1685 = vld [vmem:[%s782 + $0xa8] sm:$0xff]
        %v1686 = vld [vmem:[%s782 + $0xb0] sm:$0xff]
        %v1687 = vld [vmem:[%s782 + $0xb8] sm:$0xff]
        %v1688 = vld [vmem:[%s782 + $0xc0] sm:$0xff]
        %v1689 = vld [vmem:[%s782 + $0xc8] sm:$0xff]
        %v1690 = vld [vmem:[%s782 + $0xd0] sm:$0xff]
        %v1691 = vld [vmem:[%s782 + $0xd8] sm:$0xff]
        %v1692 = vld [vmem:[%s782 + $0xe0] sm:$0xff]
        %v1693 = vld [vmem:[%s782 + $0xe8] sm:$0xff]
        %v1694 = vld [vmem:[%s782 + $0xf0] sm:$0xff]
        %v1695 = vld [vmem:[%s782 + $0xf8] sm:$0xff]
        %v1696 = vld [vmem:[%s782 + $0x100] sm:$0xff]
        %v1697 = vld [vmem:[%s782 + $0x108] sm:$0xff]
        %v1698 = vld [vmem:[%s782 + $0x110] sm:$0xff]
        %v1699 = vld [vmem:[%s782 + $0x118] sm:$0xff]
        %v1700 = vld [vmem:[%s782 + $0x120] sm:$0xff]
        %v1701 = vld [vmem:[%s782 + $0x128] sm:$0xff]
        %v1702 = vld [vmem:[%s782 + $0x130] sm:$0xff]
        %v1703 = vld [vmem:[%s782 + $0x138] sm:$0xff]
        %v1704 = vld [vmem:[%s782 + $0x140] sm:$0xff]
        %v1705 = vld [vmem:[%s782 + $0x148] sm:$0xff]
        %v1706 = vld [vmem:[%s782 + $0x150] sm:$0xff]
        %v1707 = vld [vmem:[%s782 + $0x158] sm:$0xff]
        %v1708 = vld [vmem:[%s782 + $0x160] sm:$0xff]
        %v1709 = vld [vmem:[%s782 + $0x168] sm:$0xff]
        %v1710 = vld [vmem:[%s782 + $0x170] sm:$0xff]
        %v1711 = vld [vmem:[%s782 + $0x178] sm:$0xff]
        %v1712 = vld [vmem:[%s782 + $0x180] sm:$0xff]
        %v1713 = vld [vmem:[%s782 + $0x188] sm:$0xff]
        %v1714 = vld [vmem:[%s782 + $0x190] sm:$0xff]
        %v1715 = vld [vmem:[%s782 + $0x198] sm:$0xff]
        %v1716 = vld [vmem:[%s782 + $0x1a0] sm:$0xff]
        %v1717 = vld [vmem:[%s782 + $0x1a8] sm:$0xff]
        %v1718 = vld [vmem:[%s782 + $0x1b0] sm:$0xff]
        %v1719 = vld [vmem:[%s782 + $0x1b8] sm:$0xff]
        %v1720 = vld [vmem:[%s782 + $0x1c0] sm:$0xff]
        %v1721 = vld [vmem:[%s782 + $0x1c8] sm:$0xff]
        %v1722 = vld [vmem:[%s782 + $0x1d0] sm:$0xff]
        %v1723 = vld [vmem:[%s782 + $0x1d8] sm:$0xff]
        %v1724 = vld [vmem:[%s782 + $0x1e0] sm:$0xff]
        %v1725 = vld [vmem:[%s782 + $0x1e8] sm:$0xff]
        %v1726 = vld [vmem:[%s782 + $0x1f0] sm:$0xff]
        %v1727 = vld [vmem:[%s782 + $0x1f8] sm:$0xff]
        %v1728 = vld [vmem:[%s782 + $0x200] sm:$0xff]
        %v1729 = vld [vmem:[%s782 + $0x208] sm:$0xff]
        %v1730 = vld [vmem:[%s782 + $0x210] sm:$0xff]
        %v1731 = vld [vmem:[%s782 + $0x218] sm:$0xff]
        %v1732 = vld [vmem:[%s782 + $0x220] sm:$0xff]
        %v1733 = vld [vmem:[%s782 + $0x228] sm:$0xff]
        %v1734 = vld [vmem:[%s782 + $0x230] sm:$0xff]
        %v1735 = vld [vmem:[%s782 + $0x238] sm:$0xff]
        %v1736 = vld [vmem:[%s782 + $0x240] sm:$0xff]
        %v1737 = vld [vmem:[%s782 + $0x248] sm:$0xff]
        %v1738 = vld [vmem:[%s782 + $0x250] sm:$0xff]
        %v1739 = vld [vmem:[%s782 + $0x258] sm:$0xff]
        %v1740 = vld [vmem:[%s782 + $0x260] sm:$0xff]
        %v1741 = vld [vmem:[%s782 + $0x268] sm:$0xff]
        %v1742 = vld [vmem:[%s782 + $0x270] sm:$0xff]
        %v1743 = vld [vmem:[%s782 + $0x278] sm:$0xff]
        %v1744 = vld [vmem:[%s782 + $0x280] sm:$0xff]
        %v1745 = vld [vmem:[%s782 + $0x288] sm:$0xff]
        %v1746 = vld [vmem:[%s782 + $0x290] sm:$0xff]
        %v1747 = vld [vmem:[%s782 + $0x298] sm:$0xff]
        %v1748 = vld [vmem:[%s782 + $0x2a0] sm:$0xff]
        %v1749 = vld [vmem:[%s782 + $0x2a8] sm:$0xff]
        %v1750 = vld [vmem:[%s782 + $0x2b0] sm:$0xff]
        %v1751 = vld [vmem:[%s782 + $0x2b8] sm:$0xff]
        %v1752 = vld [vmem:[%s782 + $0x2c0] sm:$0xff]
        %v1753 = vld [vmem:[%s782 + $0x2c8] sm:$0xff]
        %v1754 = vld [vmem:[%s782 + $0x2d0] sm:$0xff]
        %v1755 = vld [vmem:[%s782 + $0x2d8] sm:$0xff]
        %v1756 = vld [vmem:[%s782 + $0x2e0] sm:$0xff]
        %v1757 = vld [vmem:[%s782 + $0x2e8] sm:$0xff]
        %v1758 = vld [vmem:[%s782 + $0x2f0] sm:$0xff]
        %v1759 = vld [vmem:[%s782 + $0x2f8] sm:$0xff]
        %v1760 = vld [vmem:[%s782 + $0x300] sm:$0xff]
        %v1761 = vld [vmem:[%s782 + $0x308] sm:$0xff]
        %v1762 = vld [vmem:[%s782 + $0x310] sm:$0xff]
        %v1763 = vld [vmem:[%s782 + $0x318] sm:$0xff]
        %v1764 = vld [vmem:[%s782 + $0x320] sm:$0xff]
        %v1765 = vld [vmem:[%s782 + $0x328] sm:$0xff]
        %v1766 = vld [vmem:[%s782 + $0x330] sm:$0xff]
        %v1767 = vld [vmem:[%s782 + $0x338] sm:$0xff]
        %v1768 = vld [vmem:[%s782 + $0x340] sm:$0xff]
        %v1769 = vld [vmem:[%s782 + $0x348] sm:$0xff]
        %v1770 = vld [vmem:[%s782 + $0x350] sm:$0xff]
        %v1771 = vld [vmem:[%s782 + $0x358] sm:$0xff]
        %v1772 = vld [vmem:[%s782 + $0x360] sm:$0xff]
        %v1773 = vld [vmem:[%s782 + $0x368] sm:$0xff]
        %v1774 = vld [vmem:[%s782 + $0x370] sm:$0xff]
        %v1775 = vld [vmem:[%s782 + $0x378] sm:$0xff]
        %v1776 = vld [vmem:[%s782 + $0x380] sm:$0xff]
        %v1777 = vld [vmem:[%s782 + $0x388] sm:$0xff]
        %v1778 = vld [vmem:[%s782 + $0x390] sm:$0xff]
        %v1779 = vld [vmem:[%s782 + $0x398] sm:$0xff]
        %v1780 = vld [vmem:[%s782 + $0x3a0] sm:$0xff]
        %v1781 = vld [vmem:[%s782 + $0x3a8] sm:$0xff]
        %v1782 = vld [vmem:[%s782 + $0x3b0] sm:$0xff]
        %v1783 = vld [vmem:[%s782 + $0x3b8] sm:$0xff]
        %v1784 = vld [vmem:[%s782 + $0x3c0] sm:$0xff]
        %v1785 = vld [vmem:[%s782 + $0x3c8] sm:$0xff]
        %v1786 = vld [vmem:[%s782 + $0x3d0] sm:$0xff]
        %v1787 = vld [vmem:[%s782 + $0x3d8] sm:$0xff]
        %v1788 = vld [vmem:[%s782 + $0x3e0] sm:$0xff]
        %v1789 = vld [vmem:[%s782 + $0x3e8] sm:$0xff]
        %v1790 = vld [vmem:[%s782 + $0x3f0] sm:$0xff]
        %v1791 = vld [vmem:[%s782 + $0x3f8] sm:$0xff]
        %v1792 = vld [vmem:[%s782 + $0x400] sm:$0xff]
        %v1793 = vld [vmem:[%s782 + $0x408] sm:$0xff]
        %v1794 = vld [vmem:[%s782 + $0x410] sm:$0xff]
        %v1795 = vld [vmem:[%s782 + $0x418] sm:$0xff]
        %v1796 = vld [vmem:[%s782 + $0x420] sm:$0xff]
        %v1797 = vld [vmem:[%s782 + $0x428] sm:$0xff]
        %v1798 = vld [vmem:[%s782 + $0x430] sm:$0xff]
        %v1799 = vld [vmem:[%s782 + $0x438] sm:$0xff]
        %v1800 = vld [vmem:[%s782 + $0x440] sm:$0xff]
        %v1801 = vld [vmem:[%s782 + $0x448] sm:$0xff]
        %v1802 = vld [vmem:[%s782 + $0x450] sm:$0xff]
        %v1803 = vld [vmem:[%s782 + $0x458] sm:$0xff]
        %v1804 = vld [vmem:[%s782 + $0x460] sm:$0xff]
        %v1805 = vld [vmem:[%s782 + $0x468] sm:$0xff]
        %v1806 = vld [vmem:[%s782 + $0x470] sm:$0xff]
        %v1807 = vld [vmem:[%s782 + $0x478] sm:$0xff]
        %v1808 = vld [vmem:[%s782 + $0x480] sm:$0xff]
        %v1809 = vld [vmem:[%s782 + $0x488] sm:$0xff]
        %v1810 = vld [vmem:[%s782 + $0x490] sm:$0xff]
        %v1811 = vld [vmem:[%s782 + $0x498] sm:$0xff]
        %v1812 = vld [vmem:[%s782 + $0x4a0] sm:$0xff]
        %v1813 = vld [vmem:[%s782 + $0x4a8] sm:$0xff]
        %v1814 = vld [vmem:[%s782 + $0x4b0] sm:$0xff]
        %v1815 = vld [vmem:[%s782 + $0x4b8] sm:$0xff]
        %v1816 = vld [vmem:[%s782 + $0x4c0] sm:$0xff]
        %v1817 = vld [vmem:[%s782 + $0x4c8] sm:$0xff]
        %v1818 = vld [vmem:[%s782 + $0x4d0] sm:$0xff]
        %v1819 = vld [vmem:[%s782 + $0x4d8] sm:$0xff]
        %v1820 = vld [vmem:[%s782 + $0x4e0] sm:$0xff]
        %v1821 = vld [vmem:[%s782 + $0x4e8] sm:$0xff]
        %v1822 = vld [vmem:[%s782 + $0x4f0] sm:$0xff]
        %v1823 = vld [vmem:[%s782 + $0x4f8] sm:$0xff]
        %v1824 = vld [vmem:[%s782 + $0x500] sm:$0xff]
        %v1825 = vld [vmem:[%s782 + $0x508] sm:$0xff]
        %v1826 = vld [vmem:[%s782 + $0x510] sm:$0xff]
        %v1827 = vld [vmem:[%s782 + $0x518] sm:$0xff]
        %v1828 = vld [vmem:[%s782 + $0x520] sm:$0xff]
        %v1829 = vld [vmem:[%s782 + $0x528] sm:$0xff]
        %v1830 = vld [vmem:[%s782 + $0x530] sm:$0xff]
        %v1831 = vld [vmem:[%s782 + $0x538] sm:$0xff]
        %v1832 = vld [vmem:[%s782 + $0x540] sm:$0xff]
        %v1833 = vld [vmem:[%s782 + $0x548] sm:$0xff]
        %v1834 = vld [vmem:[%s782 + $0x550] sm:$0xff]
        %v1835 = vld [vmem:[%s782 + $0x558] sm:$0xff]
        %v1836 = vld [vmem:[%s782 + $0x560] sm:$0xff]
        %v1837 = vld [vmem:[%s782 + $0x568] sm:$0xff]
        %v1838 = vld [vmem:[%s782 + $0x570] sm:$0xff]
        %v1839 = vld [vmem:[%s782 + $0x578] sm:$0xff]
        %v1840 = vld [vmem:[%s782 + $0x580] sm:$0xff]
        %v1841 = vld [vmem:[%s782 + $0x588] sm:$0xff]
        %v1842 = vld [vmem:[%s782 + $0x590] sm:$0xff]
        %v1843 = vld [vmem:[%s782 + $0x598] sm:$0xff]
        %v1844 = vld [vmem:[%s782 + $0x5a0] sm:$0xff]
        %v1845 = vld [vmem:[%s782 + $0x5a8] sm:$0xff]
        %v1846 = vld [vmem:[%s782 + $0x5b0] sm:$0xff]
        %v1847 = vld [vmem:[%s782 + $0x5b8] sm:$0xff]
        %v1848 = vld [vmem:[%s782 + $0x5c0] sm:$0xff]
        %v1849 = vld [vmem:[%s782 + $0x5c8] sm:$0xff]
        %v1850 = vld [vmem:[%s782 + $0x5d0] sm:$0xff]
        %v1851 = vld [vmem:[%s782 + $0x5d8] sm:$0xff]
        %v1852 = vld [vmem:[%s782 + $0x5e0] sm:$0xff]
        %v1853 = vld [vmem:[%s782 + $0x5e8] sm:$0xff]
        %v1854 = vld [vmem:[%s782 + $0x5f0] sm:$0xff]
        %v1855 = vld [vmem:[%s782 + $0x5f8] sm:$0xff]
        %v1856 = vld [vmem:[%s782 + $0x600] sm:$0xff]
        %v1857 = vld [vmem:[%s782 + $0x608] sm:$0xff]
        %v1858 = vld [vmem:[%s782 + $0x610] sm:$0xff]
        %v1859 = vld [vmem:[%s782 + $0x618] sm:$0xff]
        %v1860 = vld [vmem:[%s782 + $0x620] sm:$0xff]
        %v1861 = vld [vmem:[%s782 + $0x628] sm:$0xff]
        %v1862 = vld [vmem:[%s782 + $0x630] sm:$0xff]
        %v1863 = vld [vmem:[%s782 + $0x638] sm:$0xff]
        %v1864 = vld [vmem:[%s782 + $0x640] sm:$0xff]
        %v1865 = vld [vmem:[%s782 + $0x648] sm:$0xff]
        %v1866 = vld [vmem:[%s782 + $0x650] sm:$0xff]
        %v1867 = vld [vmem:[%s782 + $0x658] sm:$0xff]
        %v1868 = vld [vmem:[%s782 + $0x660] sm:$0xff]
        %v1869 = vld [vmem:[%s782 + $0x668] sm:$0xff]
        %v1870 = vld [vmem:[%s782 + $0x670] sm:$0xff]
        %v1871 = vld [vmem:[%s782 + $0x678] sm:$0xff]
        %v1872 = vld [vmem:[%s782 + $0x680] sm:$0xff]
        %v1873 = vld [vmem:[%s782 + $0x688] sm:$0xff]
        %v1874 = vld [vmem:[%s782 + $0x690] sm:$0xff]
        %v1875 = vld [vmem:[%s782 + $0x698] sm:$0xff]
        %v1876 = vld [vmem:[%s782 + $0x6a0] sm:$0xff]
        %v1877 = vld [vmem:[%s782 + $0x6a8] sm:$0xff]
        %v1878 = vld [vmem:[%s782 + $0x6b0] sm:$0xff]
        %v1879 = vld [vmem:[%s782 + $0x6b8] sm:$0xff]
        %v1880 = vld [vmem:[%s782 + $0x6c0] sm:$0xff]
        %v1881 = vld [vmem:[%s782 + $0x6c8] sm:$0xff]
        %v1882 = vld [vmem:[%s782 + $0x6d0] sm:$0xff]
        %v1883 = vld [vmem:[%s782 + $0x6d8] sm:$0xff]
        %v1884 = vld [vmem:[%s782 + $0x6e0] sm:$0xff]
        %v1885 = vld [vmem:[%s782 + $0x6e8] sm:$0xff]
        %v1886 = vld [vmem:[%s782 + $0x6f0] sm:$0xff]
        %v1887 = vld [vmem:[%s782 + $0x6f8] sm:$0xff]
        %v1888 = vld [vmem:[%s782 + $0x700] sm:$0xff]
        %v1889 = vld [vmem:[%s782 + $0x708] sm:$0xff]
        %v1890 = vld [vmem:[%s782 + $0x710] sm:$0xff]
        %v1891 = vld [vmem:[%s782 + $0x718] sm:$0xff]
        %v1892 = vld [vmem:[%s782 + $0x720] sm:$0xff]
        %v1893 = vld [vmem:[%s782 + $0x728] sm:$0xff]
        %v1894 = vld [vmem:[%s782 + $0x730] sm:$0xff]
        %v1895 = vld [vmem:[%s782 + $0x738] sm:$0xff]
        %v1896 = vld [vmem:[%s782 + $0x740] sm:$0xff]
        %v1897 = vld [vmem:[%s782 + $0x748] sm:$0xff]
        %v1898 = vld [vmem:[%s782 + $0x750] sm:$0xff]
        %v1899 = vld [vmem:[%s782 + $0x758] sm:$0xff]
        %v1900 = vld [vmem:[%s782 + $0x760] sm:$0xff]
        %v1901 = vld [vmem:[%s782 + $0x768] sm:$0xff]
        %v1902 = vld [vmem:[%s782 + $0x770] sm:$0xff]
        %v1903 = vld [vmem:[%s782 + $0x778] sm:$0xff]
        %v2144 = vunpack.c.l.b16 %v1664
        %v2145 = vunpack.c.h.b16 %v1664
        %v2146 = vunpack.c.l.b16 %v1665
        %v2147 = vunpack.c.h.b16 %v1665
        %v2148 = vunpack.c.l.b16 %v1666
        %v2149 = vunpack.c.h.b16 %v1666
        %v2150 = vunpack.c.l.b16 %v1667
        %v2151 = vunpack.c.h.b16 %v1667
        %v2152 = vunpack.c.l.b16 %v1668
        %v2153 = vunpack.c.h.b16 %v1668
        %v2154 = vunpack.c.l.b16 %v1669
        %v2155 = vunpack.c.h.b16 %v1669
        %v2156 = vunpack.c.l.b16 %v1670
        %v2157 = vunpack.c.h.b16 %v1670
        %v2158 = vunpack.c.l.b16 %v1671
        %v2159 = vunpack.c.h.b16 %v1671
        %v2160 = vunpack.c.l.b16 %v1672
        %v2161 = vunpack.c.h.b16 %v1672
        %v2162 = vunpack.c.l.b16 %v1673
        %v2163 = vunpack.c.h.b16 %v1673
        %v2164 = vunpack.c.l.b16 %v1674
        %v2165 = vunpack.c.h.b16 %v1674
        %v2166 = vunpack.c.l.b16 %v1675
        %v2167 = vunpack.c.h.b16 %v1675
        %v2168 = vunpack.c.l.b16 %v1676
        %v2169 = vunpack.c.h.b16 %v1676
        %v2170 = vunpack.c.l.b16 %v1677
        %v2171 = vunpack.c.h.b16 %v1677
        %v2172 = vunpack.c.l.b16 %v1678
        %v2173 = vunpack.c.h.b16 %v1678
        %v2174 = vunpack.c.l.b16 %v1679
        %v2175 = vunpack.c.h.b16 %v1679
        %v2176 = vunpack.c.l.b16 %v1680
        %v2177 = vunpack.c.h.b16 %v1680
        %v2178 = vunpack.c.l.b16 %v1681
        %v2179 = vunpack.c.h.b16 %v1681
        %v2180 = vunpack.c.l.b16 %v1682
        %v2181 = vunpack.c.h.b16 %v1682
        %v2182 = vunpack.c.l.b16 %v1683
        %v2183 = vunpack.c.h.b16 %v1683
        %v2184 = vunpack.c.l.b16 %v1684
        %v2185 = vunpack.c.h.b16 %v1684
        %v2186 = vunpack.c.l.b16 %v1685
        %v2187 = vunpack.c.h.b16 %v1685
        %v2188 = vunpack.c.l.b16 %v1686
        %v2189 = vunpack.c.h.b16 %v1686
        %v2190 = vunpack.c.l.b16 %v1687
        %v2191 = vunpack.c.h.b16 %v1687
        %v2192 = vunpack.c.l.b16 %v1688
        %v2193 = vunpack.c.h.b16 %v1688
        %v2194 = vunpack.c.l.b16 %v1689
        %v2195 = vunpack.c.h.b16 %v1689
        %v2196 = vunpack.c.l.b16 %v1690
        %v2197 = vunpack.c.h.b16 %v1690
        %v2198 = vunpack.c.l.b16 %v1691
        %v2199 = vunpack.c.h.b16 %v1691
        %v2200 = vunpack.c.l.b16 %v1692
        %v2201 = vunpack.c.h.b16 %v1692
        %v2202 = vunpack.c.l.b16 %v1693
        %v2203 = vunpack.c.h.b16 %v1693
        %v2204 = vunpack.c.l.b16 %v1694
        %v2205 = vunpack.c.h.b16 %v1694
        %v2206 = vunpack.c.l.b16 %v1695
        %v2207 = vunpack.c.h.b16 %v1695
        %v2208 = vunpack.c.l.b16 %v1696
        %v2209 = vunpack.c.h.b16 %v1696
        %v2210 = vunpack.c.l.b16 %v1697
        %v2211 = vunpack.c.h.b16 %v1697
        %v2212 = vunpack.c.l.b16 %v1698
        %v2213 = vunpack.c.h.b16 %v1698
        %v2214 = vunpack.c.l.b16 %v1699
        %v2215 = vunpack.c.h.b16 %v1699
        %v2216 = vunpack.c.l.b16 %v1700
        %v2217 = vunpack.c.h.b16 %v1700
        %v2218 = vunpack.c.l.b16 %v1701
        %v2219 = vunpack.c.h.b16 %v1701
        %v2220 = vunpack.c.l.b16 %v1702
        %v2221 = vunpack.c.h.b16 %v1702
        %v2222 = vunpack.c.l.b16 %v1703
        %v2223 = vunpack.c.h.b16 %v1703
        %v2224 = vunpack.c.l.b16 %v1704
        %v2225 = vunpack.c.h.b16 %v1704
        %v2226 = vunpack.c.l.b16 %v1705
        %v2227 = vunpack.c.h.b16 %v1705
        %v2228 = vunpack.c.l.b16 %v1706
        %v2229 = vunpack.c.h.b16 %v1706
        %v2230 = vunpack.c.l.b16 %v1707
        %v2231 = vunpack.c.h.b16 %v1707
        %v2232 = vunpack.c.l.b16 %v1708
        %v2233 = vunpack.c.h.b16 %v1708
        %v2234 = vunpack.c.l.b16 %v1709
        %v2235 = vunpack.c.h.b16 %v1709
        %v2236 = vunpack.c.l.b16 %v1710
        %v2237 = vunpack.c.h.b16 %v1710
        %v2238 = vunpack.c.l.b16 %v1711
        %v2239 = vunpack.c.h.b16 %v1711
        %v2240 = vunpack.c.l.b16 %v1712
        %v2241 = vunpack.c.h.b16 %v1712
        %v2242 = vunpack.c.l.b16 %v1713
        %v2243 = vunpack.c.h.b16 %v1713
        %v2244 = vunpack.c.l.b16 %v1714
        %v2245 = vunpack.c.h.b16 %v1714
        %v2246 = vunpack.c.l.b16 %v1715
        %v2247 = vunpack.c.h.b16 %v1715
        %v2248 = vunpack.c.l.b16 %v1716
        %v2249 = vunpack.c.h.b16 %v1716
        %v2250 = vunpack.c.l.b16 %v1717
        %v2251 = vunpack.c.h.b16 %v1717
        %v2252 = vunpack.c.l.b16 %v1718
        %v2253 = vunpack.c.h.b16 %v1718
        %v2254 = vunpack.c.l.b16 %v1719
        %v2255 = vunpack.c.h.b16 %v1719
        %v2256 = vunpack.c.l.b16 %v1720
        %v2257 = vunpack.c.h.b16 %v1720
        %v2258 = vunpack.c.l.b16 %v1721
        %v2259 = vunpack.c.h.b16 %v1721
        %v2260 = vunpack.c.l.b16 %v1722
        %v2261 = vunpack.c.h.b16 %v1722
        %v2262 = vunpack.c.l.b16 %v1723
        %v2263 = vunpack.c.h.b16 %v1723
        %v2264 = vunpack.c.l.b16 %v1724
        %v2265 = vunpack.c.h.b16 %v1724
        %v2266 = vunpack.c.l.b16 %v1725
        %v2267 = vunpack.c.h.b16 %v1725
        %v2268 = vunpack.c.l.b16 %v1726
        %v2269 = vunpack.c.h.b16 %v1726
        %v2270 = vunpack.c.l.b16 %v1727
        %v2271 = vunpack.c.h.b16 %v1727
        %v2272 = vunpack.c.l.b16 %v1728
        %v2273 = vunpack.c.h.b16 %v1728
        %v2274 = vunpack.c.l.b16 %v1729
        %v2275 = vunpack.c.h.b16 %v1729
        %v2276 = vunpack.c.l.b16 %v1730
        %v2277 = vunpack.c.h.b16 %v1730
        %v2278 = vunpack.c.l.b16 %v1731
        %v2279 = vunpack.c.h.b16 %v1731
        %v2280 = vunpack.c.l.b16 %v1732
        %v2281 = vunpack.c.h.b16 %v1732
        %v2282 = vunpack.c.l.b16 %v1733
        %v2283 = vunpack.c.h.b16 %v1733
        %v2284 = vunpack.c.l.b16 %v1734
        %v2285 = vunpack.c.h.b16 %v1734
        %v2286 = vunpack.c.l.b16 %v1735
        %v2287 = vunpack.c.h.b16 %v1735
        %v2288 = vunpack.c.l.b16 %v1736
        %v2289 = vunpack.c.h.b16 %v1736
        %v2290 = vunpack.c.l.b16 %v1737
        %v2291 = vunpack.c.h.b16 %v1737
        %v2292 = vunpack.c.l.b16 %v1738
        %v2293 = vunpack.c.h.b16 %v1738
        %v2294 = vunpack.c.l.b16 %v1739
        %v2295 = vunpack.c.h.b16 %v1739
        %v2296 = vunpack.c.l.b16 %v1740
        %v2297 = vunpack.c.h.b16 %v1740
        %v2298 = vunpack.c.l.b16 %v1741
        %v2299 = vunpack.c.h.b16 %v1741
        %v2300 = vunpack.c.l.b16 %v1742
        %v2301 = vunpack.c.h.b16 %v1742
        %v2302 = vunpack.c.l.b16 %v1743
        %v2303 = vunpack.c.h.b16 %v1743
        %v2304 = vunpack.c.l.b16 %v1744
        %v2305 = vunpack.c.h.b16 %v1744
        %v2306 = vunpack.c.l.b16 %v1745
        %v2307 = vunpack.c.h.b16 %v1745
        %v2308 = vunpack.c.l.b16 %v1746
        %v2309 = vunpack.c.h.b16 %v1746
        %v2310 = vunpack.c.l.b16 %v1747
        %v2311 = vunpack.c.h.b16 %v1747
        %v2312 = vunpack.c.l.b16 %v1748
        %v2313 = vunpack.c.h.b16 %v1748
        %v2314 = vunpack.c.l.b16 %v1749
        %v2315 = vunpack.c.h.b16 %v1749
        %v2316 = vunpack.c.l.b16 %v1750
        %v2317 = vunpack.c.h.b16 %v1750
        %v2318 = vunpack.c.l.b16 %v1751
        %v2319 = vunpack.c.h.b16 %v1751
        %v2320 = vunpack.c.l.b16 %v1752
        %v2321 = vunpack.c.h.b16 %v1752
        %v2322 = vunpack.c.l.b16 %v1753
        %v2323 = vunpack.c.h.b16 %v1753
        %v2324 = vunpack.c.l.b16 %v1754
        %v2325 = vunpack.c.h.b16 %v1754
        %v2326 = vunpack.c.l.b16 %v1755
        %v2327 = vunpack.c.h.b16 %v1755
        %v2328 = vunpack.c.l.b16 %v1756
        %v2329 = vunpack.c.h.b16 %v1756
        %v2330 = vunpack.c.l.b16 %v1757
        %v2331 = vunpack.c.h.b16 %v1757
        %v2332 = vunpack.c.l.b16 %v1758
        %v2333 = vunpack.c.h.b16 %v1758
        %v2334 = vunpack.c.l.b16 %v1759
        %v2335 = vunpack.c.h.b16 %v1759
        %v2336 = vunpack.c.l.b16 %v1760
        %v2337 = vunpack.c.h.b16 %v1760
        %v2338 = vunpack.c.l.b16 %v1761
        %v2339 = vunpack.c.h.b16 %v1761
        %v2340 = vunpack.c.l.b16 %v1762
        %v2341 = vunpack.c.h.b16 %v1762
        %v2342 = vunpack.c.l.b16 %v1763
        %v2343 = vunpack.c.h.b16 %v1763
        %v2344 = vunpack.c.l.b16 %v1764
        %v2345 = vunpack.c.h.b16 %v1764
        %v2346 = vunpack.c.l.b16 %v1765
        %v2347 = vunpack.c.h.b16 %v1765
        %v2348 = vunpack.c.l.b16 %v1766
        %v2349 = vunpack.c.h.b16 %v1766
        %v2350 = vunpack.c.l.b16 %v1767
        %v2351 = vunpack.c.h.b16 %v1767
        %v2352 = vunpack.c.l.b16 %v1768
        %v2353 = vunpack.c.h.b16 %v1768
        %v2354 = vunpack.c.l.b16 %v1769
        %v2355 = vunpack.c.h.b16 %v1769
        %v2356 = vunpack.c.l.b16 %v1770
        %v2357 = vunpack.c.h.b16 %v1770
        %v2358 = vunpack.c.l.b16 %v1771
        %v2359 = vunpack.c.h.b16 %v1771
        %v2360 = vunpack.c.l.b16 %v1772
        %v2361 = vunpack.c.h.b16 %v1772
        %v2362 = vunpack.c.l.b16 %v1773
        %v2363 = vunpack.c.h.b16 %v1773
        %v2364 = vunpack.c.l.b16 %v1774
        %v2365 = vunpack.c.h.b16 %v1774
        %v2366 = vunpack.c.l.b16 %v1775
        %v2367 = vunpack.c.h.b16 %v1775
        %v2368 = vunpack.c.l.b16 %v1776
        %v2369 = vunpack.c.h.b16 %v1776
        %v2370 = vunpack.c.l.b16 %v1777
        %v2371 = vunpack.c.h.b16 %v1777
        %v2372 = vunpack.c.l.b16 %v1778
        %v2373 = vunpack.c.h.b16 %v1778
        %v2374 = vunpack.c.l.b16 %v1779
        %v2375 = vunpack.c.h.b16 %v1779
        %v2376 = vunpack.c.l.b16 %v1780
        %v2377 = vunpack.c.h.b16 %v1780
        %v2378 = vunpack.c.l.b16 %v1781
        %v2379 = vunpack.c.h.b16 %v1781
        %v2380 = vunpack.c.l.b16 %v1782
        %v2381 = vunpack.c.h.b16 %v1782
        %v2382 = vunpack.c.l.b16 %v1783
        %v2383 = vunpack.c.h.b16 %v1783
        %v2384 = vunpack.c.l.b16 %v1784
        %v2385 = vunpack.c.h.b16 %v1784
        %v2386 = vunpack.c.l.b16 %v1785
        %v2387 = vunpack.c.h.b16 %v1785
        %v2388 = vunpack.c.l.b16 %v1786
        %v2389 = vunpack.c.h.b16 %v1786
        %v2390 = vunpack.c.l.b16 %v1787
        %v2391 = vunpack.c.h.b16 %v1787
        %v2392 = vunpack.c.l.b16 %v1788
        %v2393 = vunpack.c.h.b16 %v1788
        %v2394 = vunpack.c.l.b16 %v1789
        %v2395 = vunpack.c.h.b16 %v1789
        %v2396 = vunpack.c.l.b16 %v1790
        %v2397 = vunpack.c.h.b16 %v1790
        %v2398 = vunpack.c.l.b16 %v1791
        %v2399 = vunpack.c.h.b16 %v1791
        %v2400 = vunpack.c.l.b16 %v1792
        %v2401 = vunpack.c.h.b16 %v1792
        %v2402 = vunpack.c.l.b16 %v1793
        %v2403 = vunpack.c.h.b16 %v1793
        %v2404 = vunpack.c.l.b16 %v1794
        %v2405 = vunpack.c.h.b16 %v1794
        %v2406 = vunpack.c.l.b16 %v1795
        %v2407 = vunpack.c.h.b16 %v1795
        %v2408 = vunpack.c.l.b16 %v1796
        %v2409 = vunpack.c.h.b16 %v1796
        %v2410 = vunpack.c.l.b16 %v1797
        %v2411 = vunpack.c.h.b16 %v1797
        %v2412 = vunpack.c.l.b16 %v1798
        %v2413 = vunpack.c.h.b16 %v1798
        %v2414 = vunpack.c.l.b16 %v1799
        %v2415 = vunpack.c.h.b16 %v1799
        %v2416 = vunpack.c.l.b16 %v1800
        %v2417 = vunpack.c.h.b16 %v1800
        %v2418 = vunpack.c.l.b16 %v1801
        %v2419 = vunpack.c.h.b16 %v1801
        %v2420 = vunpack.c.l.b16 %v1802
        %v2421 = vunpack.c.h.b16 %v1802
        %v2422 = vunpack.c.l.b16 %v1803
        %v2423 = vunpack.c.h.b16 %v1803
        %v2424 = vunpack.c.l.b16 %v1804
        %v2425 = vunpack.c.h.b16 %v1804
        %v2426 = vunpack.c.l.b16 %v1805
        %v2427 = vunpack.c.h.b16 %v1805
        %v2428 = vunpack.c.l.b16 %v1806
        %v2429 = vunpack.c.h.b16 %v1806
        %v2430 = vunpack.c.l.b16 %v1807
        %v2431 = vunpack.c.h.b16 %v1807
        %v2432 = vunpack.c.l.b16 %v1808
        %v2433 = vunpack.c.h.b16 %v1808
        %v2434 = vunpack.c.l.b16 %v1809
        %v2435 = vunpack.c.h.b16 %v1809
        %v2436 = vunpack.c.l.b16 %v1810
        %v2437 = vunpack.c.h.b16 %v1810
        %v2438 = vunpack.c.l.b16 %v1811
        %v2439 = vunpack.c.h.b16 %v1811
        %v2440 = vunpack.c.l.b16 %v1812
        %v2441 = vunpack.c.h.b16 %v1812
        %v2442 = vunpack.c.l.b16 %v1813
        %v2443 = vunpack.c.h.b16 %v1813
        %v2444 = vunpack.c.l.b16 %v1814
        %v2445 = vunpack.c.h.b16 %v1814
        %v2446 = vunpack.c.l.b16 %v1815
        %v2447 = vunpack.c.h.b16 %v1815
        %v2448 = vunpack.c.l.b16 %v1816
        %v2449 = vunpack.c.h.b16 %v1816
        %v2450 = vunpack.c.l.b16 %v1817
        %v2451 = vunpack.c.h.b16 %v1817
        %v2452 = vunpack.c.l.b16 %v1818
        %v2453 = vunpack.c.h.b16 %v1818
        %v2454 = vunpack.c.l.b16 %v1819
        %v2455 = vunpack.c.h.b16 %v1819
        %v2456 = vunpack.c.l.b16 %v1820
        %v2457 = vunpack.c.h.b16 %v1820
        %v2458 = vunpack.c.l.b16 %v1821
        %v2459 = vunpack.c.h.b16 %v1821
        %v2460 = vunpack.c.l.b16 %v1822
        %v2461 = vunpack.c.h.b16 %v1822
        %v2462 = vunpack.c.l.b16 %v1823
        %v2463 = vunpack.c.h.b16 %v1823
        %v2464 = vunpack.c.l.b16 %v1824
        %v2465 = vunpack.c.h.b16 %v1824
        %v2466 = vunpack.c.l.b16 %v1825
        %v2467 = vunpack.c.h.b16 %v1825
        %v2468 = vunpack.c.l.b16 %v1826
        %v2469 = vunpack.c.h.b16 %v1826
        %v2470 = vunpack.c.l.b16 %v1827
        %v2471 = vunpack.c.h.b16 %v1827
        %v2472 = vunpack.c.l.b16 %v1828
        %v2473 = vunpack.c.h.b16 %v1828
        %v2474 = vunpack.c.l.b16 %v1829
        %v2475 = vunpack.c.h.b16 %v1829
        %v2476 = vunpack.c.l.b16 %v1830
        %v2477 = vunpack.c.h.b16 %v1830
        %v2478 = vunpack.c.l.b16 %v1831
        %v2479 = vunpack.c.h.b16 %v1831
        %v2480 = vunpack.c.l.b16 %v1832
        %v2481 = vunpack.c.h.b16 %v1832
        %v2482 = vunpack.c.l.b16 %v1833
        %v2483 = vunpack.c.h.b16 %v1833
        %v2484 = vunpack.c.l.b16 %v1834
        %v2485 = vunpack.c.h.b16 %v1834
        %v2486 = vunpack.c.l.b16 %v1835
        %v2487 = vunpack.c.h.b16 %v1835
        %v2488 = vunpack.c.l.b16 %v1836
        %v2489 = vunpack.c.h.b16 %v1836
        %v2490 = vunpack.c.l.b16 %v1837
        %v2491 = vunpack.c.h.b16 %v1837
        %v2492 = vunpack.c.l.b16 %v1838
        %v2493 = vunpack.c.h.b16 %v1838
        %v2494 = vunpack.c.l.b16 %v1839
        %v2495 = vunpack.c.h.b16 %v1839
        %v2496 = vunpack.c.l.b16 %v1840
        %v2497 = vunpack.c.h.b16 %v1840
        %v2498 = vunpack.c.l.b16 %v1841
        %v2499 = vunpack.c.h.b16 %v1841
        %v2500 = vunpack.c.l.b16 %v1842
        %v2501 = vunpack.c.h.b16 %v1842
        %v2502 = vunpack.c.l.b16 %v1843
        %v2503 = vunpack.c.h.b16 %v1843
        %v2504 = vunpack.c.l.b16 %v1844
        %v2505 = vunpack.c.h.b16 %v1844
        %v2506 = vunpack.c.l.b16 %v1845
        %v2507 = vunpack.c.h.b16 %v1845
        %v2508 = vunpack.c.l.b16 %v1846
        %v2509 = vunpack.c.h.b16 %v1846
        %v2510 = vunpack.c.l.b16 %v1847
        %v2511 = vunpack.c.h.b16 %v1847
        %v2512 = vunpack.c.l.b16 %v1848
        %v2513 = vunpack.c.h.b16 %v1848
        %v2514 = vunpack.c.l.b16 %v1849
        %v2515 = vunpack.c.h.b16 %v1849
        %v2516 = vunpack.c.l.b16 %v1850
        %v2517 = vunpack.c.h.b16 %v1850
        %v2518 = vunpack.c.l.b16 %v1851
        %v2519 = vunpack.c.h.b16 %v1851
        %v2520 = vunpack.c.l.b16 %v1852
        %v2521 = vunpack.c.h.b16 %v1852
        %v2522 = vunpack.c.l.b16 %v1853
        %v2523 = vunpack.c.h.b16 %v1853
        %v2524 = vunpack.c.l.b16 %v1854
        %v2525 = vunpack.c.h.b16 %v1854
        %v2526 = vunpack.c.l.b16 %v1855
        %v2527 = vunpack.c.h.b16 %v1855
        %v2528 = vunpack.c.l.b16 %v1856
        %v2529 = vunpack.c.h.b16 %v1856
        %v2530 = vunpack.c.l.b16 %v1857
        %v2531 = vunpack.c.h.b16 %v1857
        %v2532 = vunpack.c.l.b16 %v1858
        %v2533 = vunpack.c.h.b16 %v1858
        %v2534 = vunpack.c.l.b16 %v1859
        %v2535 = vunpack.c.h.b16 %v1859
        %v2536 = vunpack.c.l.b16 %v1860
        %v2537 = vunpack.c.h.b16 %v1860
        %v2538 = vunpack.c.l.b16 %v1861
        %v2539 = vunpack.c.h.b16 %v1861
        %v2540 = vunpack.c.l.b16 %v1862
        %v2541 = vunpack.c.h.b16 %v1862
        %v2542 = vunpack.c.l.b16 %v1863
        %v2543 = vunpack.c.h.b16 %v1863
        %v2544 = vunpack.c.l.b16 %v1864
        %v2545 = vunpack.c.h.b16 %v1864
        %v2546 = vunpack.c.l.b16 %v1865
        %v2547 = vunpack.c.h.b16 %v1865
        %v2548 = vunpack.c.l.b16 %v1866
        %v2549 = vunpack.c.h.b16 %v1866
        %v2550 = vunpack.c.l.b16 %v1867
        %v2551 = vunpack.c.h.b16 %v1867
        %v2552 = vunpack.c.l.b16 %v1868
        %v2553 = vunpack.c.h.b16 %v1868
        %v2554 = vunpack.c.l.b16 %v1869
        %v2555 = vunpack.c.h.b16 %v1869
        %v2556 = vunpack.c.l.b16 %v1870
        %v2557 = vunpack.c.h.b16 %v1870
        %v2558 = vunpack.c.l.b16 %v1871
        %v2559 = vunpack.c.h.b16 %v1871
        %v2560 = vunpack.c.l.b16 %v1872
        %v2561 = vunpack.c.h.b16 %v1872
        %v2562 = vunpack.c.l.b16 %v1873
        %v2563 = vunpack.c.h.b16 %v1873
        %v2564 = vunpack.c.l.b16 %v1874
        %v2565 = vunpack.c.h.b16 %v1874
        %v2566 = vunpack.c.l.b16 %v1875
        %v2567 = vunpack.c.h.b16 %v1875
        %v2568 = vunpack.c.l.b16 %v1876
        %v2569 = vunpack.c.h.b16 %v1876
        %v2570 = vunpack.c.l.b16 %v1877
        %v2571 = vunpack.c.h.b16 %v1877
        %v2572 = vunpack.c.l.b16 %v1878
        %v2573 = vunpack.c.h.b16 %v1878
        %v2574 = vunpack.c.l.b16 %v1879
        %v2575 = vunpack.c.h.b16 %v1879
        %v2576 = vunpack.c.l.b16 %v1880
        %v2577 = vunpack.c.h.b16 %v1880
        %v2578 = vunpack.c.l.b16 %v1881
        %v2579 = vunpack.c.h.b16 %v1881
        %v2580 = vunpack.c.l.b16 %v1882
        %v2581 = vunpack.c.h.b16 %v1882
        %v2582 = vunpack.c.l.b16 %v1883
        %v2583 = vunpack.c.h.b16 %v1883
        %v2584 = vunpack.c.l.b16 %v1884
        %v2585 = vunpack.c.h.b16 %v1884
        %v2586 = vunpack.c.l.b16 %v1885
        %v2587 = vunpack.c.h.b16 %v1885
        %v2588 = vunpack.c.l.b16 %v1886
        %v2589 = vunpack.c.h.b16 %v1886
        %v2590 = vunpack.c.l.b16 %v1887
        %v2591 = vunpack.c.h.b16 %v1887
        %v2592 = vunpack.c.l.b16 %v1888
        %v2593 = vunpack.c.h.b16 %v1888
        %v2594 = vunpack.c.l.b16 %v1889
        %v2595 = vunpack.c.h.b16 %v1889
        %v2596 = vunpack.c.l.b16 %v1890
        %v2597 = vunpack.c.h.b16 %v1890
        %v2598 = vunpack.c.l.b16 %v1891
        %v2599 = vunpack.c.h.b16 %v1891
        %v2600 = vunpack.c.l.b16 %v1892
        %v2601 = vunpack.c.h.b16 %v1892
        %v2602 = vunpack.c.l.b16 %v1893
        %v2603 = vunpack.c.h.b16 %v1893
        %v2604 = vunpack.c.l.b16 %v1894
        %v2605 = vunpack.c.h.b16 %v1894
        %v2606 = vunpack.c.l.b16 %v1895
        %v2607 = vunpack.c.h.b16 %v1895
        %v2608 = vunpack.c.l.b16 %v1896
        %v2609 = vunpack.c.h.b16 %v1896
        %v2610 = vunpack.c.l.b16 %v1897
        %v2611 = vunpack.c.h.b16 %v1897
        %v2612 = vunpack.c.l.b16 %v1898
        %v2613 = vunpack.c.h.b16 %v1898
        %v2614 = vunpack.c.l.b16 %v1899
        %v2615 = vunpack.c.h.b16 %v1899
        %v2616 = vunpack.c.l.b16 %v1900
        %v2617 = vunpack.c.h.b16 %v1900
        %v2618 = vunpack.c.l.b16 %v1901
        %v2619 = vunpack.c.h.b16 %v1901
        %v2620 = vunpack.c.l.b16 %v1902
        %v2621 = vunpack.c.h.b16 %v1902
        %v2622 = vunpack.c.l.b16 %v1903
        %v2623 = vunpack.c.h.b16 %v1903
        %v2624 = vpack.c.b16 %v2146, %v2144
        %v2625 = vpack.c.b16 %v2147, %v2145
        %v2626 = vpack.c.b16 %v2150, %v2148
        %v2627 = vpack.c.b16 %v2151, %v2149
        %v2628 = vpack.c.b16 %v2154, %v2152
        %v2629 = vpack.c.b16 %v2155, %v2153
        %v2630 = vpack.c.b16 %v2158, %v2156
        %v2631 = vpack.c.b16 %v2159, %v2157
        %v2632 = vpack.c.b16 %v2162, %v2160
        %v2633 = vpack.c.b16 %v2163, %v2161
        %v2634 = vpack.c.b16 %v2166, %v2164
        %v2635 = vpack.c.b16 %v2167, %v2165
        %v2636 = vpack.c.b16 %v2170, %v2168
        %v2637 = vpack.c.b16 %v2171, %v2169
        %v2638 = vpack.c.b16 %v2174, %v2172
        %v2639 = vpack.c.b16 %v2175, %v2173
        %v2640 = vpack.c.b16 %v2178, %v2176
        %v2641 = vpack.c.b16 %v2179, %v2177
        %v2642 = vpack.c.b16 %v2182, %v2180
        %v2643 = vpack.c.b16 %v2183, %v2181
        %v2644 = vpack.c.b16 %v2186, %v2184
        %v2645 = vpack.c.b16 %v2187, %v2185
        %v2646 = vpack.c.b16 %v2190, %v2188
        %v2647 = vpack.c.b16 %v2191, %v2189
        %v2648 = vpack.c.b16 %v2194, %v2192
        %v2649 = vpack.c.b16 %v2195, %v2193
        %v2650 = vpack.c.b16 %v2198, %v2196
        %v2651 = vpack.c.b16 %v2199, %v2197
        %v2652 = vpack.c.b16 %v2202, %v2200
        %v2653 = vpack.c.b16 %v2203, %v2201
        %v2654 = vpack.c.b16 %v2206, %v2204
        %v2655 = vpack.c.b16 %v2207, %v2205
        %v2656 = vpack.c.b16 %v2210, %v2208
        %v2657 = vpack.c.b16 %v2211, %v2209
        %v2658 = vpack.c.b16 %v2214, %v2212
        %v2659 = vpack.c.b16 %v2215, %v2213
        %v2660 = vpack.c.b16 %v2218, %v2216
        %v2661 = vpack.c.b16 %v2219, %v2217
        %v2662 = vpack.c.b16 %v2222, %v2220
        %v2663 = vpack.c.b16 %v2223, %v2221
        %v2664 = vpack.c.b16 %v2226, %v2224
        %v2665 = vpack.c.b16 %v2227, %v2225
        %v2666 = vpack.c.b16 %v2230, %v2228
        %v2667 = vpack.c.b16 %v2231, %v2229
        %v2668 = vpack.c.b16 %v2234, %v2232
        %v2669 = vpack.c.b16 %v2235, %v2233
        %v2670 = vpack.c.b16 %v2238, %v2236
        %v2671 = vpack.c.b16 %v2239, %v2237
        %v2672 = vpack.c.b16 %v2242, %v2240
        %v2673 = vpack.c.b16 %v2243, %v2241
        %v2674 = vpack.c.b16 %v2246, %v2244
        %v2675 = vpack.c.b16 %v2247, %v2245
        %v2676 = vpack.c.b16 %v2250, %v2248
        %v2677 = vpack.c.b16 %v2251, %v2249
        %v2678 = vpack.c.b16 %v2254, %v2252
        %v2679 = vpack.c.b16 %v2255, %v2253
        %v2680 = vpack.c.b16 %v2258, %v2256
        %v2681 = vpack.c.b16 %v2259, %v2257
        %v2682 = vpack.c.b16 %v2262, %v2260
        %v2683 = vpack.c.b16 %v2263, %v2261
        %v2684 = vpack.c.b16 %v2266, %v2264
        %v2685 = vpack.c.b16 %v2267, %v2265
        %v2686 = vpack.c.b16 %v2270, %v2268
        %v2687 = vpack.c.b16 %v2271, %v2269
        %v2688 = vpack.c.b16 %v2274, %v2272
        %v2689 = vpack.c.b16 %v2275, %v2273
        %v2690 = vpack.c.b16 %v2278, %v2276
        %v2691 = vpack.c.b16 %v2279, %v2277
        %v2692 = vpack.c.b16 %v2282, %v2280
        %v2693 = vpack.c.b16 %v2283, %v2281
        %v2694 = vpack.c.b16 %v2286, %v2284
        %v2695 = vpack.c.b16 %v2287, %v2285
        %v2696 = vpack.c.b16 %v2290, %v2288
        %v2697 = vpack.c.b16 %v2291, %v2289
        %v2698 = vpack.c.b16 %v2294, %v2292
        %v2699 = vpack.c.b16 %v2295, %v2293
        %v2700 = vpack.c.b16 %v2298, %v2296
        %v2701 = vpack.c.b16 %v2299, %v2297
        %v2702 = vpack.c.b16 %v2302, %v2300
        %v2703 = vpack.c.b16 %v2303, %v2301
        %v2704 = vpack.c.b16 %v2306, %v2304
        %v2705 = vpack.c.b16 %v2307, %v2305
        %v2706 = vpack.c.b16 %v2310, %v2308
        %v2707 = vpack.c.b16 %v2311, %v2309
        %v2708 = vpack.c.b16 %v2314, %v2312
        %v2709 = vpack.c.b16 %v2315, %v2313
        %v2710 = vpack.c.b16 %v2318, %v2316
        %v2711 = vpack.c.b16 %v2319, %v2317
        %v2712 = vpack.c.b16 %v2322, %v2320
        %v2713 = vpack.c.b16 %v2323, %v2321
        %v2714 = vpack.c.b16 %v2326, %v2324
        %v2715 = vpack.c.b16 %v2327, %v2325
        %v2716 = vpack.c.b16 %v2330, %v2328
        %v2717 = vpack.c.b16 %v2331, %v2329
        %v2718 = vpack.c.b16 %v2334, %v2332
        %v2719 = vpack.c.b16 %v2335, %v2333
        %v2720 = vpack.c.b16 %v2338, %v2336
        %v2721 = vpack.c.b16 %v2339, %v2337
        %v2722 = vpack.c.b16 %v2342, %v2340
        %v2723 = vpack.c.b16 %v2343, %v2341
        %v2724 = vpack.c.b16 %v2346, %v2344
        %v2725 = vpack.c.b16 %v2347, %v2345
        %v2726 = vpack.c.b16 %v2350, %v2348
        %v2727 = vpack.c.b16 %v2351, %v2349
        %v2728 = vpack.c.b16 %v2354, %v2352
        %v2729 = vpack.c.b16 %v2355, %v2353
        %v2730 = vpack.c.b16 %v2358, %v2356
        %v2731 = vpack.c.b16 %v2359, %v2357
        %v2732 = vpack.c.b16 %v2362, %v2360
        %v2733 = vpack.c.b16 %v2363, %v2361
        %v2734 = vpack.c.b16 %v2366, %v2364
        %v2735 = vpack.c.b16 %v2367, %v2365
        %v2736 = vpack.c.b16 %v2370, %v2368
        %v2737 = vpack.c.b16 %v2371, %v2369
        %v2738 = vpack.c.b16 %v2374, %v2372
        %v2739 = vpack.c.b16 %v2375, %v2373
        %v2740 = vpack.c.b16 %v2378, %v2376
        %v2741 = vpack.c.b16 %v2379, %v2377
        %v2742 = vpack.c.b16 %v2382, %v2380
        %v2743 = vpack.c.b16 %v2383, %v2381
        %v2744 = vpack.c.b16 %v2386, %v2384
        %v2745 = vpack.c.b16 %v2387, %v2385
        %v2746 = vpack.c.b16 %v2390, %v2388
        %v2747 = vpack.c.b16 %v2391, %v2389
        %v2748 = vpack.c.b16 %v2394, %v2392
        %v2749 = vpack.c.b16 %v2395, %v2393
        %v2750 = vpack.c.b16 %v2398, %v2396
        %v2751 = vpack.c.b16 %v2399, %v2397
        %v2752 = vpack.c.b16 %v2402, %v2400
        %v2753 = vpack.c.b16 %v2403, %v2401
        %v2754 = vpack.c.b16 %v2406, %v2404
        %v2755 = vpack.c.b16 %v2407, %v2405
        %v2756 = vpack.c.b16 %v2410, %v2408
        %v2757 = vpack.c.b16 %v2411, %v2409
        %v2758 = vpack.c.b16 %v2414, %v2412
        %v2759 = vpack.c.b16 %v2415, %v2413
        %v2760 = vpack.c.b16 %v2418, %v2416
        %v2761 = vpack.c.b16 %v2419, %v2417
        %v2762 = vpack.c.b16 %v2422, %v2420
        %v2763 = vpack.c.b16 %v2423, %v2421
        %v2764 = vpack.c.b16 %v2426, %v2424
        %v2765 = vpack.c.b16 %v2427, %v2425
        %v2766 = vpack.c.b16 %v2430, %v2428
        %v2767 = vpack.c.b16 %v2431, %v2429
        %v2768 = vpack.c.b16 %v2434, %v2432
        %v2769 = vpack.c.b16 %v2435, %v2433
        %v2770 = vpack.c.b16 %v2438, %v2436
        %v2771 = vpack.c.b16 %v2439, %v2437
        %v2772 = vpack.c.b16 %v2442, %v2440
        %v2773 = vpack.c.b16 %v2443, %v2441
        %v2774 = vpack.c.b16 %v2446, %v2444
        %v2775 = vpack.c.b16 %v2447, %v2445
        %v2776 = vpack.c.b16 %v2450, %v2448
        %v2777 = vpack.c.b16 %v2451, %v2449
        %v2778 = vpack.c.b16 %v2454, %v2452
        %v2779 = vpack.c.b16 %v2455, %v2453
        %v2780 = vpack.c.b16 %v2458, %v2456
        %v2781 = vpack.c.b16 %v2459, %v2457
        %v2782 = vpack.c.b16 %v2462, %v2460
        %v2783 = vpack.c.b16 %v2463, %v2461
        %v2784 = vpack.c.b16 %v2466, %v2464
        %v2785 = vpack.c.b16 %v2467, %v2465
        %v2786 = vpack.c.b16 %v2470, %v2468
        %v2787 = vpack.c.b16 %v2471, %v2469
        %v2788 = vpack.c.b16 %v2474, %v2472
        %v2789 = vpack.c.b16 %v2475, %v2473
        %v2790 = vpack.c.b16 %v2478, %v2476
        %v2791 = vpack.c.b16 %v2479, %v2477
        %v2792 = vpack.c.b16 %v2482, %v2480
        %v2793 = vpack.c.b16 %v2483, %v2481
        %v2794 = vpack.c.b16 %v2486, %v2484
        %v2795 = vpack.c.b16 %v2487, %v2485
        %v2796 = vpack.c.b16 %v2490, %v2488
        %v2797 = vpack.c.b16 %v2491, %v2489
        %v2798 = vpack.c.b16 %v2494, %v2492
        %v2799 = vpack.c.b16 %v2495, %v2493
        %v2800 = vpack.c.b16 %v2498, %v2496
        %v2801 = vpack.c.b16 %v2499, %v2497
        %v2802 = vpack.c.b16 %v2502, %v2500
        %v2803 = vpack.c.b16 %v2503, %v2501
        %v2804 = vpack.c.b16 %v2506, %v2504
        %v2805 = vpack.c.b16 %v2507, %v2505
        %v2806 = vpack.c.b16 %v2510, %v2508
        %v2807 = vpack.c.b16 %v2511, %v2509
        %v2808 = vpack.c.b16 %v2514, %v2512
        %v2809 = vpack.c.b16 %v2515, %v2513
        %v2810 = vpack.c.b16 %v2518, %v2516
        %v2811 = vpack.c.b16 %v2519, %v2517
        %v2812 = vpack.c.b16 %v2522, %v2520
        %v2813 = vpack.c.b16 %v2523, %v2521
        %v2814 = vpack.c.b16 %v2526, %v2524
        %v2815 = vpack.c.b16 %v2527, %v2525
        %v2816 = vpack.c.b16 %v2530, %v2528
        %v2817 = vpack.c.b16 %v2531, %v2529
        %v2818 = vpack.c.b16 %v2534, %v2532
        %v2819 = vpack.c.b16 %v2535, %v2533
        %v2820 = vpack.c.b16 %v2538, %v2536
        %v2821 = vpack.c.b16 %v2539, %v2537
        %v2822 = vpack.c.b16 %v2542, %v2540
        %v2823 = vpack.c.b16 %v2543, %v2541
        %v2824 = vpack.c.b16 %v2546, %v2544
        %v2825 = vpack.c.b16 %v2547, %v2545
        %v2826 = vpack.c.b16 %v2550, %v2548
        %v2827 = vpack.c.b16 %v2551, %v2549
        %v2828 = vpack.c.b16 %v2554, %v2552
        %v2829 = vpack.c.b16 %v2555, %v2553
        %v2830 = vpack.c.b16 %v2558, %v2556
        %v2831 = vpack.c.b16 %v2559, %v2557
        %v2832 = vpack.c.b16 %v2562, %v2560
        %v2833 = vpack.c.b16 %v2563, %v2561
        %v2834 = vpack.c.b16 %v2566, %v2564
        %v2835 = vpack.c.b16 %v2567, %v2565
        %v2836 = vpack.c.b16 %v2570, %v2568
        %v2837 = vpack.c.b16 %v2571, %v2569
        %v2838 = vpack.c.b16 %v2574, %v2572
        %v2839 = vpack.c.b16 %v2575, %v2573
        %v2840 = vpack.c.b16 %v2578, %v2576
        %v2841 = vpack.c.b16 %v2579, %v2577
        %v2842 = vpack.c.b16 %v2582, %v2580
        %v2843 = vpack.c.b16 %v2583, %v2581
        %v2844 = vpack.c.b16 %v2586, %v2584
        %v2845 = vpack.c.b16 %v2587, %v2585
        %v2846 = vpack.c.b16 %v2590, %v2588
        %v2847 = vpack.c.b16 %v2591, %v2589
        %v2848 = vpack.c.b16 %v2594, %v2592
        %v2849 = vpack.c.b16 %v2595, %v2593
        %v2850 = vpack.c.b16 %v2598, %v2596
        %v2851 = vpack.c.b16 %v2599, %v2597
        %v2852 = vpack.c.b16 %v2602, %v2600
        %v2853 = vpack.c.b16 %v2603, %v2601
        %v2854 = vpack.c.b16 %v2606, %v2604
        %v2855 = vpack.c.b16 %v2607, %v2605
        %v2856 = vpack.c.b16 %v2610, %v2608
        %v2857 = vpack.c.b16 %v2611, %v2609
        %v2858 = vpack.c.b16 %v2614, %v2612
        %v2859 = vpack.c.b16 %v2615, %v2613
        %v2860 = vpack.c.b16 %v2618, %v2616
        %v2861 = vpack.c.b16 %v2619, %v2617
        %v2862 = vpack.c.b16 %v2622, %v2620
        %v2863 = vpack.c.b16 %v2623, %v2621
        %3104 = vmatpush.bf16.msra.mxu0 %v2638
        %3105 = vmatpush.bf16.msra.mxu0 %v2636
        %3106 = vmatpush.bf16.msra.mxu0 %v2634
        %3107 = vmatpush.bf16.msra.mxu0 %v2632
        %3108 = vmatpush.bf16.msra.mxu0 %v2630
        %3109 = vmatpush.bf16.msra.mxu0 %v2628
        %3110 = vmatpush.bf16.msra.mxu0 %v2626
        %3111 = vmatpush.bf16.msra.mxu0 %v2624
        %3112 = vmatmul.bf16.gmra.mxu0 %v1649
        %v3113 = vpop.f32.mrf.mxu0
        %v3114 = vadd.f32 0.0, %v3113
        %v3115 = vpop.f32.mrf.mxu0
        %3116 = vdwg.mxu0
        %3117 = vmatpush.bf16.msra.mxu0 %v2654
        %3118 = vmatpush.bf16.msra.mxu0 %v2652
        %3119 = vmatpush.bf16.msra.mxu0 %v2650
        %3120 = vmatpush.bf16.msra.mxu0 %v2648
        %3121 = vmatpush.bf16.msra.mxu0 %v2646
        %3122 = vmatpush.bf16.msra.mxu0 %v2644
        %3123 = vmatpush.bf16.msra.mxu0 %v2642
        %3124 = vmatpush.bf16.msra.mxu0 %v2640
        %3125 = vmatmul.bf16.gmra.mxu0 %v1650
        %v3126 = vpop.f32.mrf.mxu0
        %v3127 = vadd.f32 %v3114, %v3126
        %v3128 = vpop.f32.mrf.mxu0
        %3129 = vdwg.mxu0
        %3130 = vmatpush.bf16.msra.mxu0 %v2670
        %3131 = vmatpush.bf16.msra.mxu0 %v2668
        %3132 = vmatpush.bf16.msra.mxu0 %v2666
        %3133 = vmatpush.bf16.msra.mxu0 %v2664
        %3134 = vmatpush.bf16.msra.mxu0 %v2662
        %3135 = vmatpush.bf16.msra.mxu0 %v2660
        %3136 = vmatpush.bf16.msra.mxu0 %v2658
        %3137 = vmatpush.bf16.msra.mxu0 %v2656
        %3138 = vmatmul.bf16.gmra.mxu0 %v1651
        %v3139 = vpop.f32.mrf.mxu0
        %v3140 = vadd.f32 %v3127, %v3139
        %v3141 = vpop.f32.mrf.mxu0
        %3142 = vdwg.mxu0
        %3143 = vmatpush.bf16.msra.mxu0 %v2686
        %3144 = vmatpush.bf16.msra.mxu0 %v2684
        %3145 = vmatpush.bf16.msra.mxu0 %v2682
        %3146 = vmatpush.bf16.msra.mxu0 %v2680
        %3147 = vmatpush.bf16.msra.mxu0 %v2678
        %3148 = vmatpush.bf16.msra.mxu0 %v2676
        %3149 = vmatpush.bf16.msra.mxu0 %v2674
        %3150 = vmatpush.bf16.msra.mxu0 %v2672
        %3151 = vmatmul.bf16.gmra.mxu0 %v1652
        %v3152 = vpop.f32.mrf.mxu0
        %v3153 = vadd.f32 %v3140, %v3152
        %v3154 = vpop.f32.mrf.mxu0
        %3155 = vdwg.mxu0
        %3156 = vmatpush.bf16.msra.mxu0 %v2702
        %3157 = vmatpush.bf16.msra.mxu0 %v2700
        %3158 = vmatpush.bf16.msra.mxu0 %v2698
        %3159 = vmatpush.bf16.msra.mxu0 %v2696
        %3160 = vmatpush.bf16.msra.mxu0 %v2694
        %3161 = vmatpush.bf16.msra.mxu0 %v2692
        %3162 = vmatpush.bf16.msra.mxu0 %v2690
        %3163 = vmatpush.bf16.msra.mxu0 %v2688
        %3164 = vmatmul.bf16.gmra.mxu0 %v1653
        %v3165 = vpop.f32.mrf.mxu0
        %v3166 = vadd.f32 %v3153, %v3165
        %v3167 = vpop.f32.mrf.mxu0
        %3168 = vdwg.mxu0
        %3169 = vmatpush.bf16.msra.mxu0 %v2718
        %3170 = vmatpush.bf16.msra.mxu0 %v2716
        %3171 = vmatpush.bf16.msra.mxu0 %v2714
        %3172 = vmatpush.bf16.msra.mxu0 %v2712
        %3173 = vmatpush.bf16.msra.mxu0 %v2710
        %3174 = vmatpush.bf16.msra.mxu0 %v2708
        %3175 = vmatpush.bf16.msra.mxu0 %v2706
        %3176 = vmatpush.bf16.msra.mxu0 %v2704
        %3177 = vmatmul.bf16.gmra.mxu0 %v1654
        %v3178 = vpop.f32.mrf.mxu0
        %v3179 = vadd.f32 %v3166, %v3178
        %v3180 = vpop.f32.mrf.mxu0
        %3181 = vdwg.mxu0
        %3182 = vmatpush.bf16.msra.mxu0 %v2734
        %3183 = vmatpush.bf16.msra.mxu0 %v2732
        %3184 = vmatpush.bf16.msra.mxu0 %v2730
        %3185 = vmatpush.bf16.msra.mxu0 %v2728
        %3186 = vmatpush.bf16.msra.mxu0 %v2726
        %3187 = vmatpush.bf16.msra.mxu0 %v2724
        %3188 = vmatpush.bf16.msra.mxu0 %v2722
        %3189 = vmatpush.bf16.msra.mxu0 %v2720
        %3190 = vmatmul.bf16.gmra.mxu0 %v1655
        %v3191 = vpop.f32.mrf.mxu0
        %v3192 = vadd.f32 %v3179, %v3191
        %v3193 = vpop.f32.mrf.mxu0
        %3194 = vdwg.mxu0
        %3195 = vmatpush.bf16.msra.mxu0 %v2750
        %3196 = vmatpush.bf16.msra.mxu0 %v2748
        %3197 = vmatpush.bf16.msra.mxu0 %v2746
        %3198 = vmatpush.bf16.msra.mxu0 %v2744
        %3199 = vmatpush.bf16.msra.mxu0 %v2742
        %3200 = vmatpush.bf16.msra.mxu0 %v2740
        %3201 = vmatpush.bf16.msra.mxu0 %v2738
        %3202 = vmatpush.bf16.msra.mxu0 %v2736
        %3203 = vmatmul.bf16.gmra.mxu0 %v1656
        %v3204 = vpop.f32.mrf.mxu0
        %v3205 = vadd.f32 %v3192, %v3204
        %v3206 = vpop.f32.mrf.mxu0
        %3207 = vdwg.mxu0
        %3208 = vmatpush.bf16.msra.mxu0 %v2766
        %3209 = vmatpush.bf16.msra.mxu0 %v2764
        %3210 = vmatpush.bf16.msra.mxu0 %v2762
        %3211 = vmatpush.bf16.msra.mxu0 %v2760
        %3212 = vmatpush.bf16.msra.mxu0 %v2758
        %3213 = vmatpush.bf16.msra.mxu0 %v2756
        %3214 = vmatpush.bf16.msra.mxu0 %v2754
        %3215 = vmatpush.bf16.msra.mxu0 %v2752
        %3216 = vmatmul.bf16.gmra.mxu0 %v1657
        %v3217 = vpop.f32.mrf.mxu0
        %v3218 = vadd.f32 %v3205, %v3217
        %v3219 = vpop.f32.mrf.mxu0
        %3220 = vdwg.mxu0
        %3221 = vmatpush.bf16.msra.mxu0 %v2782
        %3222 = vmatpush.bf16.msra.mxu0 %v2780
        %3223 = vmatpush.bf16.msra.mxu0 %v2778
        %3224 = vmatpush.bf16.msra.mxu0 %v2776
        %3225 = vmatpush.bf16.msra.mxu0 %v2774
        %3226 = vmatpush.bf16.msra.mxu0 %v2772
        %3227 = vmatpush.bf16.msra.mxu0 %v2770
        %3228 = vmatpush.bf16.msra.mxu0 %v2768
        %3229 = vmatmul.bf16.gmra.mxu0 %v1658
        %v3230 = vpop.f32.mrf.mxu0
        %v3231 = vadd.f32 %v3218, %v3230
        %v3232 = vpop.f32.mrf.mxu0
        %3233 = vdwg.mxu0
        %3234 = vmatpush.bf16.msra.mxu0 %v2798
        %3235 = vmatpush.bf16.msra.mxu0 %v2796
        %3236 = vmatpush.bf16.msra.mxu0 %v2794
        %3237 = vmatpush.bf16.msra.mxu0 %v2792
        %3238 = vmatpush.bf16.msra.mxu0 %v2790
        %3239 = vmatpush.bf16.msra.mxu0 %v2788
        %3240 = vmatpush.bf16.msra.mxu0 %v2786
        %3241 = vmatpush.bf16.msra.mxu0 %v2784
        %3242 = vmatmul.bf16.gmra.mxu0 %v1659
        %v3243 = vpop.f32.mrf.mxu0
        %v3244 = vadd.f32 %v3231, %v3243
        %v3245 = vpop.f32.mrf.mxu0
        %3246 = vdwg.mxu0
        %3247 = vmatpush.bf16.msra.mxu0 %v2814
        %3248 = vmatpush.bf16.msra.mxu0 %v2812
        %3249 = vmatpush.bf16.msra.mxu0 %v2810
        %3250 = vmatpush.bf16.msra.mxu0 %v2808
        %3251 = vmatpush.bf16.msra.mxu0 %v2806
        %3252 = vmatpush.bf16.msra.mxu0 %v2804
        %3253 = vmatpush.bf16.msra.mxu0 %v2802
        %3254 = vmatpush.bf16.msra.mxu0 %v2800
        %3255 = vmatmul.bf16.gmra.mxu0 %v1660
        %v3256 = vpop.f32.mrf.mxu0
        %v3257 = vadd.f32 %v3244, %v3256
        %v3258 = vpop.f32.mrf.mxu0
        %3259 = vdwg.mxu0
        %3260 = vmatpush.bf16.msra.mxu0 %v2830
        %3261 = vmatpush.bf16.msra.mxu0 %v2828
        %3262 = vmatpush.bf16.msra.mxu0 %v2826
        %3263 = vmatpush.bf16.msra.mxu0 %v2824
        %3264 = vmatpush.bf16.msra.mxu0 %v2822
        %3265 = vmatpush.bf16.msra.mxu0 %v2820
        %3266 = vmatpush.bf16.msra.mxu0 %v2818
        %3267 = vmatpush.bf16.msra.mxu0 %v2816
        %3268 = vmatmul.bf16.gmra.mxu0 %v1661
        %v3269 = vpop.f32.mrf.mxu0
        %v3270 = vadd.f32 %v3257, %v3269
        %v3271 = vpop.f32.mrf.mxu0
        %3272 = vdwg.mxu0
        %3273 = vmatpush.bf16.msra.mxu0 %v2846
        %3274 = vmatpush.bf16.msra.mxu0 %v2844
        %3275 = vmatpush.bf16.msra.mxu0 %v2842
        %3276 = vmatpush.bf16.msra.mxu0 %v2840
        %3277 = vmatpush.bf16.msra.mxu0 %v2838
        %3278 = vmatpush.bf16.msra.mxu0 %v2836
        %3279 = vmatpush.bf16.msra.mxu0 %v2834
        %3280 = vmatpush.bf16.msra.mxu0 %v2832
        %3281 = vmatmul.bf16.gmra.mxu0 %v1662
        %v3282 = vpop.f32.mrf.mxu0
        %v3283 = vadd.f32 %v3270, %v3282
        %v3284 = vpop.f32.mrf.mxu0
        %3285 = vdwg.mxu0
        %3286 = vmatpush.bf16.msra.mxu0 %v2862
        %3287 = vmatpush.bf16.msra.mxu0 %v2860
        %3288 = vmatpush.bf16.msra.mxu0 %v2858
        %3289 = vmatpush.bf16.msra.mxu0 %v2856
        %3290 = vmatpush.bf16.msra.mxu0 %v2854
        %3291 = vmatpush.bf16.msra.mxu0 %v2852
        %3292 = vmatpush.bf16.msra.mxu0 %v2850
        %3293 = vmatpush.bf16.msra.mxu0 %v2848
        %3294 = vmatmul.bf16.gmra.mxu0 %v1663
        %v3295 = vpop.f32.mrf.mxu0
        %v3296 = vadd.f32 %v3283, %v3295
        %v3297 = vpop.f32.mrf.mxu0
        %3298 = vdwg.mxu0
        %3299 = vmatpush.bf16.msra.mxu0 %v2639
        %3300 = vmatpush.bf16.msra.mxu0 %v2637
        %3301 = vmatpush.bf16.msra.mxu0 %v2635
        %3302 = vmatpush.bf16.msra.mxu0 %v2633
        %3303 = vmatpush.bf16.msra.mxu0 %v2631
        %3304 = vmatpush.bf16.msra.mxu0 %v2629
        %3305 = vmatpush.bf16.msra.mxu0 %v2627
        %3306 = vmatpush.bf16.msra.mxu0 %v2625
        %3307 = vmatmul.bf16.gmra.mxu0 %v1649
        %v3308 = vpop.f32.mrf.mxu0
        %v3309 = vadd.f32 0.0, %v3308
        %v3310 = vpop.f32.mrf.mxu0
        %3311 = vdwg.mxu0
        %3312 = vmatpush.bf16.msra.mxu0 %v2655
        %3313 = vmatpush.bf16.msra.mxu0 %v2653
        %3314 = vmatpush.bf16.msra.mxu0 %v2651
        %3315 = vmatpush.bf16.msra.mxu0 %v2649
        %3316 = vmatpush.bf16.msra.mxu0 %v2647
        %3317 = vmatpush.bf16.msra.mxu0 %v2645
        %3318 = vmatpush.bf16.msra.mxu0 %v2643
        %3319 = vmatpush.bf16.msra.mxu0 %v2641
        %3320 = vmatmul.bf16.gmra.mxu0 %v1650
        %v3321 = vpop.f32.mrf.mxu0
        %v3322 = vadd.f32 %v3309, %v3321
        %v3323 = vpop.f32.mrf.mxu0
        %3324 = vdwg.mxu0
        %3325 = vmatpush.bf16.msra.mxu0 %v2671
        %3326 = vmatpush.bf16.msra.mxu0 %v2669
        %3327 = vmatpush.bf16.msra.mxu0 %v2667
        %3328 = vmatpush.bf16.msra.mxu0 %v2665
        %3329 = vmatpush.bf16.msra.mxu0 %v2663
        %3330 = vmatpush.bf16.msra.mxu0 %v2661
        %3331 = vmatpush.bf16.msra.mxu0 %v2659
        %3332 = vmatpush.bf16.msra.mxu0 %v2657
        %3333 = vmatmul.bf16.gmra.mxu0 %v1651
        %v3334 = vpop.f32.mrf.mxu0
        %v3335 = vadd.f32 %v3322, %v3334
        %v3336 = vpop.f32.mrf.mxu0
        %3337 = vdwg.mxu0
        %3338 = vmatpush.bf16.msra.mxu0 %v2687
        %3339 = vmatpush.bf16.msra.mxu0 %v2685
        %3340 = vmatpush.bf16.msra.mxu0 %v2683
        %3341 = vmatpush.bf16.msra.mxu0 %v2681
        %3342 = vmatpush.bf16.msra.mxu0 %v2679
        %3343 = vmatpush.bf16.msra.mxu0 %v2677
        %3344 = vmatpush.bf16.msra.mxu0 %v2675
        %3345 = vmatpush.bf16.msra.mxu0 %v2673
        %3346 = vmatmul.bf16.gmra.mxu0 %v1652
        %v3347 = vpop.f32.mrf.mxu0
        %v3348 = vadd.f32 %v3335, %v3347
        %v3349 = vpop.f32.mrf.mxu0
        %3350 = vdwg.mxu0
        %3351 = vmatpush.bf16.msra.mxu0 %v2703
        %3352 = vmatpush.bf16.msra.mxu0 %v2701
        %3353 = vmatpush.bf16.msra.mxu0 %v2699
        %3354 = vmatpush.bf16.msra.mxu0 %v2697
        %3355 = vmatpush.bf16.msra.mxu0 %v2695
        %3356 = vmatpush.bf16.msra.mxu0 %v2693
        %3357 = vmatpush.bf16.msra.mxu0 %v2691
        %3358 = vmatpush.bf16.msra.mxu0 %v2689
        %3359 = vmatmul.bf16.gmra.mxu0 %v1653
        %v3360 = vpop.f32.mrf.mxu0
        %v3361 = vadd.f32 %v3348, %v3360
        %v3362 = vpop.f32.mrf.mxu0
        %3363 = vdwg.mxu0
        %3364 = vmatpush.bf16.msra.mxu0 %v2719
        %3365 = vmatpush.bf16.msra.mxu0 %v2717
        %3366 = vmatpush.bf16.msra.mxu0 %v2715
        %3367 = vmatpush.bf16.msra.mxu0 %v2713
        %3368 = vmatpush.bf16.msra.mxu0 %v2711
        %3369 = vmatpush.bf16.msra.mxu0 %v2709
        %3370 = vmatpush.bf16.msra.mxu0 %v2707
        %3371 = vmatpush.bf16.msra.mxu0 %v2705
        %3372 = vmatmul.bf16.gmra.mxu0 %v1654
        %v3373 = vpop.f32.mrf.mxu0
        %v3374 = vadd.f32 %v3361, %v3373
        %v3375 = vpop.f32.mrf.mxu0
        %3376 = vdwg.mxu0
        %3377 = vmatpush.bf16.msra.mxu0 %v2735
        %3378 = vmatpush.bf16.msra.mxu0 %v2733
        %3379 = vmatpush.bf16.msra.mxu0 %v2731
        %3380 = vmatpush.bf16.msra.mxu0 %v2729
        %3381 = vmatpush.bf16.msra.mxu0 %v2727
        %3382 = vmatpush.bf16.msra.mxu0 %v2725
        %3383 = vmatpush.bf16.msra.mxu0 %v2723
        %3384 = vmatpush.bf16.msra.mxu0 %v2721
        %3385 = vmatmul.bf16.gmra.mxu0 %v1655
        %v3386 = vpop.f32.mrf.mxu0
        %v3387 = vadd.f32 %v3374, %v3386
        %v3388 = vpop.f32.mrf.mxu0
        %3389 = vdwg.mxu0
        %3390 = vmatpush.bf16.msra.mxu0 %v2751
        %3391 = vmatpush.bf16.msra.mxu0 %v2749
        %3392 = vmatpush.bf16.msra.mxu0 %v2747
        %3393 = vmatpush.bf16.msra.mxu0 %v2745
        %3394 = vmatpush.bf16.msra.mxu0 %v2743
        %3395 = vmatpush.bf16.msra.mxu0 %v2741
        %3396 = vmatpush.bf16.msra.mxu0 %v2739
        %3397 = vmatpush.bf16.msra.mxu0 %v2737
        %3398 = vmatmul.bf16.gmra.mxu0 %v1656
        %v3399 = vpop.f32.mrf.mxu0
        %v3400 = vadd.f32 %v3387, %v3399
        %v3401 = vpop.f32.mrf.mxu0
        %3402 = vdwg.mxu0
        %3403 = vmatpush.bf16.msra.mxu0 %v2767
        %3404 = vmatpush.bf16.msra.mxu0 %v2765
        %3405 = vmatpush.bf16.msra.mxu0 %v2763
        %3406 = vmatpush.bf16.msra.mxu0 %v2761
        %3407 = vmatpush.bf16.msra.mxu0 %v2759
        %3408 = vmatpush.bf16.msra.mxu0 %v2757
        %3409 = vmatpush.bf16.msra.mxu0 %v2755
        %3410 = vmatpush.bf16.msra.mxu0 %v2753
        %3411 = vmatmul.bf16.gmra.mxu0 %v1657
        %v3412 = vpop.f32.mrf.mxu0
        %v3413 = vadd.f32 %v3400, %v3412
        %v3414 = vpop.f32.mrf.mxu0
        %3415 = vdwg.mxu0
        %3416 = vmatpush.bf16.msra.mxu0 %v2783
        %3417 = vmatpush.bf16.msra.mxu0 %v2781
        %3418 = vmatpush.bf16.msra.mxu0 %v2779
        %3419 = vmatpush.bf16.msra.mxu0 %v2777
        %3420 = vmatpush.bf16.msra.mxu0 %v2775
        %3421 = vmatpush.bf16.msra.mxu0 %v2773
        %3422 = vmatpush.bf16.msra.mxu0 %v2771
        %3423 = vmatpush.bf16.msra.mxu0 %v2769
        %3424 = vmatmul.bf16.gmra.mxu0 %v1658
        %v3425 = vpop.f32.mrf.mxu0
        %v3426 = vadd.f32 %v3413, %v3425
        %v3427 = vpop.f32.mrf.mxu0
        %3428 = vdwg.mxu0
        %3429 = vmatpush.bf16.msra.mxu0 %v2799
        %3430 = vmatpush.bf16.msra.mxu0 %v2797
        %3431 = vmatpush.bf16.msra.mxu0 %v2795
        %3432 = vmatpush.bf16.msra.mxu0 %v2793
        %3433 = vmatpush.bf16.msra.mxu0 %v2791
        %3434 = vmatpush.bf16.msra.mxu0 %v2789
        %3435 = vmatpush.bf16.msra.mxu0 %v2787
        %3436 = vmatpush.bf16.msra.mxu0 %v2785
        %3437 = vmatmul.bf16.gmra.mxu0 %v1659
        %v3438 = vpop.f32.mrf.mxu0
        %v3439 = vadd.f32 %v3426, %v3438
        %v3440 = vpop.f32.mrf.mxu0
        %3441 = vdwg.mxu0
        %3442 = vmatpush.bf16.msra.mxu0 %v2815
        %3443 = vmatpush.bf16.msra.mxu0 %v2813
        %3444 = vmatpush.bf16.msra.mxu0 %v2811
        %3445 = vmatpush.bf16.msra.mxu0 %v2809
        %3446 = vmatpush.bf16.msra.mxu0 %v2807
        %3447 = vmatpush.bf16.msra.mxu0 %v2805
        %3448 = vmatpush.bf16.msra.mxu0 %v2803
        %3449 = vmatpush.bf16.msra.mxu0 %v2801
        %3450 = vmatmul.bf16.gmra.mxu0 %v1660
        %v3451 = vpop.f32.mrf.mxu0
        %v3452 = vadd.f32 %v3439, %v3451
        %v3453 = vpop.f32.mrf.mxu0
        %3454 = vdwg.mxu0
        %3455 = vmatpush.bf16.msra.mxu0 %v2831
        %3456 = vmatpush.bf16.msra.mxu0 %v2829
        %3457 = vmatpush.bf16.msra.mxu0 %v2827
        %3458 = vmatpush.bf16.msra.mxu0 %v2825
        %3459 = vmatpush.bf16.msra.mxu0 %v2823
        %3460 = vmatpush.bf16.msra.mxu0 %v2821
        %3461 = vmatpush.bf16.msra.mxu0 %v2819
        %3462 = vmatpush.bf16.msra.mxu0 %v2817
        %3463 = vmatmul.bf16.gmra.mxu0 %v1661
        %v3464 = vpop.f32.mrf.mxu0
        %v3465 = vadd.f32 %v3452, %v3464
        %v3466 = vpop.f32.mrf.mxu0
        %3467 = vdwg.mxu0
        %3468 = vmatpush.bf16.msra.mxu0 %v2847
        %3469 = vmatpush.bf16.msra.mxu0 %v2845
        %3470 = vmatpush.bf16.msra.mxu0 %v2843
        %3471 = vmatpush.bf16.msra.mxu0 %v2841
        %3472 = vmatpush.bf16.msra.mxu0 %v2839
        %3473 = vmatpush.bf16.msra.mxu0 %v2837
        %3474 = vmatpush.bf16.msra.mxu0 %v2835
        %3475 = vmatpush.bf16.msra.mxu0 %v2833
        %3476 = vmatmul.bf16.gmra.mxu0 %v1662
        %v3477 = vpop.f32.mrf.mxu0
        %v3478 = vadd.f32 %v3465, %v3477
        %v3479 = vpop.f32.mrf.mxu0
        %3480 = vdwg.mxu0
        %3481 = vmatpush.bf16.msra.mxu0 %v2863
        %3482 = vmatpush.bf16.msra.mxu0 %v2861
        %3483 = vmatpush.bf16.msra.mxu0 %v2859
        %3484 = vmatpush.bf16.msra.mxu0 %v2857
        %3485 = vmatpush.bf16.msra.mxu0 %v2855
        %3486 = vmatpush.bf16.msra.mxu0 %v2853
        %3487 = vmatpush.bf16.msra.mxu0 %v2851
        %3488 = vmatpush.bf16.msra.mxu0 %v2849
        %3489 = vmatmul.bf16.gmra.mxu0 %v1663
        %v3490 = vpop.f32.mrf.mxu0
        %v3491 = vadd.f32 %v3478, %v3490
        %v3492 = vpop.f32.mrf.mxu0
        %3493 = vdwg.mxu0
        %v3496 = vrot.slane %v3491, 6
        %vm3497 = vcmask 1041408
        %v3498 = vsel %vm3497, %v3296, %v3496
        %v3500 = vadd.f32 %v1609, %v3498
        %3501 = vst [vmem:[#allocation3] sm:$0xf] %v3500
        %p3502 = scmp.eq.s32.totalorder %s38, 3
        // Predicated region
        $region169: #{tpu_custom_call.1} parent=91 // pred_check
          %p3503 = pneg %p3502
        $region170: #{tpu_custom_call.1} parent=91 // pred_check_branch
          %3505 = sbr.rel (%p3503) target = $region172
        $region171: #{tpu_custom_call.1} parent=91 // pred_region
          %v3506 = vld [vmem:[#allocation3] sm:$0xf]
          %v3507 = vld [vmem:[#allocation28] sm:$0x3]
          %v3509 = vperm.slane %v3507, 0
          %v3510 = vperm.slane %v3507, 1
          %v3511 = vrot.slane %v3510, 6
          %v3512 = vsel %vm3497, %v3509, %v3511
          %v3514 = vadd.f32 %v3506, %v3512
          %v3515 = vmax.f32 %v3514, 0.0
          %v3516 = vld [vmem:[#allocation29] sm:$0xff]
          %v3517 = vld [vmem:[#allocation29 + $0x8] sm:$0xff]
          %v3518 = vld [vmem:[#allocation29 + $0x10] sm:$0xff]
          %v3519 = vld [vmem:[#allocation29 + $0x18] sm:$0xff]
          %v3520 = vld [vmem:[#allocation29 + $0x20] sm:$0xff]
          %v3521 = vld [vmem:[#allocation29 + $0x28] sm:$0xff]
          %v3522 = vld [vmem:[#allocation29 + $0x30] sm:$0xff]
          %v3523 = vld [vmem:[#allocation29 + $0x38] sm:$0xff]
          %v3524 = vld [vmem:[#allocation29 + $0x40] sm:$0xff]
          %v3525 = vld [vmem:[#allocation29 + $0x48] sm:$0xff]
          %v3526 = vld [vmem:[#allocation29 + $0x50] sm:$0xff]
          %v3527 = vld [vmem:[#allocation29 + $0x58] sm:$0xff]
          %v3528 = vld [vmem:[#allocation29 + $0x60] sm:$0xff]
          %v3529 = vld [vmem:[#allocation29 + $0x68] sm:$0xff]
          %v3530 = vld [vmem:[#allocation29 + $0x70] sm:$0xff]
          %v3531 = vld [vmem:[#allocation29 + $0x78] sm:$0xff]
          %v3532 = vld [vmem:[#allocation29 + $0x80] sm:$0xff]
          %v3533 = vld [vmem:[#allocation29 + $0x88] sm:$0xff]
          %v3534 = vld [vmem:[#allocation29 + $0x90] sm:$0xff]
          %v3535 = vld [vmem:[#allocation29 + $0x98] sm:$0xff]
          %v3536 = vld [vmem:[#allocation29 + $0xa0] sm:$0xff]
          %v3537 = vld [vmem:[#allocation29 + $0xa8] sm:$0xff]
          %v3538 = vld [vmem:[#allocation29 + $0xb0] sm:$0xff]
          %v3539 = vld [vmem:[#allocation29 + $0xb8] sm:$0xff]
          %v3540 = vld [vmem:[#allocation29 + $0xc0] sm:$0xff]
          %v3541 = vld [vmem:[#allocation29 + $0xc8] sm:$0xff]
          %v3542 = vld [vmem:[#allocation29 + $0xd0] sm:$0xff]
          %v3543 = vld [vmem:[#allocation29 + $0xd8] sm:$0xff]
          %v3544 = vld [vmem:[#allocation29 + $0xe0] sm:$0xff]
          %v3545 = vld [vmem:[#allocation29 + $0xe8] sm:$0xff]
          %v3546 = vld [vmem:[#allocation29 + $0xf0] sm:$0xff]
          %v3547 = vld [vmem:[#allocation29 + $0xf8] sm:$0xff]
          %v3548 = vld [vmem:[#allocation30] sm:$0x1]
          %v3550 = vperm.slane %v3548, 0
          %3553 = vst [vmem:[#allocation1] ss:$4 sm:$0xff] %v3515
          %v3554 = vld.sshfl [vmem:[#allocation1] sm:$0xff pattern:$0x73625140]
          %v3555 = vld.sshfl [vmem:[#allocation1 + $0x8] sm:$0xff pattern:$0x73625140]
          %3558 = vmatpush.msra.mxu0 %v3531
          %3559 = vmatpush.msra.mxu0 %v3530
          %3560 = vmatpush.msra.mxu0 %v3529
          %3561 = vmatpush.msra.mxu0 %v3528
          %3562 = vmatpush.msra.mxu0 %v3527
          %3563 = vmatpush.msra.mxu0 %v3526
          %3564 = vmatpush.msra.mxu0 %v3525
          %3565 = vmatpush.msra.mxu0 %v3524
          %3566 = vmatpush.msra.mxu0 %v3523
          %3567 = vmatpush.msra.mxu0 %v3522
          %3568 = vmatpush.msra.mxu0 %v3521
          %3569 = vmatpush.msra.mxu0 %v3520
          %3570 = vmatpush.msra.mxu0 %v3519
          %3571 = vmatpush.msra.mxu0 %v3518
          %3572 = vmatpush.msra.mxu0 %v3517
          %3573 = vmatpush.msra.mxu0 %v3516
          %3574 = vmatmul.f32.gmra.mxu0 %v3554
          %v3575 = vpop.f32.mrf.mxu0
          %v3576 = vadd.f32 %v3550, %v3575
          %3577 = vdwg.mxu0
          %3578 = vmatpush.msra.mxu0 %v3547
          %3579 = vmatpush.msra.mxu0 %v3546
          %3580 = vmatpush.msra.mxu0 %v3545
          %3581 = vmatpush.msra.mxu0 %v3544
          %3582 = vmatpush.msra.mxu0 %v3543
          %3583 = vmatpush.msra.mxu0 %v3542
          %3584 = vmatpush.msra.mxu0 %v3541
          %3585 = vmatpush.msra.mxu0 %v3540
          %3586 = vmatpush.msra.mxu0 %v3539
          %3587 = vmatpush.msra.mxu0 %v3538
          %3588 = vmatpush.msra.mxu0 %v3537
          %3589 = vmatpush.msra.mxu0 %v3536
          %3590 = vmatpush.msra.mxu0 %v3535
          %3591 = vmatpush.msra.mxu0 %v3534
          %3592 = vmatpush.msra.mxu0 %v3533
          %3593 = vmatpush.msra.mxu0 %v3532
          %3594 = vmatmul.f32.gmra.mxu0 %v3555
          %v3595 = vpop.f32.mrf.mxu0
          %v3596 = vadd.f32 %v3576, %v3595
          %3597 = vdwg.mxu0
          %3598 = vst [vmem:[#allocation31] sm:$0x3] %v3596
        $region172: #{tpu_custom_call.1} parent=91 // pred_fallthru
          _
        // Predicated region
        $region173: #{tpu_custom_call.1} parent=91 // pred_check
          %p3599 = pneg %p434
        $region174: #{tpu_custom_call.1} parent=91 // pred_check_branch
          %3601 = sbr.rel (%p3599) target = $region176
        $region175: #{tpu_custom_call.1} parent=91 // pred_region
          %3603 = vsyncadd [#allocation6], 0
          %s3605 = sshll.u32 [#allocation31], 4
          %s3606 = int_to_ptr.vmem [resolvable:$true] %s3605
          %s3607 = sshll.u32 %s18, 4
          %s3608 = int_to_ptr.hbm [resolvable:$true] %s3607
          %3610 = dma.vmem_to_hbm [thread:$0]  %s3606, 32, %s3608, [#allocation6]
        $region176: #{tpu_custom_call.1} parent=91 // pred_fallthru
          _
        // Predicated region
        $region177: #{tpu_custom_call.1} parent=91 // pred_check
          %p3611 = pneg %p434
        $region178: #{tpu_custom_call.1} parent=91 // pred_check_branch
          %3613 = sbr.rel (%p3611) target = $region180
        $region179: #{tpu_custom_call.1} parent=91 // pred_region
          %3615 = dma.done [#allocation6], 32
        $region180: #{tpu_custom_call.1} parent=91 // pred_fallthru
          _
      $region92: #{tpu_custom_call.1} parent=5 // pred_fallthru
        _
      %p3616 = scmp.le.s32.totalorder 2, %s33
      // Predicated region
      $region181: #{tpu_custom_call.1} parent=5 // pred_check
        %p3617 = pneg %p3616
      $region182: #{tpu_custom_call.1} parent=5 // pred_check_branch
        %3619 = sbr.rel (%p3617) target = $region184
      $region183: #{tpu_custom_call.1} parent=5 // pred_region
        %s3620 = ssub.s32 %s33, 2
      $region184: #{tpu_custom_call.1} parent=5 // pred_fallthru
        _
    $region6: #{tpu_custom_call.1} parent=1 // loop_footer
      %s37 = sadd.s32 1, %s33
    $region7: #{tpu_custom_call.1} parent=1 // loop_footer_branch
      %32 = sbr.rel target = $region3
    $region8: #{tpu_custom_call.1} parent=1 // loop_exit
      _
    %3621 = vsyncpa [#allocation5], 1
    %s3622 = scalar_lea.sflag [#allocation5], 1
    %3623 = vsyncpa %s3622, 1
    %3624 = vsyncpa [#allocation8], 1
    %3625 = vsyncpa [#allocation11], 1
    %3626 = vsyncpa [#allocation14], 1
    %3627 = vsyncpa [#allocation17], 1
    %3628 = vsyncpa [#allocation20], 1
    %3629 = vsyncpa [#allocation23], 1
    %3630 = vsyncpa [#allocation26], 1
    %3631 = vsyncpa [#allocation6], 1
    %s3632 = scalar_lea.sflag [#allocation6], 1
    %3633 = vsyncpa %s3632, 1

</llo_original>
